<compile_context>
chip_gen: v7x
topology: tpu7x:2x2x1
jax: 0.10.0
libtpu: 0.0.40
codegen_flags: <defaults>
</compile_context>

<pallas_src>
import math
import functools

import jax
import jax.numpy as jnp
from jax import lax
from jax.experimental import pallas as pl
from jax.experimental.pallas import tpu as pltpu

# ----------------------- model hyper-params (small) -----------------------
VOCAB = 256
HIDDEN = 128
NUM_LAYERS = 2
NUM_HEADS = 4
HEAD_DIM = HIDDEN // NUM_HEADS
MAX_SEQ = 16
LN_EPS = 1e-5

BATCH = 2
SEQ = 8

# True  -> tanh-approx GELU (EUP tanh; ~1e-3 deviation from torch's exact erf,
#          comparable to the bf16-matmul tolerance already accepted).
# False -> erf-form GELU via a cheap polynomial (|erf err| <= 1.5e-7), i.e.
#          effectively exact torch.nn.functional.gelu parity.
GELU_TANH_APPROX = True


# ------------------------------ kernel utils ------------------------------
def _layernorm(x, w, b):
    # x: (N, H) f32 ; w, b: (1, H) f32 ; matches torch.nn.LayerNorm (eps=1e-5)
    mu = jnp.mean(x, axis=-1, keepdims=True)
    xc = x - mu
    var = jnp.mean(xc * xc, axis=-1, keepdims=True)
    inv = lax.rsqrt(var + LN_EPS)
    return xc * inv * w + b


def _erf_poly(x):
    # Abramowitz & Stegun 7.1.26 (|err| <= 1.5e-7); only mul/add (VPU) + exp (EUP).
    a1, a2, a3, a4, a5 = 0.254829592, -0.284496736, 1.421413741, -1.453152027, 1.061405429
    p = 0.3275911
    s = jnp.sign(x)
    ax = jnp.abs(x)
    t = 1.0 / (1.0 + p * ax)
    y = 1.0 - ((((a5 * t + a4) * t + a3) * t + a2) * t + a1) * t * jnp.exp(-ax * ax)
    return s * y


def _gelu(x):
    if GELU_TANH_APPROX:
        c = math.sqrt(2.0 / math.pi)
        return 0.5 * x * (1.0 + jnp.tanh(c * (x + 0.044715 * x * x * x)))
    return 0.5 * x * (1.0 + _erf_poly(x * (1.0 / math.sqrt(2.0))))


# --------------------------- fused GPT layer kernel -----------------------
def gpt_layer_kernel(
    x_ref, mask_ref,
    ln1_w_ref, ln1_b_ref, w_qkv_ref, b_qkv_ref, w_ao_ref, b_ao_ref,
    ln2_w_ref, ln2_b_ref, w_fc_ref, b_fc_ref, w_pr_ref, b_pr_ref,
    lnf_w_ref, lnf_b_ref, w_head_ref,
    o_ref,
    x_sc,
    *, num_heads, head_dim, hidden,
):
    l = pl.program_id(0)

    @pl.when(l == 0)
    def _():
        x_sc[...] = x_ref[...].astype(jnp.float32)

    x = x_sc[...]                              # (N, H) f32, N = B*T
    mask_add = mask_ref[...]                   # (N, N) f32: 0 or -1e30
    scale = jnp.float32(1.0 / math.sqrt(head_dim))

    # -------- attention branch --------
    h16 = _layernorm(x, ln1_w_ref[...], ln1_b_ref[...]).astype(jnp.bfloat16)
    # fused QKV: one (N,H)@(H,3H) matmul; q/k/v are 128-lane-aligned slices
    qkv = jnp.dot(h16, w_qkv_ref[...],
                  preferred_element_type=jnp.float32) + b_qkv_ref[...]   # (N, 3H)
    heads = []
    for n in range(num_heads):
        q_h = qkv[:, n * head_dim:(n + 1) * head_dim].astype(jnp.bfloat16)
        k_h = qkv[:, hidden + n * head_dim: hidden + (n + 1) * head_dim].astype(jnp.bfloat16)
        v_h = qkv[:, 2 * hidden + n * head_dim: 2 * hidden + (n + 1) * head_dim].astype(jnp.bfloat16)
        # block-diagonal (over batch) scores: (N, hd) x (N, hd) -> (N, N)
        s = lax.dot_general(q_h, k_h, (((1,), (1,)), ((), ())),
                            preferred_element_type=jnp.float32)
        s = s * scale + mask_add
        s = s - jnp.max(s, axis=-1, keepdims=True)
        p = jnp.exp(s)
        p = p * pl.reciprocal(jnp.sum(p, axis=-1, keepdims=True), approx=True)
        heads.append(jnp.dot(p.astype(jnp.bfloat16), v_h,
                             preferred_element_type=jnp.float32))        # (N, hd)
    # concat heads in-register -> ONE (N,H)@(H,H) output projection
    y16 = jnp.concatenate(heads, axis=-1).astype(jnp.bfloat16)           # (N, H)
    attn = jnp.dot(y16, w_ao_ref[...],
                   preferred_element_type=jnp.float32) + b_ao_ref[...]
    x = x + attn

    # -------- MLP branch --------
    h2 = _layernorm(x, ln2_w_ref[...], ln2_b_ref[...]).astype(jnp.bfloat16)
    f = jnp.dot(h2, w_fc_ref[...],
                preferred_element_type=jnp.float32) + b_fc_ref[...]      # (N, 4H)
    f = _gelu(f)
    f = jnp.dot(f.astype(jnp.bfloat16), w_pr_ref[...],
                preferred_element_type=jnp.float32) + b_pr_ref[...]      # (N, H)
    x = x + f
    x_sc[...] = x

    # -------- final LN + lm_head (last layer only) --------
    @pl.when(l == pl.num_programs(0) - 1)
    def _():
        hf = _layernorm(x, lnf_w_ref[...], lnf_b_ref[...]).astype(jnp.bfloat16)
        o_ref[...] = jnp.dot(hf, w_head_ref[...],
                             preferred_element_type=jnp.float32).astype(o_ref.dtype)


# --------------------------------- wrapper ---------------------------------
def run_gpt_fused(x2, mask_add, p, *, batch, seq):
    """x2: (B*T, H) f32 activations; mask_add: (B*T, B*T) f32 additive mask."""
    N = batch * seq
    kernel = functools.partial(gpt_layer_kernel, num_heads=NUM_HEADS,
                               head_dim=HEAD_DIM, hidden=HIDDEN)

    def per_layer(*tail):
        # layer-stacked param: block the layer dim (squeezed), keep rest full
        return pl.BlockSpec((None,) + tail, lambda l, _t=len(tail): (l,) + (0,) * _t)

    def fixed2(r, c):
        # shared (non-layer) array: single resident block
        return pl.BlockSpec((r, c), lambda l: (0, 0))

    grid_spec = pltpu.PrefetchScalarGridSpec(
        num_scalar_prefetch=0,
        grid=(NUM_LAYERS,),
        in_specs=[
            fixed2(N, HIDDEN),                    # x2
            fixed2(N, N),                         # mask_add
            per_layer(1, HIDDEN),                 # ln1_w
            per_layer(1, HIDDEN),                 # ln1_b
            per_layer(HIDDEN, 3 * HIDDEN),        # w_qkv
            per_layer(1, 3 * HIDDEN),             # b_qkv
            per_layer(HIDDEN, HIDDEN),            # w_ao
            per_layer(1, HIDDEN),                 # b_ao
            per_layer(1, HIDDEN),                 # ln2_w
            per_layer(1, HIDDEN),                 # ln2_b
            per_layer(HIDDEN, 4 * HIDDEN),        # w_fc
            per_layer(1, 4 * HIDDEN),             # b_fc
            per_layer(4 * HIDDEN, HIDDEN),        # w_pr
            per_layer(1, HIDDEN),                 # b_pr
            fixed2(1, HIDDEN),                    # lnf_w
            fixed2(1, HIDDEN),                    # lnf_b
            fixed2(HIDDEN, VOCAB),                # w_head
        ],
        out_specs=fixed2(N, VOCAB),
        scratch_shapes=[pltpu.VMEM((N, HIDDEN), jnp.float32)],   # persistent x
    )

    return pl.pallas_call(
        kernel,
        out_shape=jax.ShapeDtypeStruct((N, VOCAB), jnp.float32),
        grid_spec=grid_spec,
        compiler_params=pltpu.CompilerParams(
            dimension_semantics=("arbitrary",)),     # sequential layer carry
    )(
        x2, mask_add,
        p["ln1_w"], p["ln1_b"], p["w_qkv"], p["b_qkv"], p["w_ao"], p["b_ao"],
        p["ln2_w"], p["ln2_b"], p["w_fc"], p["b_fc"], p["w_pr"], p["b_pr"],
        p["lnf_w"], p["lnf_b"], p["w_head"],
    )


# ------------------------------ parameter init -----------------------------
def init_params(key):
    """Deterministic init mirroring GPTSmall._init_weights:
    Linear/Embedding weights ~ N(0, 0.02), biases zero, LN weight=1 bias=0,
    pos_emb zeros, lm_head tied to tok_emb.  Matmul weights are stored
    pre-transposed to [in, out], stacked over layers and cast to bf16."""
    keys = iter(jax.random.split(key, 16))
    nrm = lambda shape: jax.random.normal(next(keys), shape, jnp.float32) * 0.02
    bf16 = jnp.bfloat16

    tok_emb = nrm((VOCAB, HIDDEN))                         # [V, H]
    pos_emb = jnp.zeros((1, MAX_SEQ, HIDDEN), jnp.float32)

    w_qkv, w_ao, w_fc, w_pr = [], [], [], []
    for _ in range(NUM_LAYERS):
        # torch Linear weight is [out, in]; store transposed [in, out]
        w_qkv.append(nrm((3 * HIDDEN, HIDDEN)).T)          # (H, 3H) fused QKV
        w_ao.append(nrm((HIDDEN, HIDDEN)).T)               # (H, H)
        w_fc.append(nrm((4 * HIDDEN, HIDDEN)).T)           # (H, 4H)
        w_pr.append(nrm((HIDDEN, 4 * HIDDEN)).T)           # (4H, H)

    L = NUM_LAYERS
    zeros = lambda *s: jnp.zeros(s, jnp.float32)
    ones = lambda *s: jnp.ones(s, jnp.float32)
    return {
        "tok_emb": tok_emb,
        "pos_emb": pos_emb,
        "ln1_w": ones(L, 1, HIDDEN), "ln1_b": zeros(L, 1, HIDDEN),
        "ln2_w": ones(L, 1, HIDDEN), "ln2_b": zeros(L, 1, HIDDEN),
        "w_qkv": jnp.stack(w_qkv).astype(bf16),            # (L, H, 3H)
        "b_qkv": zeros(L, 1, 3 * HIDDEN),
        "w_ao": jnp.stack(w_ao).astype(bf16),              # (L, H, H)
        "b_ao": zeros(L, 1, HIDDEN),
        "w_fc": jnp.stack(w_fc).astype(bf16),              # (L, H, 4H)
        "b_fc": zeros(L, 1, 4 * HIDDEN),
        "w_pr": jnp.stack(w_pr).astype(bf16),              # (L, 4H, H)
        "b_pr": zeros(L, 1, HIDDEN),
        "lnf_w": ones(1, HIDDEN), "lnf_b": zeros(1, HIDDEN),
        # weight tying: lm_head.weight = tok_emb.weight ([V,H]); kernel wants [H,V]
        "w_head": tok_emb.T.astype(bf16),
    }


# --------------------------------- forward ---------------------------------
@jax.jit
def gpt_forward(params, input_ids):
    B, T = input_ids.shape
    # embedding gather + position embedding (glue, plain JAX)
    x = params["tok_emb"][input_ids] + params["pos_emb"][:, :T, :]   # (B, T, H) f32
    x2 = x.reshape(B * T, HIDDEN)
    # combined causal + same-batch additive mask over flattened B*T rows
    idx = jnp.arange(B * T, dtype=jnp.int32)
    same_batch = (idx[:, None] // T) == (idx[None, :] // T)
    causal = idx[None, :] <= idx[:, None]
    mask_add = jnp.where(same_batch & causal, 0.0, -1e30).astype(jnp.float32)
    logits2 = run_gpt_fused(x2, mask_add, params, batch=B, seq=T)    # (B*T, V)
    return logits2.reshape(B, T, VOCAB)


# ----------------------------------- main -----------------------------------
if __name__ == "__main__":
    key = jax.random.PRNGKey(0)
    pkey, ikey = jax.random.split(key)
    params = init_params(pkey)

    input_ids = jax.random.randint(ikey, (BATCH, SEQ), 0, VOCAB, dtype=jnp.int32)
    logits = gpt_forward(params, input_ids)
    jax.block_until_ready(logits)

    assert logits.shape == (BATCH, SEQ, VOCAB), logits.shape
    assert logits.dtype == jnp.float32
    assert bool(jnp.all(jnp.isfinite(logits)))
    print("KERNEL_OK")
</pallas_src>

<mosaic_0001>
module attributes {stable_mosaic.version = 11 : i64} {
  func.func @gpt_layer_kernel(%arg0: i32, %arg1: memref<16x128xf32, #tpu.memory_space<vmem>>, %arg2: memref<16x16xf32, #tpu.memory_space<vmem>>, %arg3: memref<1x1x128xf32, #tpu.memory_space<vmem>>, %arg4: memref<1x1x128xf32, #tpu.memory_space<vmem>>, %arg5: memref<1x128x384xbf16, #tpu.memory_space<vmem>>, %arg6: memref<1x1x384xf32, #tpu.memory_space<vmem>>, %arg7: memref<1x128x128xbf16, #tpu.memory_space<vmem>>, %arg8: memref<1x1x128xf32, #tpu.memory_space<vmem>>, %arg9: memref<1x1x128xf32, #tpu.memory_space<vmem>>, %arg10: memref<1x1x128xf32, #tpu.memory_space<vmem>>, %arg11: memref<1x128x512xbf16, #tpu.memory_space<vmem>>, %arg12: memref<1x1x512xf32, #tpu.memory_space<vmem>>, %arg13: memref<1x512x128xbf16, #tpu.memory_space<vmem>>, %arg14: memref<1x1x128xf32, #tpu.memory_space<vmem>>, %arg15: memref<1x128xf32, #tpu.memory_space<vmem>>, %arg16: memref<1x128xf32, #tpu.memory_space<vmem>>, %arg17: memref<128x256xbf16, #tpu.memory_space<vmem>>, %arg18: memref<16x256xf32, #tpu.memory_space<vmem>>, %arg19: memref<16x128xf32, #tpu.memory_space<vmem>>) attributes {dimension_semantics = [#tpu.dimension_semantics<arbitrary>], iteration_bounds = array<i64: 2>, scalar_prefetch = 0 : i64, scratch_operands = 1 : i64, tpu.core_type = #tpu.core_type<tc>, window_params = [{pipeline_mode = #tpu.pipeline_mode<synchronous>, transform_indices = @transform_0, window_bounds = array<i64: 16, 128>}, {pipeline_mode = #tpu.pipeline_mode<synchronous>, transform_indices = @transform_1, window_bounds = array<i64: 16, 16>}, {transform_indices = @transform_2, window_bounds = array<i64: 1, 1, 128>}, {transform_indices = @transform_3, window_bounds = array<i64: 1, 1, 128>}, {transform_indices = @transform_4, window_bounds = array<i64: 1, 128, 384>}, {transform_indices = @transform_5, window_bounds = array<i64: 1, 1, 384>}, {transform_indices = @transform_6, window_bounds = array<i64: 1, 128, 128>}, {transform_indices = @transform_7, window_bounds = array<i64: 1, 1, 128>}, {transform_indices = @transform_8, window_bounds = array<i64: 1, 1, 128>}, {transform_indices = @transform_9, window_bounds = array<i64: 1, 1, 128>}, {transform_indices = @transform_10, window_bounds = array<i64: 1, 128, 512>}, {transform_indices = @transform_11, window_bounds = array<i64: 1, 1, 512>}, {transform_indices = @transform_12, window_bounds = array<i64: 1, 512, 128>}, {transform_indices = @transform_13, window_bounds = array<i64: 1, 1, 128>}, {pipeline_mode = #tpu.pipeline_mode<synchronous>, transform_indices = @transform_14, window_bounds = array<i64: 1, 128>}, {pipeline_mode = #tpu.pipeline_mode<synchronous>, transform_indices = @transform_15, window_bounds = array<i64: 1, 128>}, {pipeline_mode = #tpu.pipeline_mode<synchronous>, transform_indices = @transform_16, window_bounds = array<i64: 128, 256>}, {pipeline_mode = #tpu.pipeline_mode<synchronous>, transform_indices = @transform_17, window_bounds = array<i64: 16, 256>}]} {
    %c0_i32 = arith.constant 0 : i32
    %0 = arith.cmpi eq, %arg0, %c0_i32 : i32
    %1 = arith.extui %0 : i1 to i32
    %c0_i32_0 = arith.constant 0 : i32
    %2 = arith.cmpi ne, %1, %c0_i32_0 : i32
    scf.if %2 {
      %c0_80 = arith.constant 0 : index
      %c0_81 = arith.constant 0 : index
      %193 = vector.load %arg1[%c0_80, %c0_81] : memref<16x128xf32, #tpu.memory_space<vmem>>, vector<16x128xf32>
      %c0_82 = arith.constant 0 : index
      %c0_83 = arith.constant 0 : index
      %194 = vector.load %arg19[%c0_82, %c0_83] : memref<16x128xf32, #tpu.memory_space<vmem>>, vector<16x128xf32>
      tpu.vector_store %arg19[%c0_82, %c0_83], %193 {strides = array<i32>} : memref<16x128xf32, #tpu.memory_space<vmem>>, vector<16x128xf32>,
    } else {
    }
    %c0 = arith.constant 0 : index
    %c0_1 = arith.constant 0 : index
    %3 = vector.load %arg19[%c0, %c0_1] : memref<16x128xf32, #tpu.memory_space<vmem>>, vector<16x128xf32>
    %c0_2 = arith.constant 0 : index
    %c0_3 = arith.constant 0 : index
    %4 = vector.load %arg2[%c0_2, %c0_3] : memref<16x16xf32, #tpu.memory_space<vmem>>, vector<16x16xf32>
    %c0_4 = arith.constant 0 : index
    %c0_5 = arith.constant 0 : index
    %c0_6 = arith.constant 0 : index
    %5 = vector.load %arg3[%c0_4, %c0_5, %c0_6] : memref<1x1x128xf32, #tpu.memory_space<vmem>>, vector<1x1x128xf32>
    %6 = vector.shape_cast %5 : vector<1x1x128xf32> to vector<1x128xf32>
    %c0_7 = arith.constant 0 : index
    %c0_8 = arith.constant 0 : index
    %c0_9 = arith.constant 0 : index
    %7 = vector.load %arg4[%c0_7, %c0_8, %c0_9] : memref<1x1x128xf32, #tpu.memory_space<vmem>>, vector<1x1x128xf32>
    %8 = vector.shape_cast %7 : vector<1x1x128xf32> to vector<1x128xf32>
    %cst = arith.constant dense<0.000000e+00> : vector<16xf32>
    %9 = vector.multi_reduction <add>, %3, %cst [1] : vector<16x128xf32> to vector<16xf32>
    %10 = vector.shape_cast %9 : vector<16xf32> to vector<16x1xf32>
    %cst_10 = arith.constant 1.280000e+02 : f32
    %11 = vector.broadcast %cst_10 : f32 to vector<16x1xf32>
    %12 = arith.divf %10, %11 : vector<16x1xf32>
    %13 = vector.broadcast %12 : vector<16x1xf32> to vector<16x128xf32>
    %14 = arith.subf %3, %13 : vector<16x128xf32>
    %15 = arith.mulf %14, %14 : vector<16x128xf32>
    %cst_11 = arith.constant dense<0.000000e+00> : vector<16xf32>
    %16 = vector.multi_reduction <add>, %15, %cst_11 [1] : vector<16x128xf32> to vector<16xf32>
    %17 = vector.shape_cast %16 : vector<16xf32> to vector<16x1xf32>
    %cst_12 = arith.constant 1.280000e+02 : f32
    %18 = vector.broadcast %cst_12 : f32 to vector<16x1xf32>
    %19 = arith.divf %17, %18 : vector<16x1xf32>
    %cst_13 = arith.constant 9.99999974E-6 : f32
    %20 = vector.broadcast %cst_13 : f32 to vector<16x1xf32>
    %21 = arith.addf %19, %20 : vector<16x1xf32>
    %22 = math.rsqrt %21 : vector<16x1xf32>
    %23 = vector.broadcast %22 : vector<16x1xf32> to vector<16x128xf32>
    %24 = arith.mulf %14, %23 : vector<16x128xf32>
    %25 = vector.broadcast %6 : vector<1x128xf32> to vector<16x128xf32>
    %26 = arith.mulf %24, %25 : vector<16x128xf32>
    %27 = vector.broadcast %8 : vector<1x128xf32> to vector<16x128xf32>
    %28 = arith.addf %26, %27 : vector<16x128xf32>
    %29 = arith.truncf %28 : vector<16x128xf32> to vector<16x128xbf16>
    %c0_14 = arith.constant 0 : index
    %c0_15 = arith.constant 0 : index
    %c0_16 = arith.constant 0 : index
    %30 = vector.load %arg5[%c0_14, %c0_15, %c0_16] : memref<1x128x384xbf16, #tpu.memory_space<vmem>>, vector<1x128x384xbf16>
    %31 = vector.shape_cast %30 : vector<1x128x384xbf16> to vector<128x384xbf16>
    %cst_17 = arith.constant dense<0.000000e+00> : vector<16x384xf32>
    %32 = tpu.matmul %29, %31, %cst_17 {dimension_numbers = #tpu.dot_dimension_numbers<[1], [0], [0], [1], [0, 0, 1, 1], [], []>} : vector<16x128xbf16>, vector<128x384xbf16>, vector<16x384xf32> -> vector<16x384xf32>
    %c0_18 = arith.constant 0 : index
    %c0_19 = arith.constant 0 : index
    %c0_20 = arith.constant 0 : index
    %33 = vector.load %arg6[%c0_18, %c0_19, %c0_20] : memref<1x1x384xf32, #tpu.memory_space<vmem>>, vector<1x1x384xf32>
    %34 = vector.shape_cast %33 : vector<1x1x384xf32> to vector<1x384xf32>
    %35 = vector.broadcast %34 : vector<1x384xf32> to vector<16x384xf32>
    %36 = arith.addf %32, %35 : vector<16x384xf32>
    %37 = vector.extract_strided_slice %36 {offsets = [0, 0], sizes = [16, 32], strides = [1, 1]} : vector<16x384xf32> to vector<16x32xf32>
    %38 = arith.truncf %37 : vector<16x32xf32> to vector<16x32xbf16>
    %39 = vector.extract_strided_slice %36 {offsets = [0, 128], sizes = [16, 32], strides = [1, 1]} : vector<16x384xf32> to vector<16x32xf32>
    %40 = arith.truncf %39 : vector<16x32xf32> to vector<16x32xbf16>
    %41 = vector.extract_strided_slice %36 {offsets = [0, 256], sizes = [16, 32], strides = [1, 1]} : vector<16x384xf32> to vector<16x32xf32>
    %42 = arith.truncf %41 : vector<16x32xf32> to vector<16x32xbf16>
    %cst_21 = arith.constant dense<0.000000e+00> : vector<16x16xf32>
    %43 = tpu.matmul %38, %40, %cst_21 {dimension_numbers = #tpu.dot_dimension_numbers<[1], [1], [0], [0], [0, 0, 1, 0], [], []>} : vector<16x32xbf16>, vector<16x32xbf16>, vector<16x16xf32> -> vector<16x16xf32>
    %cst_22 = arith.constant 0.176776692 : f32
    %44 = vector.broadcast %cst_22 : f32 to vector<16x16xf32>
    %45 = arith.mulf %43, %44 : vector<16x16xf32>
    %46 = arith.addf %45, %4 : vector<16x16xf32>
    %cst_23 = arith.constant dense<0xFF800000> : vector<16xf32>
    %47 = vector.multi_reduction <maximumf>, %46, %cst_23 [1] : vector<16x16xf32> to vector<16xf32>
    %48 = vector.shape_cast %47 : vector<16xf32> to vector<16x1xf32>
    %49 = vector.broadcast %48 : vector<16x1xf32> to vector<16x16xf32>
    %50 = arith.subf %46, %49 : vector<16x16xf32>
    %51 = math.exp %50 : vector<16x16xf32>
    %cst_24 = arith.constant dense<0.000000e+00> : vector<16xf32>
    %52 = vector.multi_reduction <add>, %51, %cst_24 [1] : vector<16x16xf32> to vector<16xf32>
    %53 = vector.shape_cast %52 : vector<16xf32> to vector<16x1xf32>
    %54 = tpu.reciprocal %53 {approx = true} : vector<16x1xf32> -> vector<16x1xf32>
    %55 = vector.broadcast %54 : vector<16x1xf32> to vector<16x16xf32>
    %56 = arith.mulf %51, %55 : vector<16x16xf32>
    %57 = arith.truncf %56 : vector<16x16xf32> to vector<16x16xbf16>
    %cst_25 = arith.constant dense<0.000000e+00> : vector<16x32xf32>
    %58 = tpu.matmul %57, %42, %cst_25 {dimension_numbers = #tpu.dot_dimension_numbers<[1], [0], [0], [1], [0, 0, 1, 1], [], []>} : vector<16x16xbf16>, vector<16x32xbf16>, vector<16x32xf32> -> vector<16x32xf32>
    %59 = vector.extract_strided_slice %36 {offsets = [0, 32], sizes = [16, 32], strides = [1, 1]} : vector<16x384xf32> to vector<16x32xf32>
    %60 = arith.truncf %59 : vector<16x32xf32> to vector<16x32xbf16>
    %61 = vector.extract_strided_slice %36 {offsets = [0, 160], sizes = [16, 32], strides = [1, 1]} : vector<16x384xf32> to vector<16x32xf32>
    %62 = arith.truncf %61 : vector<16x32xf32> to vector<16x32xbf16>
    %63 = vector.extract_strided_slice %36 {offsets = [0, 288], sizes = [16, 32], strides = [1, 1]} : vector<16x384xf32> to vector<16x32xf32>
    %64 = arith.truncf %63 : vector<16x32xf32> to vector<16x32xbf16>
    %cst_26 = arith.constant dense<0.000000e+00> : vector<16x16xf32>
    %65 = tpu.matmul %60, %62, %cst_26 {dimension_numbers = #tpu.dot_dimension_numbers<[1], [1], [0], [0], [0, 0, 1, 0], [], []>} : vector<16x32xbf16>, vector<16x32xbf16>, vector<16x16xf32> -> vector<16x16xf32>
    %cst_27 = arith.constant 0.176776692 : f32
    %66 = vector.broadcast %cst_27 : f32 to vector<16x16xf32>
    %67 = arith.mulf %65, %66 : vector<16x16xf32>
    %68 = arith.addf %67, %4 : vector<16x16xf32>
    %cst_28 = arith.constant dense<0xFF800000> : vector<16xf32>
    %69 = vector.multi_reduction <maximumf>, %68, %cst_28 [1] : vector<16x16xf32> to vector<16xf32>
    %70 = vector.shape_cast %69 : vector<16xf32> to vector<16x1xf32>
    %71 = vector.broadcast %70 : vector<16x1xf32> to vector<16x16xf32>
    %72 = arith.subf %68, %71 : vector<16x16xf32>
    %73 = math.exp %72 : vector<16x16xf32>
    %cst_29 = arith.constant dense<0.000000e+00> : vector<16xf32>
    %74 = vector.multi_reduction <add>, %73, %cst_29 [1] : vector<16x16xf32> to vector<16xf32>
    %75 = vector.shape_cast %74 : vector<16xf32> to vector<16x1xf32>
    %76 = tpu.reciprocal %75 {approx = true} : vector<16x1xf32> -> vector<16x1xf32>
    %77 = vector.broadcast %76 : vector<16x1xf32> to vector<16x16xf32>
    %78 = arith.mulf %73, %77 : vector<16x16xf32>
    %79 = arith.truncf %78 : vector<16x16xf32> to vector<16x16xbf16>
    %cst_30 = arith.constant dense<0.000000e+00> : vector<16x32xf32>
    %80 = tpu.matmul %79, %64, %cst_30 {dimension_numbers = #tpu.dot_dimension_numbers<[1], [0], [0], [1], [0, 0, 1, 1], [], []>} : vector<16x16xbf16>, vector<16x32xbf16>, vector<16x32xf32> -> vector<16x32xf32>
    %81 = vector.extract_strided_slice %36 {offsets = [0, 64], sizes = [16, 32], strides = [1, 1]} : vector<16x384xf32> to vector<16x32xf32>
    %82 = arith.truncf %81 : vector<16x32xf32> to vector<16x32xbf16>
    %83 = vector.extract_strided_slice %36 {offsets = [0, 192], sizes = [16, 32], strides = [1, 1]} : vector<16x384xf32> to vector<16x32xf32>
    %84 = arith.truncf %83 : vector<16x32xf32> to vector<16x32xbf16>
    %85 = vector.extract_strided_slice %36 {offsets = [0, 320], sizes = [16, 32], strides = [1, 1]} : vector<16x384xf32> to vector<16x32xf32>
    %86 = arith.truncf %85 : vector<16x32xf32> to vector<16x32xbf16>
    %cst_31 = arith.constant dense<0.000000e+00> : vector<16x16xf32>
    %87 = tpu.matmul %82, %84, %cst_31 {dimension_numbers = #tpu.dot_dimension_numbers<[1], [1], [0], [0], [0, 0, 1, 0], [], []>} : vector<16x32xbf16>, vector<16x32xbf16>, vector<16x16xf32> -> vector<16x16xf32>
    %cst_32 = arith.constant 0.176776692 : f32
    %88 = vector.broadcast %cst_32 : f32 to vector<16x16xf32>
    %89 = arith.mulf %87, %88 : vector<16x16xf32>
    %90 = arith.addf %89, %4 : vector<16x16xf32>
    %cst_33 = arith.constant dense<0xFF800000> : vector<16xf32>
    %91 = vector.multi_reduction <maximumf>, %90, %cst_33 [1] : vector<16x16xf32> to vector<16xf32>
    %92 = vector.shape_cast %91 : vector<16xf32> to vector<16x1xf32>
    %93 = vector.broadcast %92 : vector<16x1xf32> to vector<16x16xf32>
    %94 = arith.subf %90, %93 : vector<16x16xf32>
    %95 = math.exp %94 : vector<16x16xf32>
    %cst_34 = arith.constant dense<0.000000e+00> : vector<16xf32>
    %96 = vector.multi_reduction <add>, %95, %cst_34 [1] : vector<16x16xf32> to vector<16xf32>
    %97 = vector.shape_cast %96 : vector<16xf32> to vector<16x1xf32>
    %98 = tpu.reciprocal %97 {approx = true} : vector<16x1xf32> -> vector<16x1xf32>
    %99 = vector.broadcast %98 : vector<16x1xf32> to vector<16x16xf32>
    %100 = arith.mulf %95, %99 : vector<16x16xf32>
    %101 = arith.truncf %100 : vector<16x16xf32> to vector<16x16xbf16>
    %cst_35 = arith.constant dense<0.000000e+00> : vector<16x32xf32>
    %102 = tpu.matmul %101, %86, %cst_35 {dimension_numbers = #tpu.dot_dimension_numbers<[1], [0], [0], [1], [0, 0, 1, 1], [], []>} : vector<16x16xbf16>, vector<16x32xbf16>, vector<16x32xf32> -> vector<16x32xf32>
    %103 = vector.extract_strided_slice %36 {offsets = [0, 96], sizes = [16, 32], strides = [1, 1]} : vector<16x384xf32> to vector<16x32xf32>
    %104 = arith.truncf %103 : vector<16x32xf32> to vector<16x32xbf16>
    %105 = vector.extract_strided_slice %36 {offsets = [0, 224], sizes = [16, 32], strides = [1, 1]} : vector<16x384xf32> to vector<16x32xf32>
    %106 = arith.truncf %105 : vector<16x32xf32> to vector<16x32xbf16>
    %107 = vector.extract_strided_slice %36 {offsets = [0, 352], sizes = [16, 32], strides = [1, 1]} : vector<16x384xf32> to vector<16x32xf32>
    %108 = arith.truncf %107 : vector<16x32xf32> to vector<16x32xbf16>
    %cst_36 = arith.constant dense<0.000000e+00> : vector<16x16xf32>
    %109 = tpu.matmul %104, %106, %cst_36 {dimension_numbers = #tpu.dot_dimension_numbers<[1], [1], [0], [0], [0, 0, 1, 0], [], []>} : vector<16x32xbf16>, vector<16x32xbf16>, vector<16x16xf32> -> vector<16x16xf32>
    %cst_37 = arith.constant 0.176776692 : f32
    %110 = vector.broadcast %cst_37 : f32 to vector<16x16xf32>
    %111 = arith.mulf %109, %110 : vector<16x16xf32>
    %112 = arith.addf %111, %4 : vector<16x16xf32>
    %cst_38 = arith.constant dense<0xFF800000> : vector<16xf32>
    %113 = vector.multi_reduction <maximumf>, %112, %cst_38 [1] : vector<16x16xf32> to vector<16xf32>
    %114 = vector.shape_cast %113 : vector<16xf32> to vector<16x1xf32>
    %115 = vector.broadcast %114 : vector<16x1xf32> to vector<16x16xf32>
    %116 = arith.subf %112, %115 : vector<16x16xf32>
    %117 = math.exp %116 : vector<16x16xf32>
    %cst_39 = arith.constant dense<0.000000e+00> : vector<16xf32>
    %118 = vector.multi_reduction <add>, %117, %cst_39 [1] : vector<16x16xf32> to vector<16xf32>
    %119 = vector.shape_cast %118 : vector<16xf32> to vector<16x1xf32>
    %120 = tpu.reciprocal %119 {approx = true} : vector<16x1xf32> -> vector<16x1xf32>
    %121 = vector.broadcast %120 : vector<16x1xf32> to vector<16x16xf32>
    %122 = arith.mulf %117, %121 : vector<16x16xf32>
    %123 = arith.truncf %122 : vector<16x16xf32> to vector<16x16xbf16>
    %cst_40 = arith.constant dense<0.000000e+00> : vector<16x32xf32>
    %124 = tpu.matmul %123, %108, %cst_40 {dimension_numbers = #tpu.dot_dimension_numbers<[1], [0], [0], [1], [0, 0, 1, 1], [], []>} : vector<16x16xbf16>, vector<16x32xbf16>, vector<16x32xf32> -> vector<16x32xf32>
    %125 = tpu.concatenate %58, %80, %102, %124 in 1 : vector<16x32xf32>, vector<16x32xf32>, vector<16x32xf32>, vector<16x32xf32> -> vector<16x128xf32>
    %126 = arith.truncf %125 : vector<16x128xf32> to vector<16x128xbf16>
    %c0_41 = arith.constant 0 : index
    %c0_42 = arith.constant 0 : index
    %c0_43 = arith.constant 0 : index
    %127 = vector.load %arg7[%c0_41, %c0_42, %c0_43] : memref<1x128x128xbf16, #tpu.memory_space<vmem>>, vector<1x128x128xbf16>
    %128 = vector.shape_cast %127 : vector<1x128x128xbf16> to vector<128x128xbf16>
    %cst_44 = arith.constant dense<0.000000e+00> : vector<16x128xf32>
    %129 = tpu.matmul %126, %128, %cst_44 {dimension_numbers = #tpu.dot_dimension_numbers<[1], [0], [0], [1], [0, 0, 1, 1], [], []>} : vector<16x128xbf16>, vector<128x128xbf16>, vector<16x128xf32> -> vector<16x128xf32>
    %c0_45 = arith.constant 0 : index
    %c0_46 = arith.constant 0 : index
    %c0_47 = arith.constant 0 : index
    %130 = vector.load %arg8[%c0_45, %c0_46, %c0_47] : memref<1x1x128xf32, #tpu.memory_space<vmem>>, vector<1x1x128xf32>
    %131 = vector.shape_cast %130 : vector<1x1x128xf32> to vector<1x128xf32>
    %132 = vector.broadcast %131 : vector<1x128xf32> to vector<16x128xf32>
    %133 = arith.addf %129, %132 : vector<16x128xf32>
    %134 = arith.addf %3, %133 : vector<16x128xf32>
    %c0_48 = arith.constant 0 : index
    %c0_49 = arith.constant 0 : index
    %c0_50 = arith.constant 0 : index
    %135 = vector.load %arg9[%c0_48, %c0_49, %c0_50] : memref<1x1x128xf32, #tpu.memory_space<vmem>>, vector<1x1x128xf32>
    %136 = vector.shape_cast %135 : vector<1x1x128xf32> to vector<1x128xf32>
    %c0_51 = arith.constant 0 : index
    %c0_52 = arith.constant 0 : index
    %c0_53 = arith.constant 0 : index
    %137 = vector.load %arg10[%c0_51, %c0_52, %c0_53] : memref<1x1x128xf32, #tpu.memory_space<vmem>>, vector<1x1x128xf32>
    %138 = vector.shape_cast %137 : vector<1x1x128xf32> to vector<1x128xf32>
    %cst_54 = arith.constant dense<0.000000e+00> : vector<16xf32>
    %139 = vector.multi_reduction <add>, %134, %cst_54 [1] : vector<16x128xf32> to vector<16xf32>
    %140 = vector.shape_cast %139 : vector<16xf32> to vector<16x1xf32>
    %cst_55 = arith.constant 1.280000e+02 : f32
    %141 = vector.broadcast %cst_55 : f32 to vector<16x1xf32>
    %142 = arith.divf %140, %141 : vector<16x1xf32>
    %143 = vector.broadcast %142 : vector<16x1xf32> to vector<16x128xf32>
    %144 = arith.subf %134, %143 : vector<16x128xf32>
    %145 = arith.mulf %144, %144 : vector<16x128xf32>
    %cst_56 = arith.constant dense<0.000000e+00> : vector<16xf32>
    %146 = vector.multi_reduction <add>, %145, %cst_56 [1] : vector<16x128xf32> to vector<16xf32>
    %147 = vector.shape_cast %146 : vector<16xf32> to vector<16x1xf32>
    %cst_57 = arith.constant 1.280000e+02 : f32
    %148 = vector.broadcast %cst_57 : f32 to vector<16x1xf32>
    %149 = arith.divf %147, %148 : vector<16x1xf32>
    %cst_58 = arith.constant 9.99999974E-6 : f32
    %150 = vector.broadcast %cst_58 : f32 to vector<16x1xf32>
    %151 = arith.addf %149, %150 : vector<16x1xf32>
    %152 = math.rsqrt %151 : vector<16x1xf32>
    %153 = vector.broadcast %152 : vector<16x1xf32> to vector<16x128xf32>
    %154 = arith.mulf %144, %153 : vector<16x128xf32>
    %155 = vector.broadcast %136 : vector<1x128xf32> to vector<16x128xf32>
    %156 = arith.mulf %154, %155 : vector<16x128xf32>
    %157 = vector.broadcast %138 : vector<1x128xf32> to vector<16x128xf32>
    %158 = arith.addf %156, %157 : vector<16x128xf32>
    %159 = arith.truncf %158 : vector<16x128xf32> to vector<16x128xbf16>
    %c0_59 = arith.constant 0 : index
    %c0_60 = arith.constant 0 : index
    %c0_61 = arith.constant 0 : index
    %160 = vector.load %arg11[%c0_59, %c0_60, %c0_61] : memref<1x128x512xbf16, #tpu.memory_space<vmem>>, vector<1x128x512xbf16>
    %161 = vector.shape_cast %160 : vector<1x128x512xbf16> to vector<128x512xbf16>
    %cst_62 = arith.constant dense<0.000000e+00> : vector<16x512xf32>
    %162 = tpu.matmul %159, %161, %cst_62 {dimension_numbers = #tpu.dot_dimension_numbers<[1], [0], [0], [1], [0, 0, 1, 1], [], []>} : vector<16x128xbf16>, vector<128x512xbf16>, vector<16x512xf32> -> vector<16x512xf32>
    %c0_63 = arith.constant 0 : index
    %c0_64 = arith.constant 0 : index
    %c0_65 = arith.constant 0 : index
    %163 = vector.load %arg12[%c0_63, %c0_64, %c0_65] : memref<1x1x512xf32, #tpu.memory_space<vmem>>, vector<1x1x512xf32>
    %164 = vector.shape_cast %163 : vector<1x1x512xf32> to vector<1x512xf32>
    %165 = vector.broadcast %164 : vector<1x512xf32> to vector<16x512xf32>
    %166 = arith.addf %162, %165 : vector<16x512xf32>
    %cst_66 = arith.constant 5.000000e-01 : f32
    %167 = vector.broadcast %cst_66 : f32 to vector<16x512xf32>
    %168 = arith.mulf %167, %166 : vector<16x512xf32>
    %cst_67 = arith.constant 4.471500e-02 : f32
    %169 = vector.broadcast %cst_67 : f32 to vector<16x512xf32>
    %170 = arith.mulf %169, %166 : vector<16x512xf32>
    %171 = arith.mulf %170, %166 : vector<16x512xf32>
    %172 = arith.mulf %171, %166 : vector<16x512xf32>
    %173 = arith.addf %166, %172 : vector<16x512xf32>
    %cst_68 = arith.constant 0.797884583 : f32
    %174 = vector.broadcast %cst_68 : f32 to vector<16x512xf32>
    %175 = arith.mulf %174, %173 : vector<16x512xf32>
    %176 = math.tanh %175 : vector<16x512xf32>
    %cst_69 = arith.constant 1.000000e+00 : f32
    %177 = vector.broadcast %cst_69 : f32 to vector<16x512xf32>
    %178 = arith.addf %177, %176 : vector<16x512xf32>
    %179 = arith.mulf %168, %178 : vector<16x512xf32>
    %180 = arith.truncf %179 : vector<16x512xf32> to vector<16x512xbf16>
    %c0_70 = arith.constant 0 : index
    %c0_71 = arith.constant 0 : index
    %c0_72 = arith.constant 0 : index
    %181 = vector.load %arg13[%c0_70, %c0_71, %c0_72] : memref<1x512x128xbf16, #tpu.memory_space<vmem>>, vector<1x512x128xbf16>
    %182 = vector.shape_cast %181 : vector<1x512x128xbf16> to vector<512x128xbf16>
    %cst_73 = arith.constant dense<0.000000e+00> : vector<16x128xf32>
    %183 = tpu.matmul %180, %182, %cst_73 {dimension_numbers = #tpu.dot_dimension_numbers<[1], [0], [0], [1], [0, 0, 1, 1], [], []>} : vector<16x512xbf16>, vector<512x128xbf16>, vector<16x128xf32> -> vector<16x128xf32>
    %c0_74 = arith.constant 0 : index
    %c0_75 = arith.constant 0 : index
    %c0_76 = arith.constant 0 : index
    %184 = vector.load %arg14[%c0_74, %c0_75, %c0_76] : memref<1x1x128xf32, #tpu.memory_space<vmem>>, vector<1x1x128xf32>
    %185 = vector.shape_cast %184 : vector<1x1x128xf32> to vector<1x128xf32>
    %186 = vector.broadcast %185 : vector<1x128xf32> to vector<16x128xf32>
    %187 = arith.addf %183, %186 : vector<16x128xf32>
    %188 = arith.addf %134, %187 : vector<16x128xf32>
    %c0_77 = arith.constant 0 : index
    %c0_78 = arith.constant 0 : index
    %189 = vector.load %arg19[%c0_77, %c0_78] : memref<16x128xf32, #tpu.memory_space<vmem>>, vector<16x128xf32>
    tpu.vector_store %arg19[%c0_77, %c0_78], %188 {strides = array<i32>} : memref<16x128xf32, #tpu.memory_space<vmem>>, vector<16x128xf32>,
    %c1_i32 = arith.constant 1 : i32
    %190 = arith.cmpi eq, %arg0, %c1_i32 : i32
    %191 = arith.extui %190 : i1 to i32
    %c0_i32_79 = arith.constant 0 : i32
    %192 = arith.cmpi ne, %191, %c0_i32_79 : i32
    scf.if %192 {
      %c0_80 = arith.constant 0 : index
      %c0_81 = arith.constant 0 : index
      %193 = vector.load %arg15[%c0_80, %c0_81] : memref<1x128xf32, #tpu.memory_space<vmem>>, vector<1x128xf32>
      %c0_82 = arith.constant 0 : index
      %c0_83 = arith.constant 0 : index
      %194 = vector.load %arg16[%c0_82, %c0_83] : memref<1x128xf32, #tpu.memory_space<vmem>>, vector<1x128xf32>
      %cst_84 = arith.constant dense<0.000000e+00> : vector<16xf32>
      %195 = vector.multi_reduction <add>, %188, %cst_84 [1] : vector<16x128xf32> to vector<16xf32>
      %196 = vector.shape_cast %195 : vector<16xf32> to vector<16x1xf32>
      %cst_85 = arith.constant 1.280000e+02 : f32
      %197 = vector.broadcast %cst_85 : f32 to vector<16x1xf32>
      %198 = arith.divf %196, %197 : vector<16x1xf32>
      %199 = vector.broadcast %198 : vector<16x1xf32> to vector<16x128xf32>
      %200 = arith.subf %188, %199 : vector<16x128xf32>
      %201 = arith.mulf %200, %200 : vector<16x128xf32>
      %cst_86 = arith.constant dense<0.000000e+00> : vector<16xf32>
      %202 = vector.multi_reduction <add>, %201, %cst_86 [1] : vector<16x128xf32> to vector<16xf32>
      %203 = vector.shape_cast %202 : vector<16xf32> to vector<16x1xf32>
      %cst_87 = arith.constant 1.280000e+02 : f32
      %204 = vector.broadcast %cst_87 : f32 to vector<16x1xf32>
      %205 = arith.divf %203, %204 : vector<16x1xf32>
      %cst_88 = arith.constant 9.99999974E-6 : f32
      %206 = vector.broadcast %cst_88 : f32 to vector<16x1xf32>
      %207 = arith.addf %205, %206 : vector<16x1xf32>
      %208 = math.rsqrt %207 : vector<16x1xf32>
      %209 = vector.broadcast %208 : vector<16x1xf32> to vector<16x128xf32>
      %210 = arith.mulf %200, %209 : vector<16x128xf32>
      %211 = vector.broadcast %193 : vector<1x128xf32> to vector<16x128xf32>
      %212 = arith.mulf %210, %211 : vector<16x128xf32>
      %213 = vector.broadcast %194 : vector<1x128xf32> to vector<16x128xf32>
      %214 = arith.addf %212, %213 : vector<16x128xf32>
      %215 = arith.truncf %214 : vector<16x128xf32> to vector<16x128xbf16>
      %c0_89 = arith.constant 0 : index
      %c0_90 = arith.constant 0 : index
      %216 = vector.load %arg17[%c0_89, %c0_90] : memref<128x256xbf16, #tpu.memory_space<vmem>>, vector<128x256xbf16>
      %cst_91 = arith.constant dense<0.000000e+00> : vector<16x256xf32>
      %217 = tpu.matmul %215, %216, %cst_91 {dimension_numbers = #tpu.dot_dimension_numbers<[1], [0], [0], [1], [0, 0, 1, 1], [], []>} : vector<16x128xbf16>, vector<128x256xbf16>, vector<16x256xf32> -> vector<16x256xf32>
      %c0_92 = arith.constant 0 : index
      %c0_93 = arith.constant 0 : index
      %218 = vector.load %arg18[%c0_92, %c0_93] : memref<16x256xf32, #tpu.memory_space<vmem>>, vector<16x256xf32>
      tpu.vector_store %arg18[%c0_92, %c0_93], %217 {strides = array<i32>} : memref<16x256xf32, #tpu.memory_space<vmem>>, vector<16x256xf32>,
    } else {
    }
    return
  }
  func.func @transform_0(%arg0: i32) -> (i32, i32) {
    %c0_i32 = arith.constant 0 : i32
    %c0_i32_0 = arith.constant 0 : i32
    %c0_i32_1 = arith.constant 0 : i32
    return %c0_i32, %c0_i32_0 : i32, i32
  }
  func.func @transform_1(%arg0: i32) -> (i32, i32) {
    %c0_i32 = arith.constant 0 : i32
    %c0_i32_0 = arith.constant 0 : i32
    %c0_i32_1 = arith.constant 0 : i32
    return %c0_i32, %c0_i32_0 : i32, i32
  }
  func.func @transform_2(%arg0: i32) -> (i32, i32, i32) {
    %c0_i32 = arith.constant 0 : i32
    %c0_i32_0 = arith.constant 0 : i32
    %c0_i32_1 = arith.constant 0 : i32
    return %arg0, %c0_i32, %c0_i32_0 : i32, i32, i32
  }
  func.func @transform_3(%arg0: i32) -> (i32, i32, i32) {
    %c0_i32 = arith.constant 0 : i32
    %c0_i32_0 = arith.constant 0 : i32
    %c0_i32_1 = arith.constant 0 : i32
    return %arg0, %c0_i32, %c0_i32_0 : i32, i32, i32
  }
  func.func @transform_4(%arg0: i32) -> (i32, i32, i32) {
    %c0_i32 = arith.constant 0 : i32
    %c0_i32_0 = arith.constant 0 : i32
    %c0_i32_1 = arith.constant 0 : i32
    return %arg0, %c0_i32, %c0_i32_0 : i32, i32, i32
  }
  func.func @transform_5(%arg0: i32) -> (i32, i32, i32) {
    %c0_i32 = arith.constant 0 : i32
    %c0_i32_0 = arith.constant 0 : i32
    %c0_i32_1 = arith.constant 0 : i32
    return %arg0, %c0_i32, %c0_i32_0 : i32, i32, i32
  }
  func.func @transform_6(%arg0: i32) -> (i32, i32, i32) {
    %c0_i32 = arith.constant 0 : i32
    %c0_i32_0 = arith.constant 0 : i32
    %c0_i32_1 = arith.constant 0 : i32
    return %arg0, %c0_i32, %c0_i32_0 : i32, i32, i32
  }
  func.func @transform_7(%arg0: i32) -> (i32, i32, i32) {
    %c0_i32 = arith.constant 0 : i32
    %c0_i32_0 = arith.constant 0 : i32
    %c0_i32_1 = arith.constant 0 : i32
    return %arg0, %c0_i32, %c0_i32_0 : i32, i32, i32
  }
  func.func @transform_8(%arg0: i32) -> (i32, i32, i32) {
    %c0_i32 = arith.constant 0 : i32
    %c0_i32_0 = arith.constant 0 : i32
    %c0_i32_1 = arith.constant 0 : i32
    return %arg0, %c0_i32, %c0_i32_0 : i32, i32, i32
  }
  func.func @transform_9(%arg0: i32) -> (i32, i32, i32) {
    %c0_i32 = arith.constant 0 : i32
    %c0_i32_0 = arith.constant 0 : i32
    %c0_i32_1 = arith.constant 0 : i32
    return %arg0, %c0_i32, %c0_i32_0 : i32, i32, i32
  }
  func.func @transform_10(%arg0: i32) -> (i32, i32, i32) {
    %c0_i32 = arith.constant 0 : i32
    %c0_i32_0 = arith.constant 0 : i32
    %c0_i32_1 = arith.constant 0 : i32
    return %arg0, %c0_i32, %c0_i32_0 : i32, i32, i32
  }
  func.func @transform_11(%arg0: i32) -> (i32, i32, i32) {
    %c0_i32 = arith.constant 0 : i32
    %c0_i32_0 = arith.constant 0 : i32
    %c0_i32_1 = arith.constant 0 : i32
    return %arg0, %c0_i32, %c0_i32_0 : i32, i32, i32
  }
  func.func @transform_12(%arg0: i32) -> (i32, i32, i32) {
    %c0_i32 = arith.constant 0 : i32
    %c0_i32_0 = arith.constant 0 : i32
    %c0_i32_1 = arith.constant 0 : i32
    return %arg0, %c0_i32, %c0_i32_0 : i32, i32, i32
  }
  func.func @transform_13(%arg0: i32) -> (i32, i32, i32) {
    %c0_i32 = arith.constant 0 : i32
    %c0_i32_0 = arith.constant 0 : i32
    %c0_i32_1 = arith.constant 0 : i32
    return %arg0, %c0_i32, %c0_i32_0 : i32, i32, i32
  }
  func.func @transform_14(%arg0: i32) -> (i32, i32) {
    %c0_i32 = arith.constant 0 : i32
    %c0_i32_0 = arith.constant 0 : i32
    %c0_i32_1 = arith.constant 0 : i32
    return %c0_i32, %c0_i32_0 : i32, i32
  }
  func.func @transform_15(%arg0: i32) -> (i32, i32) {
    %c0_i32 = arith.constant 0 : i32
    %c0_i32_0 = arith.constant 0 : i32
    %c0_i32_1 = arith.constant 0 : i32
    return %c0_i32, %c0_i32_0 : i32, i32
  }
  func.func @transform_16(%arg0: i32) -> (i32, i32) {
    %c0_i32 = arith.constant 0 : i32
    %c0_i32_0 = arith.constant 0 : i32
    %c0_i32_1 = arith.constant 0 : i32
    return %c0_i32, %c0_i32_0 : i32, i32
  }
  func.func @transform_17(%arg0: i32) -> (i32, i32) {
    %c0_i32 = arith.constant 0 : i32
    %c0_i32_0 = arith.constant 0 : i32
    %c0_i32_1 = arith.constant 0 : i32
    return %c0_i32, %c0_i32_0 : i32, i32
  }
}

</mosaic_0001>

<llo_original>
// kernel: gpt_forward.1
$region0: #{gpt_forward.1}
  #allocation0 [shape = 'u32[]', space=smem, size = 0x4, offset = 0x4, fixed_abs, tag = 'smem constant byte address 0x4 - core index']
  #allocation1 [shape = 'u32[144,128]{1,0:T(1,128)}', space=vmem, size = 0x12000, scoped, tag = 'internal scratch']
  #allocation2 [shape = 'f32[16,128]{1,0:T(8,128)}', space=vmem, size = 0x2000, scoped, tag = 'scratch operand']
  %s0 = inlined_call_operand.vmem [shape: f32[16,128], index: 0, kind: input, shape index: {}]
  %s1 = inlined_call_operand.vmem [shape: f32[16,16], index: 1, kind: input, shape index: {}]
  %s2 = inlined_call_operand.vmem [shape: f32[2,1,128], index: 2, kind: input, shape index: {}]
  %s3 = inlined_call_operand.hbm [shape: f32[2,1,128], index: 3, kind: input, shape index: {}]
  %s4 = inlined_call_operand.hbm [shape: bf16[2,128,384], index: 4, kind: input, shape index: {}]
  %s5 = inlined_call_operand.hbm [shape: f32[2,1,384], index: 5, kind: input, shape index: {}]
  %s6 = inlined_call_operand.vmem [shape: bf16[2,128,128], index: 6, kind: input, shape index: {}]
  %s7 = inlined_call_operand.hbm [shape: f32[2,1,128], index: 7, kind: input, shape index: {}]
  %s8 = inlined_call_operand.hbm [shape: f32[2,1,128], index: 8, kind: input, shape index: {}]
  %s9 = inlined_call_operand.hbm [shape: f32[2,1,128], index: 9, kind: input, shape index: {}]
  %s10 = inlined_call_operand.hbm [shape: bf16[2,128,512], index: 10, kind: input, shape index: {}]
  %s11 = inlined_call_operand.hbm [shape: f32[2,1,512], index: 11, kind: input, shape index: {}]
  %s12 = inlined_call_operand.hbm [shape: bf16[2,512,128], index: 12, kind: input, shape index: {}]
  %s13 = inlined_call_operand.hbm [shape: f32[2,1,128], index: 13, kind: input, shape index: {}]
  %s14 = inlined_call_operand.hbm [shape: f32[1,128], index: 14, kind: input, shape index: {}]
  %s15 = inlined_call_operand.hbm [shape: f32[1,128], index: 15, kind: input, shape index: {}]
  %s16 = inlined_call_operand.vmem [shape: bf16[128,256], index: 16, kind: input, shape index: {}]
  %s17 = inlined_call_operand.hbm [shape: f32[16,256], index: 17, kind: output, shape index: {}]
  %s18 = sld [smem:[#allocation0]]
  $region157: #{gpt_forward.1} parent=0
    _
  %s20 = ssub.s32 1, %s18
  %s21 = scalar_select 0, %s20, %s18
  $region1: #{gpt_forward.1} parent=0
    #allocation3 [shape = 'u8[1024]{0}', space=vmem, size = 0x400, scoped, tag = 'input window, operand 3']
    #allocation4 [shape = 's32[2]{0}', space=sflag, size = 0x8, scoped, tag = 'scoped memory for gpt_forward.1']
    #allocation5 [shape = 's32[2]{0}', space=sflag, size = 0x8, scoped, tag = 'scoped memory for gpt_forward.1']
    #allocation6 [shape = 'u8[196608]{0}', space=vmem, size = 0x30000, scoped, tag = 'input window, operand 4']
    #allocation7 [shape = 's32[2]{0}', space=sflag, size = 0x8, scoped, tag = 'scoped memory for gpt_forward.1']
    #allocation8 [shape = 'u8[3072]{0}', space=vmem, size = 0xc00, scoped, tag = 'input window, operand 5']
    #allocation9 [shape = 'u8[1024]{0}', space=vmem, size = 0x400, scoped, tag = 'input window, operand 7']
    #allocation10 [shape = 's32[2]{0}', space=sflag, size = 0x8, scoped, tag = 'scoped memory for gpt_forward.1']
    #allocation11 [shape = 'u8[1024]{0}', space=vmem, size = 0x400, scoped, tag = 'input window, operand 8']
    #allocation12 [shape = 'u8[1024]{0}', space=vmem, size = 0x400, scoped, tag = 'input window, operand 9']
    #allocation13 [shape = 's32[2]{0}', space=sflag, size = 0x8, scoped, tag = 'scoped memory for gpt_forward.1']
    #allocation14 [shape = 'u8[262144]{0}', space=vmem, size = 0x40000, scoped, tag = 'input window, operand 10']
    #allocation15 [shape = 'u8[4096]{0}', space=vmem, size = 0x1000, scoped, tag = 'input window, operand 11']
    #allocation16 [shape = 's32[2]{0}', space=sflag, size = 0x8, scoped, tag = 'scoped memory for gpt_forward.1']
    #allocation17 [shape = 'u8[262144]{0}', space=vmem, size = 0x40000, scoped, tag = 'input window, operand 12']
    #allocation18 [shape = 'u8[1024]{0}', space=vmem, size = 0x400, scoped, tag = 'input window, operand 13']
    #allocation19 [shape = 's32[2]{0}', space=sflag, size = 0x8, scoped, tag = 'scoped memory for gpt_forward.1']
    #allocation20 [shape = 'u8[512]{0}', space=vmem, size = 0x400, scoped, tag = 'input window, operand 14, single buffered']
    #allocation21 [shape = 'u8[512]{0}', space=vmem, size = 0x400, scoped, tag = 'input window, operand 15, single buffered']
    #allocation22 [shape = 's32[1]{0}', space=sflag, size = 0x4, scoped, tag = 'scoped memory for gpt_forward.1']
    #allocation23 [shape = 'u8[16384]{0}', space=vmem, size = 0x4000, scoped, tag = 'output window, operand 0, single buffered']
    %22 = vsyncpa [#allocation4], 0
    %s23 = scalar_lea.sflag [#allocation4], 1
    %24 = vsyncpa %s23, 0
    %25 = vsyncpa [#allocation7], 0
    %s26 = scalar_lea.sflag [#allocation7], 1
    %27 = vsyncpa %s26, 0
    %28 = vsyncpa [#allocation10], 0
    %s29 = scalar_lea.sflag [#allocation10], 1
    %30 = vsyncpa %s29, 0
    %31 = vsyncpa [#allocation13], 0
    %s32 = scalar_lea.sflag [#allocation13], 1
    %33 = vsyncpa %s32, 0
    %34 = vsyncpa [#allocation16], 0
    %s35 = scalar_lea.sflag [#allocation16], 1
    %36 = vsyncpa %s35, 0
    %37 = vsyncpa [#allocation19], 0
    %s38 = scalar_lea.sflag [#allocation19], 1
    %39 = vsyncpa %s38, 0
    %40 = vsyncpa [#allocation22], 0
    %41 = vsyncpa [#allocation5], 0
    loop: start=0, step=1, limit=4
    $region2: #{gpt_forward.1} parent=1 // loop_pre_header
      _
    $region3: #{gpt_forward.1} parent=1 // loop_header
      %s43 = sphi 0, %s47
      %p44 = scmp.ge.s32.totalorder %s43, 4
      %s51 = sphi 0, %s51
      %s53 = sphi 0, %s51
      %s54 = sphi 0, %s53
      %s68 = sphi 0, %s54
      %s72 = sphi 0, %s72
      %s74 = sphi 0, %s72
      %s75 = sphi 0, %s74
      %s89 = sphi 0, %s75
      %s95 = sphi 0, %s97
      %s98 = sphi 0, %s95
      %s99 = sphi 0, %s98
      %s115 = sphi 0, %s99
      %s121 = sphi 0, %s123
      %s124 = sphi 0, %s121
      %s125 = sphi 0, %s124
      %s141 = sphi 0, %s125
      %s147 = sphi 0, %s149
      %s150 = sphi 0, %s147
      %s151 = sphi 0, %s150
      %s167 = sphi 0, %s151
      %s173 = sphi 0, %s175
      %s176 = sphi 0, %s173
      %s177 = sphi 0, %s176
      %s193 = sphi 0, %s177
      %s199 = sphi 0, %s201
      %s202 = sphi 0, %s199
      %s203 = sphi 0, %s202
      %s219 = sphi 0, %s203
      %s225 = sphi 0, %s227
      %s228 = sphi 0, %s225
      %s229 = sphi 0, %s228
      %s245 = sphi 0, %s229
      %s251 = sphi 0, %s253
      %s254 = sphi 0, %s251
      %s255 = sphi 0, %s254
      %s271 = sphi 0, %s255
      %s277 = sphi 0, %s279
      %s280 = sphi 0, %s277
      %s281 = sphi 0, %s280
      %s297 = sphi 0, %s281
      %s303 = sphi 0, %s305
      %s306 = sphi 0, %s303
      %s307 = sphi 0, %s306
      %s323 = sphi 0, %s307
      %s329 = sphi 0, %s331
      %s332 = sphi 0, %s329
      %s333 = sphi 0, %s332
      %s349 = sphi 0, %s333
      %s355 = sphi 0, %s357
      %s358 = sphi 0, %s355
      %s359 = sphi 0, %s358
      %s375 = sphi 0, %s359
      %s381 = sphi 0, %s383
      %s384 = sphi 0, %s381
      %s385 = sphi 0, %s384
      %s401 = sphi 0, %s385
      %s405 = sphi 0, %s405
      %s407 = sphi 0, %s405
      %s408 = sphi 0, %s407
      %s422 = sphi 0, %s408
      %s426 = sphi 0, %s426
      %s428 = sphi 0, %s426
      %s429 = sphi 0, %s428
      %s443 = sphi 0, %s429
      %s447 = sphi 0, %s447
      %s449 = sphi 0, %s447
      %s450 = sphi 0, %s449
      %s464 = sphi 0, %s450
      %s468 = sphi 0, %s468
      %s470 = sphi 0, %s468
      %s471 = sphi 0, %s470
      %s485 = sphi 0, %s471
    $region4: #{gpt_forward.1} parent=1 // loop_header_branch
      %46 = sbr.rel (%p44) target = $region8
    $region5: #{gpt_forward.1} parent=1 // loop_body
      %s48 = ssub.s32 %s43, 1
      %s49 = ssub.s32 %s43, 2
      %s50 = sadd.s32 %s43, 1
      %s52 = sadd.s32 %s51, 1
      %p55 = scmp.eq.s32.totalorder %s43, 1
      %p56 = scmp.ne.s32.totalorder %s51, %s53
      %p57 = scmp.eq.s32.totalorder %s43, 0
      %p58 = por %p56, %p57
      %p59 = scmp.ne.s32.totalorder %s51, %s53
      %p60 = scmp.eq.s32.totalorder %s48, 1
      %p61 = por %p59, %p60
      %p62 = scmp.ne.s32.totalorder %s53, %s54
      %p63 = scmp.eq.s32.totalorder %s48, 0
      %p64 = por %p62, %p63
      %p65 = scmp.ne.s32.totalorder %s53, %s54
      %p66 = scmp.eq.s32.totalorder %s49, 1
      %p67 = por %p65, %p66
      %p69 = scmp.ne.s32.totalorder %s54, %s68
      %p70 = scmp.eq.s32.totalorder %s49, 0
      %p71 = por %p69, %p70
      %s73 = sadd.s32 %s72, 1
      %p76 = scmp.eq.s32.totalorder %s43, 1
      %p77 = scmp.ne.s32.totalorder %s72, %s74
      %p78 = scmp.eq.s32.totalorder %s43, 0
      %p79 = por %p77, %p78
      %p80 = scmp.ne.s32.totalorder %s72, %s74
      %p81 = scmp.eq.s32.totalorder %s48, 1
      %p82 = por %p80, %p81
      %p83 = scmp.ne.s32.totalorder %s74, %s75
      %p84 = scmp.eq.s32.totalorder %s48, 0
      %p85 = por %p83, %p84
      %p86 = scmp.ne.s32.totalorder %s74, %s75
      %p87 = scmp.eq.s32.totalorder %s49, 1
      %p88 = por %p86, %p87
      %p90 = scmp.ne.s32.totalorder %s75, %s89
      %p91 = scmp.eq.s32.totalorder %s49, 0
      %p92 = por %p90, %p91
      %s93 = ssub.s32 %s43, %s50
      %p94 = scmp.eq.s32.totalorder %s93, 0
      %s96 = sadd.s32 %s95, 1
      %s97 = scalar_select %p94, %s95, %s96
      %p100 = pneg %p94
      %p101 = scmp.eq.s32.totalorder %s43, 1
      %p102 = por %p100, %p101
      %p103 = scmp.ne.s32.totalorder %s95, %s98
      %p104 = scmp.eq.s32.totalorder %s43, 0
      %p105 = por %p103, %p104
      %p106 = scmp.ne.s32.totalorder %s95, %s98
      %p107 = scmp.eq.s32.totalorder %s48, 1
      %p108 = por %p106, %p107
      %p109 = scmp.ne.s32.totalorder %s98, %s99
      %p110 = scmp.eq.s32.totalorder %s48, 0
      %p111 = por %p109, %p110
      %p112 = scmp.ne.s32.totalorder %s98, %s99
      %p113 = scmp.eq.s32.totalorder %s49, 1
      %p114 = por %p112, %p113
      %p116 = scmp.ne.s32.totalorder %s99, %s115
      %p117 = scmp.eq.s32.totalorder %s49, 0
      %p118 = por %p116, %p117
      %s119 = ssub.s32 %s43, %s50
      %p120 = scmp.eq.s32.totalorder %s119, 0
      %s122 = sadd.s32 %s121, 1
      %s123 = scalar_select %p120, %s121, %s122
      %p126 = pneg %p120
      %p127 = scmp.eq.s32.totalorder %s43, 1
      %p128 = por %p126, %p127
      %p129 = scmp.ne.s32.totalorder %s121, %s124
      %p130 = scmp.eq.s32.totalorder %s43, 0
      %p131 = por %p129, %p130
      %p132 = scmp.ne.s32.totalorder %s121, %s124
      %p133 = scmp.eq.s32.totalorder %s48, 1
      %p134 = por %p132, %p133
      %p135 = scmp.ne.s32.totalorder %s124, %s125
      %p136 = scmp.eq.s32.totalorder %s48, 0
      %p137 = por %p135, %p136
      %p138 = scmp.ne.s32.totalorder %s124, %s125
      %p139 = scmp.eq.s32.totalorder %s49, 1
      %p140 = por %p138, %p139
      %p142 = scmp.ne.s32.totalorder %s125, %s141
      %p143 = scmp.eq.s32.totalorder %s49, 0
      %p144 = por %p142, %p143
      %s145 = ssub.s32 %s43, %s50
      %p146 = scmp.eq.s32.totalorder %s145, 0
      %s148 = sadd.s32 %s147, 1
      %s149 = scalar_select %p146, %s147, %s148
      %p152 = pneg %p146
      %p153 = scmp.eq.s32.totalorder %s43, 1
      %p154 = por %p152, %p153
      %p155 = scmp.ne.s32.totalorder %s147, %s150
      %p156 = scmp.eq.s32.totalorder %s43, 0
      %p157 = por %p155, %p156
      %p158 = scmp.ne.s32.totalorder %s147, %s150
      %p159 = scmp.eq.s32.totalorder %s48, 1
      %p160 = por %p158, %p159
      %p161 = scmp.ne.s32.totalorder %s150, %s151
      %p162 = scmp.eq.s32.totalorder %s48, 0
      %p163 = por %p161, %p162
      %p164 = scmp.ne.s32.totalorder %s150, %s151
      %p165 = scmp.eq.s32.totalorder %s49, 1
      %p166 = por %p164, %p165
      %p168 = scmp.ne.s32.totalorder %s151, %s167
      %p169 = scmp.eq.s32.totalorder %s49, 0
      %p170 = por %p168, %p169
      %s171 = ssub.s32 %s43, %s50
      %p172 = scmp.eq.s32.totalorder %s171, 0
      %s174 = sadd.s32 %s173, 1
      %s175 = scalar_select %p172, %s173, %s174
      %p178 = pneg %p172
      %p179 = scmp.eq.s32.totalorder %s43, 1
      %p180 = por %p178, %p179
      %p181 = scmp.ne.s32.totalorder %s173, %s176
      %p182 = scmp.eq.s32.totalorder %s43, 0
      %p183 = por %p181, %p182
      %p184 = scmp.ne.s32.totalorder %s173, %s176
      %p185 = scmp.eq.s32.totalorder %s48, 1
      %p186 = por %p184, %p185
      %p187 = scmp.ne.s32.totalorder %s176, %s177
      %p188 = scmp.eq.s32.totalorder %s48, 0
      %p189 = por %p187, %p188
      %p190 = scmp.ne.s32.totalorder %s176, %s177
      %p191 = scmp.eq.s32.totalorder %s49, 1
      %p192 = por %p190, %p191
      %p194 = scmp.ne.s32.totalorder %s177, %s193
      %p195 = scmp.eq.s32.totalorder %s49, 0
      %p196 = por %p194, %p195
      %s197 = ssub.s32 %s43, %s50
      %p198 = scmp.eq.s32.totalorder %s197, 0
      %s200 = sadd.s32 %s199, 1
      %s201 = scalar_select %p198, %s199, %s200
      %p204 = pneg %p198
      %p205 = scmp.eq.s32.totalorder %s43, 1
      %p206 = por %p204, %p205
      %p207 = scmp.ne.s32.totalorder %s199, %s202
      %p208 = scmp.eq.s32.totalorder %s43, 0
      %p209 = por %p207, %p208
      %p210 = scmp.ne.s32.totalorder %s199, %s202
      %p211 = scmp.eq.s32.totalorder %s48, 1
      %p212 = por %p210, %p211
      %p213 = scmp.ne.s32.totalorder %s202, %s203
      %p214 = scmp.eq.s32.totalorder %s48, 0
      %p215 = por %p213, %p214
      %p216 = scmp.ne.s32.totalorder %s202, %s203
      %p217 = scmp.eq.s32.totalorder %s49, 1
      %p218 = por %p216, %p217
      %p220 = scmp.ne.s32.totalorder %s203, %s219
      %p221 = scmp.eq.s32.totalorder %s49, 0
      %p222 = por %p220, %p221
      %s223 = ssub.s32 %s43, %s50
      %p224 = scmp.eq.s32.totalorder %s223, 0
      %s226 = sadd.s32 %s225, 1
      %s227 = scalar_select %p224, %s225, %s226
      %p230 = pneg %p224
      %p231 = scmp.eq.s32.totalorder %s43, 1
      %p232 = por %p230, %p231
      %p233 = scmp.ne.s32.totalorder %s225, %s228
      %p234 = scmp.eq.s32.totalorder %s43, 0
      %p235 = por %p233, %p234
      %p236 = scmp.ne.s32.totalorder %s225, %s228
      %p237 = scmp.eq.s32.totalorder %s48, 1
      %p238 = por %p236, %p237
      %p239 = scmp.ne.s32.totalorder %s228, %s229
      %p240 = scmp.eq.s32.totalorder %s48, 0
      %p241 = por %p239, %p240
      %p242 = scmp.ne.s32.totalorder %s228, %s229
      %p243 = scmp.eq.s32.totalorder %s49, 1
      %p244 = por %p242, %p243
      %p246 = scmp.ne.s32.totalorder %s229, %s245
      %p247 = scmp.eq.s32.totalorder %s49, 0
      %p248 = por %p246, %p247
      %s249 = ssub.s32 %s43, %s50
      %p250 = scmp.eq.s32.totalorder %s249, 0
      %s252 = sadd.s32 %s251, 1
      %s253 = scalar_select %p250, %s251, %s252
      %p256 = pneg %p250
      %p257 = scmp.eq.s32.totalorder %s43, 1
      %p258 = por %p256, %p257
      %p259 = scmp.ne.s32.totalorder %s251, %s254
      %p260 = scmp.eq.s32.totalorder %s43, 0
      %p261 = por %p259, %p260
      %p262 = scmp.ne.s32.totalorder %s251, %s254
      %p263 = scmp.eq.s32.totalorder %s48, 1
      %p264 = por %p262, %p263
      %p265 = scmp.ne.s32.totalorder %s254, %s255
      %p266 = scmp.eq.s32.totalorder %s48, 0
      %p267 = por %p265, %p266
      %p268 = scmp.ne.s32.totalorder %s254, %s255
      %p269 = scmp.eq.s32.totalorder %s49, 1
      %p270 = por %p268, %p269
      %p272 = scmp.ne.s32.totalorder %s255, %s271
      %p273 = scmp.eq.s32.totalorder %s49, 0
      %p274 = por %p272, %p273
      %s275 = ssub.s32 %s43, %s50
      %p276 = scmp.eq.s32.totalorder %s275, 0
      %s278 = sadd.s32 %s277, 1
      %s279 = scalar_select %p276, %s277, %s278
      %p282 = pneg %p276
      %p283 = scmp.eq.s32.totalorder %s43, 1
      %p284 = por %p282, %p283
      %p285 = scmp.ne.s32.totalorder %s277, %s280
      %p286 = scmp.eq.s32.totalorder %s43, 0
      %p287 = por %p285, %p286
      %p288 = scmp.ne.s32.totalorder %s277, %s280
      %p289 = scmp.eq.s32.totalorder %s48, 1
      %p290 = por %p288, %p289
      %p291 = scmp.ne.s32.totalorder %s280, %s281
      %p292 = scmp.eq.s32.totalorder %s48, 0
      %p293 = por %p291, %p292
      %p294 = scmp.ne.s32.totalorder %s280, %s281
      %p295 = scmp.eq.s32.totalorder %s49, 1
      %p296 = por %p294, %p295
      %p298 = scmp.ne.s32.totalorder %s281, %s297
      %p299 = scmp.eq.s32.totalorder %s49, 0
      %p300 = por %p298, %p299
      %s301 = ssub.s32 %s43, %s50
      %p302 = scmp.eq.s32.totalorder %s301, 0
      %s304 = sadd.s32 %s303, 1
      %s305 = scalar_select %p302, %s303, %s304
      %p308 = pneg %p302
      %p309 = scmp.eq.s32.totalorder %s43, 1
      %p310 = por %p308, %p309
      %p311 = scmp.ne.s32.totalorder %s303, %s306
      %p312 = scmp.eq.s32.totalorder %s43, 0
      %p313 = por %p311, %p312
      %p314 = scmp.ne.s32.totalorder %s303, %s306
      %p315 = scmp.eq.s32.totalorder %s48, 1
      %p316 = por %p314, %p315
      %p317 = scmp.ne.s32.totalorder %s306, %s307
      %p318 = scmp.eq.s32.totalorder %s48, 0
      %p319 = por %p317, %p318
      %p320 = scmp.ne.s32.totalorder %s306, %s307
      %p321 = scmp.eq.s32.totalorder %s49, 1
      %p322 = por %p320, %p321
      %p324 = scmp.ne.s32.totalorder %s307, %s323
      %p325 = scmp.eq.s32.totalorder %s49, 0
      %p326 = por %p324, %p325
      %s327 = ssub.s32 %s43, %s50
      %p328 = scmp.eq.s32.totalorder %s327, 0
      %s330 = sadd.s32 %s329, 1
      %s331 = scalar_select %p328, %s329, %s330
      %p334 = pneg %p328
      %p335 = scmp.eq.s32.totalorder %s43, 1
      %p336 = por %p334, %p335
      %p337 = scmp.ne.s32.totalorder %s329, %s332
      %p338 = scmp.eq.s32.totalorder %s43, 0
      %p339 = por %p337, %p338
      %p340 = scmp.ne.s32.totalorder %s329, %s332
      %p341 = scmp.eq.s32.totalorder %s48, 1
      %p342 = por %p340, %p341
      %p343 = scmp.ne.s32.totalorder %s332, %s333
      %p344 = scmp.eq.s32.totalorder %s48, 0
      %p345 = por %p343, %p344
      %p346 = scmp.ne.s32.totalorder %s332, %s333
      %p347 = scmp.eq.s32.totalorder %s49, 1
      %p348 = por %p346, %p347
      %p350 = scmp.ne.s32.totalorder %s333, %s349
      %p351 = scmp.eq.s32.totalorder %s49, 0
      %p352 = por %p350, %p351
      %s353 = ssub.s32 %s43, %s50
      %p354 = scmp.eq.s32.totalorder %s353, 0
      %s356 = sadd.s32 %s355, 1
      %s357 = scalar_select %p354, %s355, %s356
      %p360 = pneg %p354
      %p361 = scmp.eq.s32.totalorder %s43, 1
      %p362 = por %p360, %p361
      %p363 = scmp.ne.s32.totalorder %s355, %s358
      %p364 = scmp.eq.s32.totalorder %s43, 0
      %p365 = por %p363, %p364
      %p366 = scmp.ne.s32.totalorder %s355, %s358
      %p367 = scmp.eq.s32.totalorder %s48, 1
      %p368 = por %p366, %p367
      %p369 = scmp.ne.s32.totalorder %s358, %s359
      %p370 = scmp.eq.s32.totalorder %s48, 0
      %p371 = por %p369, %p370
      %p372 = scmp.ne.s32.totalorder %s358, %s359
      %p373 = scmp.eq.s32.totalorder %s49, 1
      %p374 = por %p372, %p373
      %p376 = scmp.ne.s32.totalorder %s359, %s375
      %p377 = scmp.eq.s32.totalorder %s49, 0
      %p378 = por %p376, %p377
      %s379 = ssub.s32 %s43, %s50
      %p380 = scmp.eq.s32.totalorder %s379, 0
      %s382 = sadd.s32 %s381, 1
      %s383 = scalar_select %p380, %s381, %s382
      %p386 = pneg %p380
      %p387 = scmp.eq.s32.totalorder %s43, 1
      %p388 = por %p386, %p387
      %p389 = scmp.ne.s32.totalorder %s381, %s384
      %p390 = scmp.eq.s32.totalorder %s43, 0
      %p391 = por %p389, %p390
      %p392 = scmp.ne.s32.totalorder %s381, %s384
      %p393 = scmp.eq.s32.totalorder %s48, 1
      %p394 = por %p392, %p393
      %p395 = scmp.ne.s32.totalorder %s384, %s385
      %p396 = scmp.eq.s32.totalorder %s48, 0
      %p397 = por %p395, %p396
      %p398 = scmp.ne.s32.totalorder %s384, %s385
      %p399 = scmp.eq.s32.totalorder %s49, 1
      %p400 = por %p398, %p399
      %p402 = scmp.ne.s32.totalorder %s385, %s401
      %p403 = scmp.eq.s32.totalorder %s49, 0
      %p404 = por %p402, %p403
      %s406 = sadd.s32 %s405, 1
      %p409 = scmp.eq.s32.totalorder %s43, 1
      %p410 = scmp.ne.s32.totalorder %s405, %s407
      %p411 = scmp.eq.s32.totalorder %s43, 0
      %p412 = por %p410, %p411
      %p413 = scmp.ne.s32.totalorder %s405, %s407
      %p414 = scmp.eq.s32.totalorder %s48, 1
      %p415 = por %p413, %p414
      %p416 = scmp.ne.s32.totalorder %s407, %s408
      %p417 = scmp.eq.s32.totalorder %s48, 0
      %p418 = por %p416, %p417
      %p419 = scmp.ne.s32.totalorder %s407, %s408
      %p420 = scmp.eq.s32.totalorder %s49, 1
      %p421 = por %p419, %p420
      %p423 = scmp.ne.s32.totalorder %s408, %s422
      %p424 = scmp.eq.s32.totalorder %s49, 0
      %p425 = por %p423, %p424
      %s427 = sadd.s32 %s426, 1
      %p430 = scmp.eq.s32.totalorder %s43, 1
      %p431 = scmp.ne.s32.totalorder %s426, %s428
      %p432 = scmp.eq.s32.totalorder %s43, 0
      %p433 = por %p431, %p432
      %p434 = scmp.ne.s32.totalorder %s426, %s428
      %p435 = scmp.eq.s32.totalorder %s48, 1
      %p436 = por %p434, %p435
      %p437 = scmp.ne.s32.totalorder %s428, %s429
      %p438 = scmp.eq.s32.totalorder %s48, 0
      %p439 = por %p437, %p438
      %p440 = scmp.ne.s32.totalorder %s428, %s429
      %p441 = scmp.eq.s32.totalorder %s49, 1
      %p442 = por %p440, %p441
      %p444 = scmp.ne.s32.totalorder %s429, %s443
      %p445 = scmp.eq.s32.totalorder %s49, 0
      %p446 = por %p444, %p445
      %s448 = sadd.s32 %s447, 1
      %p451 = scmp.eq.s32.totalorder %s43, 1
      %p452 = scmp.ne.s32.totalorder %s447, %s449
      %p453 = scmp.eq.s32.totalorder %s43, 0
      %p454 = por %p452, %p453
      %p455 = scmp.ne.s32.totalorder %s447, %s449
      %p456 = scmp.eq.s32.totalorder %s48, 1
      %p457 = por %p455, %p456
      %p458 = scmp.ne.s32.totalorder %s449, %s450
      %p459 = scmp.eq.s32.totalorder %s48, 0
      %p460 = por %p458, %p459
      %p461 = scmp.ne.s32.totalorder %s449, %s450
      %p462 = scmp.eq.s32.totalorder %s49, 1
      %p463 = por %p461, %p462
      %p465 = scmp.ne.s32.totalorder %s450, %s464
      %p466 = scmp.eq.s32.totalorder %s49, 0
      %p467 = por %p465, %p466
      %s469 = sadd.s32 %s468, 1
      %p472 = scmp.eq.s32.totalorder %s43, 1
      %p473 = scmp.ne.s32.totalorder %s468, %s470
      %p474 = scmp.eq.s32.totalorder %s43, 0
      %p475 = por %p473, %p474
      %p476 = scmp.ne.s32.totalorder %s468, %s470
      %p477 = scmp.eq.s32.totalorder %s48, 1
      %p478 = por %p476, %p477
      %p479 = scmp.ne.s32.totalorder %s470, %s471
      %p480 = scmp.eq.s32.totalorder %s48, 0
      %p481 = por %p479, %p480
      %p482 = scmp.ne.s32.totalorder %s470, %s471
      %p483 = scmp.eq.s32.totalorder %s49, 1
      %p484 = por %p482, %p483
      %p486 = scmp.ne.s32.totalorder %s471, %s485
      %p487 = scmp.eq.s32.totalorder %s49, 0
      %p488 = por %p486, %p487
      %p489 = scmp.le.s32.totalorder 1, %s43
      %p490 = scmp.lt.s32.totalorder %s43, 3
      %p491 = pnand %p489, %p490
      %p492 = pneg %p491
      // Predicated region
      $region9: #{gpt_forward.1} parent=5 // pred_check
        _
      $region10: #{gpt_forward.1} parent=5 // pred_check_branch
        %494 = sbr.rel (%p491) target = $region12
      $region11: #{gpt_forward.1} parent=5 // pred_region
        %s495 = ssub.s32 %s43, 1
        // Predicated region
        $region13: #{gpt_forward.1} parent=11 // pred_check
          %p496 = pneg %p64
        $region14: #{gpt_forward.1} parent=11 // pred_check_branch
          %498 = sbr.rel (%p496) target = $region16
        $region15: #{gpt_forward.1} parent=11 // pred_region
          _
        $region16: #{gpt_forward.1} parent=11 // pred_fallthru
          _
        // Predicated region
        $region17: #{gpt_forward.1} parent=11 // pred_check
          %p499 = pneg %p85
        $region18: #{gpt_forward.1} parent=11 // pred_check_branch
          %501 = sbr.rel (%p499) target = $region20
        $region19: #{gpt_forward.1} parent=11 // pred_region
          _
        $region20: #{gpt_forward.1} parent=11 // pred_fallthru
          _
        // Predicated region
        $region21: #{gpt_forward.1} parent=11 // pred_check
          %p502 = pneg %p418
        $region22: #{gpt_forward.1} parent=11 // pred_check_branch
          %504 = sbr.rel (%p502) target = $region24
        $region23: #{gpt_forward.1} parent=11 // pred_region
          %s506 = ssub.s32 16, 16
          %507 = vsyncadd [#allocation19], %s506
          %s509 = sshll.u32 [#allocation20], 4
          %s510 = int_to_ptr.vmem [resolvable:$true] %s509
          %512 = dma.hbm_to_vmem [thread:$0]  %s14, 16, %s510, [#allocation19]
        $region24: #{gpt_forward.1} parent=11 // pred_fallthru
          _
        // Predicated region
        $region25: #{gpt_forward.1} parent=11 // pred_check
          %p513 = pneg %p439
        $region26: #{gpt_forward.1} parent=11 // pred_check_branch
          %515 = sbr.rel (%p513) target = $region28
        $region27: #{gpt_forward.1} parent=11 // pred_region
          %s517 = ssub.s32 16, 16
          %518 = vsyncadd [#allocation22], %s517
          %s520 = sshll.u32 [#allocation21], 4
          %s521 = int_to_ptr.vmem [resolvable:$true] %s520
          %523 = dma.hbm_to_vmem [thread:$0]  %s15, 16, %s521, [#allocation22]
        $region28: #{gpt_forward.1} parent=11 // pred_fallthru
          _
        // Predicated region
        $region29: #{gpt_forward.1} parent=11 // pred_check
          %p524 = pneg %p460
        $region30: #{gpt_forward.1} parent=11 // pred_check_branch
          %526 = sbr.rel (%p524) target = $region32
        $region31: #{gpt_forward.1} parent=11 // pred_region
          _
        $region32: #{gpt_forward.1} parent=11 // pred_fallthru
          _
      $region12: #{gpt_forward.1} parent=5 // pred_fallthru
        _
      %p527 = scmp.lt.s32.totalorder %s43, 2
      // Predicated region
      $region33: #{gpt_forward.1} parent=5 // pred_check
        %p528 = pneg %p527
      $region34: #{gpt_forward.1} parent=5 // pred_check_branch
        %530 = sbr.rel (%p528) target = $region36
      $region35: #{gpt_forward.1} parent=5 // pred_region
        // Predicated region
        $region37: #{gpt_forward.1} parent=35 // pred_check
          %p531 = pneg %p105
        $region38: #{gpt_forward.1} parent=35 // pred_check_branch
          %533 = sbr.rel (%p531) target = $region40
        $region39: #{gpt_forward.1} parent=35 // pred_region
          %p534 = scmp.lt.s32.totalorder %s43, 1
          %s535 = scalar_select %p534, %s43, 1
          %s536 = scalar_lea.vmem %s2, %s535
        $region40: #{gpt_forward.1} parent=35 // pred_fallthru
          _
        // Predicated region
        $region41: #{gpt_forward.1} parent=35 // pred_check
          %p537 = pneg %p131
        $region42: #{gpt_forward.1} parent=35 // pred_check_branch
          %539 = sbr.rel (%p537) target = $region44
        $region43: #{gpt_forward.1} parent=35 // pred_region
          %s540 = sand.u32 %s121, 1
          %s541 = scalar_lea.sflag [#allocation4], %s540
          %s542 = sand.u32 %s121, 1
          %s543 = scalar_lea.vmem [#allocation3], %s542
          %s545 = ssub.s32 16, 16
          %546 = vsyncadd %s541, %s545
          %s547 = smul.addr %s43, 16
          %s548 = scalar_lea.hbm %s3, %s547
          %s550 = sshll.u32 %s543, 4
          %s551 = int_to_ptr.vmem [resolvable:$true] %s550
          %553 = dma.hbm_to_vmem [thread:$0]  %s548, 16, %s551, %s541
        $region44: #{gpt_forward.1} parent=35 // pred_fallthru
          _
        // Predicated region
        $region45: #{gpt_forward.1} parent=35 // pred_check
          %p554 = pneg %p157
        $region46: #{gpt_forward.1} parent=35 // pred_check_branch
          %556 = sbr.rel (%p554) target = $region48
        $region47: #{gpt_forward.1} parent=35 // pred_region
          %s557 = sand.u32 %s43, 1
          %s558 = scalar_lea.sflag [#allocation7], %s557
          %s559 = sand.u32 %s147, 1
          %s560 = smul.addr %s559, 192
          %s561 = scalar_lea.vmem [#allocation6], %s560
          %s563 = ssub.s32 3072, 3072
          %564 = vsyncadd %s558, %s563
          %s565 = smul.addr %s43, 48
          %s566 = smul.addr %s565, 64
          %s567 = scalar_lea.hbm %s4, %s566
          %s568 = sshll.u32 %s561, 4
          %s569 = int_to_ptr.vmem [resolvable:$true] %s568
          %574 = dma.hbm_to_vmem [thread:$0]  %s567, 3072, %s569, %s558, 192, 192, 12
        $region48: #{gpt_forward.1} parent=35 // pred_fallthru
          _
        // Predicated region
        $region49: #{gpt_forward.1} parent=35 // pred_check
          %p575 = pneg %p183
        $region50: #{gpt_forward.1} parent=35 // pred_check_branch
          %577 = sbr.rel (%p575) target = $region52
        $region51: #{gpt_forward.1} parent=35 // pred_region
          %s578 = sand.u32 %s43, 1
          %s579 = scalar_lea.sflag [#allocation7], %s578
          %s580 = sand.u32 %s173, 1
          %s581 = smul.addr %s580, 3
          %s582 = scalar_lea.vmem [#allocation8], %s581
          %s584 = ssub.s32 48, 48
          %585 = vsyncadd %s579, %s584
          %s586 = smul.addr %s43, 3
          %s587 = smul.addr %s586, 16
          %s588 = scalar_lea.hbm %s5, %s587
          %s590 = sshll.u32 %s582, 4
          %s591 = int_to_ptr.vmem [resolvable:$true] %s590
          %593 = dma.hbm_to_vmem [thread:$0]  %s588, 48, %s591, %s579
        $region52: #{gpt_forward.1} parent=35 // pred_fallthru
          _
        // Predicated region
        $region53: #{gpt_forward.1} parent=35 // pred_check
          %p594 = pneg %p209
        $region54: #{gpt_forward.1} parent=35 // pred_check_branch
          %596 = sbr.rel (%p594) target = $region56
        $region55: #{gpt_forward.1} parent=35 // pred_region
          %p597 = scmp.lt.s32.totalorder %s43, 1
          %s598 = scalar_select %p597, %s43, 1
          %s599 = smul.addr %s598, 16
          %s600 = smul.addr %s599, 4
          %s601 = scalar_lea.vmem %s6, %s600
        $region56: #{gpt_forward.1} parent=35 // pred_fallthru
          _
        // Predicated region
        $region57: #{gpt_forward.1} parent=35 // pred_check
          %p602 = pneg %p235
        $region58: #{gpt_forward.1} parent=35 // pred_check_branch
          %604 = sbr.rel (%p602) target = $region60
        $region59: #{gpt_forward.1} parent=35 // pred_region
          %s605 = sand.u32 %s43, 1
          %s606 = scalar_lea.sflag [#allocation10], %s605
          %s607 = sand.u32 %s225, 1
          %s608 = scalar_lea.vmem [#allocation9], %s607
          %s610 = ssub.s32 16, 16
          %611 = vsyncadd %s606, %s610
          %s612 = smul.addr %s43, 16
          %s613 = scalar_lea.hbm %s7, %s612
          %s615 = sshll.u32 %s608, 4
          %s616 = int_to_ptr.vmem [resolvable:$true] %s615
          %618 = dma.hbm_to_vmem [thread:$0]  %s613, 16, %s616, %s606
        $region60: #{gpt_forward.1} parent=35 // pred_fallthru
          _
        // Predicated region
        $region61: #{gpt_forward.1} parent=35 // pred_check
          %p619 = pneg %p261
        $region62: #{gpt_forward.1} parent=35 // pred_check_branch
          %621 = sbr.rel (%p619) target = $region64
        $region63: #{gpt_forward.1} parent=35 // pred_region
          %s622 = sand.u32 %s43, 1
          %s623 = scalar_lea.sflag [#allocation10], %s622
          %s624 = sand.u32 %s251, 1
          %s625 = scalar_lea.vmem [#allocation11], %s624
          %s627 = ssub.s32 16, 16
          %628 = vsyncadd %s623, %s627
          %s629 = smul.addr %s43, 16
          %s630 = scalar_lea.hbm %s8, %s629
          %s632 = sshll.u32 %s625, 4
          %s633 = int_to_ptr.vmem [resolvable:$true] %s632
          %635 = dma.hbm_to_vmem [thread:$0]  %s630, 16, %s633, %s623
        $region64: #{gpt_forward.1} parent=35 // pred_fallthru
          _
        // Predicated region
        $region65: #{gpt_forward.1} parent=35 // pred_check
          %p636 = pneg %p287
        $region66: #{gpt_forward.1} parent=35 // pred_check_branch
          %638 = sbr.rel (%p636) target = $region68
        $region67: #{gpt_forward.1} parent=35 // pred_region
          %s639 = sand.u32 %s43, 1
          %s640 = scalar_lea.sflag [#allocation13], %s639
          %s641 = sand.u32 %s277, 1
          %s642 = scalar_lea.vmem [#allocation12], %s641
          %s644 = ssub.s32 16, 16
          %645 = vsyncadd %s640, %s644
          %s646 = smul.addr %s43, 16
          %s647 = scalar_lea.hbm %s9, %s646
          %s649 = sshll.u32 %s642, 4
          %s650 = int_to_ptr.vmem [resolvable:$true] %s649
          %652 = dma.hbm_to_vmem [thread:$0]  %s647, 16, %s650, %s640
        $region68: #{gpt_forward.1} parent=35 // pred_fallthru
          _
        // Predicated region
        $region69: #{gpt_forward.1} parent=35 // pred_check
          %p653 = pneg %p313
        $region70: #{gpt_forward.1} parent=35 // pred_check_branch
          %655 = sbr.rel (%p653) target = $region72
        $region71: #{gpt_forward.1} parent=35 // pred_region
          %s656 = sand.u32 %s43, 1
          %s657 = scalar_lea.sflag [#allocation13], %s656
          %s658 = sand.u32 %s303, 1
          %s659 = smul.addr %s658, 256
          %s660 = scalar_lea.vmem [#allocation14], %s659
          %s662 = ssub.s32 4096, 4096
          %663 = vsyncadd %s657, %s662
          %s664 = smul.addr %s43, 64
          %s665 = smul.addr %s664, 64
          %s666 = scalar_lea.hbm %s10, %s665
          %s667 = sshll.u32 %s660, 4
          %s668 = int_to_ptr.vmem [resolvable:$true] %s667
          %673 = dma.hbm_to_vmem [thread:$0]  %s666, 4096, %s668, %s657, 256, 256, 16
        $region72: #{gpt_forward.1} parent=35 // pred_fallthru
          _
        // Predicated region
        $region73: #{gpt_forward.1} parent=35 // pred_check
          %p674 = pneg %p339
        $region74: #{gpt_forward.1} parent=35 // pred_check_branch
          %676 = sbr.rel (%p674) target = $region76
        $region75: #{gpt_forward.1} parent=35 // pred_region
          %s677 = sand.u32 %s43, 1
          %s678 = scalar_lea.sflag [#allocation16], %s677
          %s679 = sand.u32 %s329, 1
          %s680 = smul.addr %s679, 4
          %s681 = scalar_lea.vmem [#allocation15], %s680
          %s683 = ssub.s32 64, 64
          %684 = vsyncadd %s678, %s683
          %s685 = smul.addr %s43, 4
          %s686 = smul.addr %s685, 16
          %s687 = scalar_lea.hbm %s11, %s686
          %s689 = sshll.u32 %s681, 4
          %s690 = int_to_ptr.vmem [resolvable:$true] %s689
          %692 = dma.hbm_to_vmem [thread:$0]  %s687, 64, %s690, %s678
        $region76: #{gpt_forward.1} parent=35 // pred_fallthru
          _
        // Predicated region
        $region77: #{gpt_forward.1} parent=35 // pred_check
          %p693 = pneg %p365
        $region78: #{gpt_forward.1} parent=35 // pred_check_branch
          %695 = sbr.rel (%p693) target = $region80
        $region79: #{gpt_forward.1} parent=35 // pred_region
          %s696 = sand.u32 %s43, 1
          %s697 = scalar_lea.sflag [#allocation16], %s696
          %s698 = sand.u32 %s355, 1
          %s699 = smul.addr %s698, 256
          %s700 = scalar_lea.vmem [#allocation17], %s699
          %s702 = ssub.s32 4096, 4096
          %703 = vsyncadd %s697, %s702
          %s704 = smul.addr %s43, 64
          %s705 = smul.addr %s704, 64
          %s706 = scalar_lea.hbm %s12, %s705
          %s707 = sshll.u32 %s700, 4
          %s708 = int_to_ptr.vmem [resolvable:$true] %s707
          %713 = dma.hbm_to_vmem [thread:$0]  %s706, 4096, %s708, %s697, 64, 64, 4
        $region80: #{gpt_forward.1} parent=35 // pred_fallthru
          _
        // Predicated region
        $region81: #{gpt_forward.1} parent=35 // pred_check
          %p714 = pneg %p391
        $region82: #{gpt_forward.1} parent=35 // pred_check_branch
          %716 = sbr.rel (%p714) target = $region84
        $region83: #{gpt_forward.1} parent=35 // pred_region
          %s717 = sand.u32 %s43, 1
          %s718 = scalar_lea.sflag [#allocation19], %s717
          %s719 = sand.u32 %s381, 1
          %s720 = scalar_lea.vmem [#allocation18], %s719
          %s722 = ssub.s32 16, 16
          %723 = vsyncadd %s718, %s722
          %s724 = smul.addr %s43, 16
          %s725 = scalar_lea.hbm %s13, %s724
          %s727 = sshll.u32 %s720, 4
          %s728 = int_to_ptr.vmem [resolvable:$true] %s727
          %730 = dma.hbm_to_vmem [thread:$0]  %s725, 16, %s728, %s718
        $region84: #{gpt_forward.1} parent=35 // pred_fallthru
          _
      $region36: #{gpt_forward.1} parent=5 // pred_fallthru
        _
      %p731 = scmp.le.s32.totalorder 1, %s43
      %p732 = scmp.lt.s32.totalorder %s43, 3
      %p733 = pnand %p731, %p732
      %p734 = pneg %p733
      // Predicated region
      $region85: #{gpt_forward.1} parent=5 // pred_check
        _
      $region86: #{gpt_forward.1} parent=5 // pred_check_branch
        %736 = sbr.rel (%p733) target = $region88
      $region87: #{gpt_forward.1} parent=5 // pred_region
        %s737 = ssub.s32 %s43, 1
        %s738 = sand.u32 %s124, 1
        %s739 = scalar_lea.sflag [#allocation4], %s738
        %s740 = sand.u32 %s124, 1
        %s741 = scalar_lea.vmem [#allocation3], %s740
        // Predicated region
        $region89: #{gpt_forward.1} parent=87 // pred_check
          %p742 = pneg %p137
        $region90: #{gpt_forward.1} parent=87 // pred_check_branch
          %744 = sbr.rel (%p742) target = $region92
        $region91: #{gpt_forward.1} parent=87 // pred_region
          %745 = dma.done %s739, 16
        $region92: #{gpt_forward.1} parent=87 // pred_fallthru
          _
        %s746 = sand.u32 %s48, 1
        %s747 = scalar_lea.sflag [#allocation7], %s746
        %s748 = sand.u32 %s150, 1
        %s749 = smul.addr %s748, 192
        %s750 = scalar_lea.vmem [#allocation6], %s749
        // Predicated region
        $region93: #{gpt_forward.1} parent=87 // pred_check
          %p751 = pneg %p163
        $region94: #{gpt_forward.1} parent=87 // pred_check_branch
          %753 = sbr.rel (%p751) target = $region96
        $region95: #{gpt_forward.1} parent=87 // pred_region
          %754 = dma.done %s747, 3072
        $region96: #{gpt_forward.1} parent=87 // pred_fallthru
          _
        %s755 = sand.u32 %s48, 1
        %s756 = scalar_lea.sflag [#allocation7], %s755
        %s757 = sand.u32 %s176, 1
        %s758 = smul.addr %s757, 3
        %s759 = scalar_lea.vmem [#allocation8], %s758
        // Predicated region
        $region97: #{gpt_forward.1} parent=87 // pred_check
          %p760 = pneg %p189
        $region98: #{gpt_forward.1} parent=87 // pred_check_branch
          %762 = sbr.rel (%p760) target = $region100
        $region99: #{gpt_forward.1} parent=87 // pred_region
          %763 = dma.done %s756, 48
        $region100: #{gpt_forward.1} parent=87 // pred_fallthru
          _
        %s764 = sand.u32 %s48, 1
        %s765 = scalar_lea.sflag [#allocation10], %s764
        %s766 = sand.u32 %s228, 1
        %s767 = scalar_lea.vmem [#allocation9], %s766
        // Predicated region
        $region101: #{gpt_forward.1} parent=87 // pred_check
          %p768 = pneg %p241
        $region102: #{gpt_forward.1} parent=87 // pred_check_branch
          %770 = sbr.rel (%p768) target = $region104
        $region103: #{gpt_forward.1} parent=87 // pred_region
          %771 = dma.done %s765, 16
        $region104: #{gpt_forward.1} parent=87 // pred_fallthru
          _
        %s772 = sand.u32 %s48, 1
        %s773 = scalar_lea.sflag [#allocation10], %s772
        %s774 = sand.u32 %s254, 1
        %s775 = scalar_lea.vmem [#allocation11], %s774
        // Predicated region
        $region105: #{gpt_forward.1} parent=87 // pred_check
          %p776 = pneg %p267
        $region106: #{gpt_forward.1} parent=87 // pred_check_branch
          %778 = sbr.rel (%p776) target = $region108
        $region107: #{gpt_forward.1} parent=87 // pred_region
          %779 = dma.done %s773, 16
        $region108: #{gpt_forward.1} parent=87 // pred_fallthru
          _
        %s780 = sand.u32 %s48, 1
        %s781 = scalar_lea.sflag [#allocation13], %s780
        %s782 = sand.u32 %s280, 1
        %s783 = scalar_lea.vmem [#allocation12], %s782
        // Predicated region
        $region109: #{gpt_forward.1} parent=87 // pred_check
          %p784 = pneg %p293
        $region110: #{gpt_forward.1} parent=87 // pred_check_branch
          %786 = sbr.rel (%p784) target = $region112
        $region111: #{gpt_forward.1} parent=87 // pred_region
          %787 = dma.done %s781, 16
        $region112: #{gpt_forward.1} parent=87 // pred_fallthru
          _
        %s788 = sand.u32 %s48, 1
        %s789 = scalar_lea.sflag [#allocation13], %s788
        %s790 = sand.u32 %s306, 1
        %s791 = smul.addr %s790, 256
        %s792 = scalar_lea.vmem [#allocation14], %s791
        // Predicated region
        $region113: #{gpt_forward.1} parent=87 // pred_check
          %p793 = pneg %p319
        $region114: #{gpt_forward.1} parent=87 // pred_check_branch
          %795 = sbr.rel (%p793) target = $region116
        $region115: #{gpt_forward.1} parent=87 // pred_region
          %796 = dma.done %s789, 4096
        $region116: #{gpt_forward.1} parent=87 // pred_fallthru
          _
        %s797 = sand.u32 %s48, 1
        %s798 = scalar_lea.sflag [#allocation16], %s797
        %s799 = sand.u32 %s332, 1
        %s800 = smul.addr %s799, 4
        %s801 = scalar_lea.vmem [#allocation15], %s800
        // Predicated region
        $region117: #{gpt_forward.1} parent=87 // pred_check
          %p802 = pneg %p345
        $region118: #{gpt_forward.1} parent=87 // pred_check_branch
          %804 = sbr.rel (%p802) target = $region120
        $region119: #{gpt_forward.1} parent=87 // pred_region
          %805 = dma.done %s798, 64
        $region120: #{gpt_forward.1} parent=87 // pred_fallthru
          _
        %s806 = sand.u32 %s48, 1
        %s807 = scalar_lea.sflag [#allocation16], %s806
        %s808 = sand.u32 %s358, 1
        %s809 = smul.addr %s808, 256
        %s810 = scalar_lea.vmem [#allocation17], %s809
        // Predicated region
        $region121: #{gpt_forward.1} parent=87 // pred_check
          %p811 = pneg %p371
        $region122: #{gpt_forward.1} parent=87 // pred_check_branch
          %813 = sbr.rel (%p811) target = $region124
        $region123: #{gpt_forward.1} parent=87 // pred_region
          %814 = dma.done %s807, 4096
        $region124: #{gpt_forward.1} parent=87 // pred_fallthru
          _
        %s815 = sand.u32 %s48, 1
        %s816 = scalar_lea.sflag [#allocation19], %s815
        %s817 = sand.u32 %s384, 1
        %s818 = scalar_lea.vmem [#allocation18], %s817
        // Predicated region
        $region125: #{gpt_forward.1} parent=87 // pred_check
          %p819 = pneg %p397
        $region126: #{gpt_forward.1} parent=87 // pred_check_branch
          %821 = sbr.rel (%p819) target = $region128
        $region127: #{gpt_forward.1} parent=87 // pred_region
          %822 = dma.done %s816, 16
        $region128: #{gpt_forward.1} parent=87 // pred_fallthru
          _
        // Predicated region
        $region129: #{gpt_forward.1} parent=87 // pred_check
          %p823 = pneg %p418
        $region130: #{gpt_forward.1} parent=87 // pred_check_branch
          %825 = sbr.rel (%p823) target = $region132
        $region131: #{gpt_forward.1} parent=87 // pred_region
          %826 = dma.done [#allocation19], 16
        $region132: #{gpt_forward.1} parent=87 // pred_fallthru
          _
        // Predicated region
        $region133: #{gpt_forward.1} parent=87 // pred_check
          %p827 = pneg %p439
        $region134: #{gpt_forward.1} parent=87 // pred_check_branch
          %829 = sbr.rel (%p827) target = $region136
        $region135: #{gpt_forward.1} parent=87 // pred_region
          %830 = dma.done [#allocation22], 16
        $region136: #{gpt_forward.1} parent=87 // pred_fallthru
          _
        %p831 = pneg %p64
        %p832 = pneg %p61
        %p833 = pneg %p85
        %p834 = pneg %p82
        %p835 = scmp.lt.s32.totalorder %s48, 1
        %s836 = scalar_select %p835, %s48, 1
        %s837 = scalar_lea.vmem %s2, %s836
        %p838 = pneg %p111
        %p839 = pneg %p108
        %s840 = sand.u32 %s124, 1
        %s841 = scalar_lea.sflag [#allocation4], %s840
        %s842 = sand.u32 %s124, 1
        %s843 = scalar_lea.vmem [#allocation3], %s842
        %p844 = pneg %p137
        %p845 = pneg %p134
        %s846 = sand.u32 %s48, 1
        %s847 = scalar_lea.sflag [#allocation7], %s846
        %s848 = sand.u32 %s150, 1
        %s849 = smul.addr %s848, 192
        %s850 = scalar_lea.vmem [#allocation6], %s849
        %p851 = pneg %p163
        %p852 = pneg %p160
        %s853 = sand.u32 %s48, 1
        %s854 = scalar_lea.sflag [#allocation7], %s853
        %s855 = sand.u32 %s176, 1
        %s856 = smul.addr %s855, 3
        %s857 = scalar_lea.vmem [#allocation8], %s856
        %p858 = pneg %p189
        %p859 = pneg %p186
        %p860 = scmp.lt.s32.totalorder %s48, 1
        %s861 = scalar_select %p860, %s48, 1
        %s862 = smul.addr %s861, 16
        %s863 = smul.addr %s862, 4
        %s864 = scalar_lea.vmem %s6, %s863
        %p865 = pneg %p215
        %p866 = pneg %p212
        %s867 = sand.u32 %s48, 1
        %s868 = scalar_lea.sflag [#allocation10], %s867
        %s869 = sand.u32 %s228, 1
        %s870 = scalar_lea.vmem [#allocation9], %s869
        %p871 = pneg %p241
        %p872 = pneg %p238
        %s873 = sand.u32 %s48, 1
        %s874 = scalar_lea.sflag [#allocation10], %s873
        %s875 = sand.u32 %s254, 1
        %s876 = scalar_lea.vmem [#allocation11], %s875
        %p877 = pneg %p267
        %p878 = pneg %p264
        %s879 = sand.u32 %s48, 1
        %s880 = scalar_lea.sflag [#allocation13], %s879
        %s881 = sand.u32 %s280, 1
        %s882 = scalar_lea.vmem [#allocation12], %s881
        %p883 = pneg %p293
        %p884 = pneg %p290
        %s885 = sand.u32 %s48, 1
        %s886 = scalar_lea.sflag [#allocation13], %s885
        %s887 = sand.u32 %s306, 1
        %s888 = smul.addr %s887, 256
        %s889 = scalar_lea.vmem [#allocation14], %s888
        %p890 = pneg %p319
        %p891 = pneg %p316
        %s892 = sand.u32 %s48, 1
        %s893 = scalar_lea.sflag [#allocation16], %s892
        %s894 = sand.u32 %s332, 1
        %s895 = smul.addr %s894, 4
        %s896 = scalar_lea.vmem [#allocation15], %s895
        %p897 = pneg %p345
        %p898 = pneg %p342
        %s899 = sand.u32 %s48, 1
        %s900 = scalar_lea.sflag [#allocation16], %s899
        %s901 = sand.u32 %s358, 1
        %s902 = smul.addr %s901, 256
        %s903 = scalar_lea.vmem [#allocation17], %s902
        %p904 = pneg %p371
        %p905 = pneg %p368
        %s906 = sand.u32 %s48, 1
        %s907 = scalar_lea.sflag [#allocation19], %s906
        %s908 = sand.u32 %s384, 1
        %s909 = scalar_lea.vmem [#allocation18], %s908
        %p910 = pneg %p397
        %p911 = pneg %p394
        %p912 = pneg %p418
        %p913 = pneg %p415
        %p914 = pneg %p439
        %p915 = pneg %p436
        %p916 = pneg %p460
        %p917 = pneg %p457
        %p918 = pneg %p481
        %p919 = pneg %p478
        %p920 = scmp.lt.s32.totalorder %s48, 1
        %s921 = scalar_select %p920, %s48, 1
        %s922 = scalar_lea.vmem %s2, %s921
        %p923 = scmp.lt.s32.totalorder %s48, 1
        %s924 = scalar_select %p923, %s48, 1
        %s925 = smul.addr %s924, 16
        %s926 = smul.addr %s925, 4
        %s927 = scalar_lea.vmem %s6, %s926
        %p929 = scmp.eq.s32.totalorder %s48, 0
        // Predicated region
        $region137: #{gpt_forward.1} parent=87 // pred_check
          %p930 = pneg %p929
        $region138: #{gpt_forward.1} parent=87 // pred_check_branch
          %932 = sbr.rel (%p930) target = $region140
        $region139: #{gpt_forward.1} parent=87 // pred_region
          %v933 = vld [vmem:[%s0] sm:$0xff]
          %v934 = vld [vmem:[%s0 + $0x8] sm:$0xff]
          %935 = vst [vmem:[#allocation2] sm:$0xff] %v933
          %936 = vst [vmem:[#allocation2 + $0x8] sm:$0xff] %v934
        $region140: #{gpt_forward.1} parent=87 // pred_fallthru
          _
        %v937 = vld [vmem:[#allocation2] sm:$0xff]
        %v938 = vld [vmem:[#allocation2 + $0x8] sm:$0xff]
        %v939 = vld [vmem:[%s1] sm:$0xff]
        %v940 = vld [vmem:[%s1 + $0x8] sm:$0xff]
        %v941 = vld [vmem:[%s922] sm:$0x1]
        %v942 = vld [vmem:[%s741] sm:$0x1]
        %943 = vadd.xlane.f32.xlu0 %v937
        %v944 = vpop.xlane.xlu0 %943
        %945 = vadd.xlane.f32.xlu0 %v938
        %v946 = vpop.xlane.xlu0 %945
        %v947 = vrcp.pop 128.0
        %v948 = vmul.f32 %v944, %v947
        %v949 = vmul.f32 %v946, %v947
        %v950 = vsub.f32 %v937, %v948
        %v951 = vsub.f32 %v938, %v949
        %v952 = vmul.f32 %v950, %v950
        %v953 = vmul.f32 %v951, %v951
        %954 = vadd.xlane.f32.xlu0 %v952
        %v955 = vpop.xlane.xlu0 %954
        %956 = vadd.xlane.f32.xlu0 %v953
        %v957 = vpop.xlane.xlu0 %956
        %v958 = vmul.f32 %v955, %v947
        %v959 = vmul.f32 %v957, %v947
        %v960 = vadd.f32 %v958, 1e-05
        %v961 = vadd.f32 %v959, 1e-05
        %v962 = vrsqrt.pop %v960
        %v963 = vrsqrt.pop %v961
        %v964 = vmul.f32 %v950, %v962
        %v965 = vmul.f32 %v951, %v963
        %v967 = vlaneseq
        %v968 = vshrl.u32 %v967, 7
        %v969 = vsub.s32 0, %v968
        %v970 = vrot.slane %v941, %v969
        %v972 = vmul.f32 %v964, %v970
        %v973 = vmul.f32 %v965, %v970
        %v975 = vlaneseq
        %v976 = vshrl.u32 %v975, 7
        %v977 = vsub.s32 0, %v976
        %v978 = vrot.slane %v942, %v977
        %v980 = vadd.f32 %v972, %v978
        %v981 = vadd.f32 %v973, %v978
        %v982 = vpack.c.bf16 %v981, %v980
        %v983 = vld [vmem:[%s750] sm:$0xff]
        %v984 = vld [vmem:[%s750 + $0x8] sm:$0xf]
        %v985 = vld [vmem:[%s750 + $0xc] sm:$0xff]
        %v986 = vld [vmem:[%s750 + $0x14] sm:$0xf]
        %v987 = vld [vmem:[%s750 + $0x18] sm:$0xff]
        %v988 = vld [vmem:[%s750 + $0x20] sm:$0xf]
        %v989 = vld [vmem:[%s750 + $0x24] sm:$0xff]
        %v990 = vld [vmem:[%s750 + $0x2c] sm:$0xf]
        %v991 = vld [vmem:[%s750 + $0x30] sm:$0xff]
        %v992 = vld [vmem:[%s750 + $0x38] sm:$0xf]
        %v993 = vld [vmem:[%s750 + $0x3c] sm:$0xff]
        %v994 = vld [vmem:[%s750 + $0x44] sm:$0xf]
        %v995 = vld [vmem:[%s750 + $0x48] sm:$0xff]
        %v996 = vld [vmem:[%s750 + $0x50] sm:$0xf]
        %v997 = vld [vmem:[%s750 + $0x54] sm:$0xff]
        %v998 = vld [vmem:[%s750 + $0x5c] sm:$0xf]
        %v999 = vld [vmem:[%s750 + $0x60] sm:$0xff]
        %v1000 = vld [vmem:[%s750 + $0x68] sm:$0xf]
        %v1001 = vld [vmem:[%s750 + $0x6c] sm:$0xff]
        %v1002 = vld [vmem:[%s750 + $0x74] sm:$0xf]
        %v1003 = vld [vmem:[%s750 + $0x78] sm:$0xff]
        %v1004 = vld [vmem:[%s750 + $0x80] sm:$0xf]
        %v1005 = vld [vmem:[%s750 + $0x84] sm:$0xff]
        %v1006 = vld [vmem:[%s750 + $0x8c] sm:$0xf]
        %v1007 = vld [vmem:[%s750 + $0x90] sm:$0xff]
        %v1008 = vld [vmem:[%s750 + $0x98] sm:$0xf]
        %v1009 = vld [vmem:[%s750 + $0x9c] sm:$0xff]
        %v1010 = vld [vmem:[%s750 + $0xa4] sm:$0xf]
        %v1011 = vld [vmem:[%s750 + $0xa8] sm:$0xff]
        %v1012 = vld [vmem:[%s750 + $0xb0] sm:$0xf]
        %v1013 = vld [vmem:[%s750 + $0xb4] sm:$0xff]
        %v1014 = vld [vmem:[%s750 + $0xbc] sm:$0xf]
        %v1015 = vld [vmem:[%s759] sm:$0x7]
        %v1017 = vlaneseq
        %v1018 = vshrl.u32 %v1017, 7
        %v1019 = vsub.s32 0, %v1018
        %v1020 = vrot.slane %v1015, %v1019
        %v1021 = vlaneseq
        %v1022 = vshrl.u32 %v1021, 7
        %v1023 = vsub.s32 1, %v1022
        %v1024 = vrot.slane %v1015, %v1023
        %v1025 = vlaneseq
        %v1026 = vshrl.u32 %v1025, 7
        %v1027 = vsub.s32 2, %v1026
        %v1028 = vrot.slane %v1015, %v1027
        %v1064 = vunpack.c.l.b16 %v983
        %v1065 = vunpack.c.h.b16 %v983
        %v1066 = vunpack.c.l.b16 %v984
        %v1067 = vunpack.c.l.b16 %v985
        %v1068 = vunpack.c.h.b16 %v985
        %v1069 = vunpack.c.l.b16 %v986
        %v1070 = vunpack.c.l.b16 %v987
        %v1071 = vunpack.c.h.b16 %v987
        %v1072 = vunpack.c.l.b16 %v988
        %v1073 = vunpack.c.l.b16 %v989
        %v1074 = vunpack.c.h.b16 %v989
        %v1075 = vunpack.c.l.b16 %v990
        %v1076 = vunpack.c.l.b16 %v991
        %v1077 = vunpack.c.h.b16 %v991
        %v1078 = vunpack.c.l.b16 %v992
        %v1079 = vunpack.c.l.b16 %v993
        %v1080 = vunpack.c.h.b16 %v993
        %v1081 = vunpack.c.l.b16 %v994
        %v1082 = vunpack.c.l.b16 %v995
        %v1083 = vunpack.c.h.b16 %v995
        %v1084 = vunpack.c.l.b16 %v996
        %v1085 = vunpack.c.l.b16 %v997
        %v1086 = vunpack.c.h.b16 %v997
        %v1087 = vunpack.c.l.b16 %v998
        %v1088 = vunpack.c.l.b16 %v999
        %v1089 = vunpack.c.h.b16 %v999
        %v1090 = vunpack.c.l.b16 %v1000
        %v1091 = vunpack.c.l.b16 %v1001
        %v1092 = vunpack.c.h.b16 %v1001
        %v1093 = vunpack.c.l.b16 %v1002
        %v1094 = vunpack.c.l.b16 %v1003
        %v1095 = vunpack.c.h.b16 %v1003
        %v1096 = vunpack.c.l.b16 %v1004
        %v1097 = vunpack.c.l.b16 %v1005
        %v1098 = vunpack.c.h.b16 %v1005
        %v1099 = vunpack.c.l.b16 %v1006
        %v1100 = vunpack.c.l.b16 %v1007
        %v1101 = vunpack.c.h.b16 %v1007
        %v1102 = vunpack.c.l.b16 %v1008
        %v1103 = vunpack.c.l.b16 %v1009
        %v1104 = vunpack.c.h.b16 %v1009
        %v1105 = vunpack.c.l.b16 %v1010
        %v1106 = vunpack.c.l.b16 %v1011
        %v1107 = vunpack.c.h.b16 %v1011
        %v1108 = vunpack.c.l.b16 %v1012
        %v1109 = vunpack.c.l.b16 %v1013
        %v1110 = vunpack.c.h.b16 %v1013
        %v1111 = vunpack.c.l.b16 %v1014
        %v1112 = vpack.c.b16 %v1067, %v1064
        %v1113 = vpack.c.b16 %v1068, %v1065
        %v1114 = vpack.c.b16 %v1069, %v1066
        %v1115 = vpack.c.b16 %v1073, %v1070
        %v1116 = vpack.c.b16 %v1074, %v1071
        %v1117 = vpack.c.b16 %v1075, %v1072
        %v1118 = vpack.c.b16 %v1079, %v1076
        %v1119 = vpack.c.b16 %v1080, %v1077
        %v1120 = vpack.c.b16 %v1081, %v1078
        %v1121 = vpack.c.b16 %v1085, %v1082
        %v1122 = vpack.c.b16 %v1086, %v1083
        %v1123 = vpack.c.b16 %v1087, %v1084
        %v1124 = vpack.c.b16 %v1091, %v1088
        %v1125 = vpack.c.b16 %v1092, %v1089
        %v1126 = vpack.c.b16 %v1093, %v1090
        %v1127 = vpack.c.b16 %v1097, %v1094
        %v1128 = vpack.c.b16 %v1098, %v1095
        %v1129 = vpack.c.b16 %v1099, %v1096
        %v1130 = vpack.c.b16 %v1103, %v1100
        %v1131 = vpack.c.b16 %v1104, %v1101
        %v1132 = vpack.c.b16 %v1105, %v1102
        %v1133 = vpack.c.b16 %v1109, %v1106
        %v1134 = vpack.c.b16 %v1110, %v1107
        %v1135 = vpack.c.b16 %v1111, %v1108
        %1160 = vmatprep.subr.bf16.mxu0 %v1113
        %1161 = vmatpush1.bf16.msra.mxu0 %v1112
        %1162 = vmatprep.subr.bf16.mxu0 %v1116
        %1163 = vmatpush1.bf16.msra.mxu0 %v1115
        %1164 = vmatprep.subr.bf16.mxu0 %v1119
        %1165 = vmatpush1.bf16.msra.mxu0 %v1118
        %1166 = vmatprep.subr.bf16.mxu0 %v1122
        %1167 = vmatpush1.bf16.msra.mxu0 %v1121
        %1168 = vmatprep.subr.bf16.mxu0 %v1125
        %1169 = vmatpush1.bf16.msra.mxu0 %v1124
        %1170 = vmatprep.subr.bf16.mxu0 %v1128
        %1171 = vmatpush1.bf16.msra.mxu0 %v1127
        %1172 = vmatprep.subr.bf16.mxu0 %v1131
        %1173 = vmatpush1.bf16.msra.mxu0 %v1130
        %1174 = vmatprep.subr.bf16.mxu0 %v1134
        %1175 = vmatpush1.bf16.msra.mxu0 %v1133
        %1176 = vmatprep.subr.bf16.mxu0 0
        %1177 = vmatpush1.bf16.msra.mxu0 0
        %1178 = vmatprep.subr.bf16.mxu0 0
        %1179 = vmatpush1.bf16.msra.mxu0 0
        %1180 = vmatprep.subr.bf16.mxu0 0
        %1181 = vmatpush1.bf16.msra.mxu0 0
        %1182 = vmatprep.subr.bf16.mxu0 0
        %1183 = vmatpush1.bf16.msra.mxu0 0
        %1184 = vmatprep.subr.bf16.mxu0 0
        %1185 = vmatpush1.bf16.msra.mxu0 0
        %1186 = vmatprep.subr.bf16.mxu0 0
        %1187 = vmatpush1.bf16.msra.mxu0 0
        %1188 = vmatprep.subr.bf16.mxu0 0
        %1189 = vmatpush1.bf16.msra.mxu0 0
        %1190 = vmatprep.subr.bf16.mxu0 0
        %1191 = vmatpush1.bf16.msra.mxu0 0
        %1192 = vmatprep.mubr.bf16.mxu0 0
        %1193 = vmatmul.mubr.bf16.gmra.mrb[0].mxu0 %v982
        %v1194 = vpop.f32.mrb[0].mxu0
        %v1195 = vadd.f32 %v1020, %v1194
        %v1196 = vpop.f32.mrb[0].mxu0
        %v1197 = vadd.f32 %v1024, %v1196
        %v1198 = vpop.f32.mrb[0].mxu0
        %v1199 = vadd.f32 %v1020, %v1198
        %v1200 = vpop.f32.mrb[0].mxu0
        %v1201 = vadd.f32 %v1024, %v1200
        %1202 = vdwg.mxu0
        %1203 = vmatprep.subr.bf16.mxu0 0
        %1204 = vmatpush1.bf16.msra.mxu0 %v1114
        %1205 = vmatprep.subr.bf16.mxu0 0
        %1206 = vmatpush1.bf16.msra.mxu0 %v1117
        %1207 = vmatprep.subr.bf16.mxu0 0
        %1208 = vmatpush1.bf16.msra.mxu0 %v1120
        %1209 = vmatprep.subr.bf16.mxu0 0
        %1210 = vmatpush1.bf16.msra.mxu0 %v1123
        %1211 = vmatprep.subr.bf16.mxu0 0
        %1212 = vmatpush1.bf16.msra.mxu0 %v1126
        %1213 = vmatprep.subr.bf16.mxu0 0
        %1214 = vmatpush1.bf16.msra.mxu0 %v1129
        %1215 = vmatprep.subr.bf16.mxu0 0
        %1216 = vmatpush1.bf16.msra.mxu0 %v1132
        %1217 = vmatprep.subr.bf16.mxu0 0
        %1218 = vmatpush1.bf16.msra.mxu0 %v1135
        %1219 = vmatprep.subr.bf16.mxu0 0
        %1220 = vmatpush1.bf16.msra.mxu0 0
        %1221 = vmatprep.subr.bf16.mxu0 0
        %1222 = vmatpush1.bf16.msra.mxu0 0
        %1223 = vmatprep.subr.bf16.mxu0 0
        %1224 = vmatpush1.bf16.msra.mxu0 0
        %1225 = vmatprep.subr.bf16.mxu0 0
        %1226 = vmatpush1.bf16.msra.mxu0 0
        %1227 = vmatprep.subr.bf16.mxu0 0
        %1228 = vmatpush1.bf16.msra.mxu0 0
        %1229 = vmatprep.subr.bf16.mxu0 0
        %1230 = vmatpush1.bf16.msra.mxu0 0
        %1231 = vmatprep.subr.bf16.mxu0 0
        %1232 = vmatpush1.bf16.msra.mxu0 0
        %1233 = vmatprep.subr.bf16.mxu0 0
        %1234 = vmatpush1.bf16.msra.mxu0 0
        %1235 = vmatprep.mubr.bf16.mxu0 0
        %1236 = vmatmul.mubr.bf16.gmra.mrb[0].mxu0 %v982
        %v1237 = vpop.f32.mrb[0].mxu0
        %v1238 = vadd.f32 %v1028, %v1237
        %v1239 = vpop.f32.mrb[0].mxu0
        %v1240 = vpop.f32.mrb[0].mxu0
        %v1241 = vadd.f32 %v1028, %v1240
        %v1242 = vpop.f32.mrb[0].mxu0
        %1243 = vdwg.mxu0
        %v1244 = vpack.c.bf16 %v1199, %v1195
        %v1245 = vpack.c.bf16 %v1201, %v1197
        %v1246 = vpack.c.bf16 %v1241, %v1238
        %vm1247 = vcmask 261120
        %v1249 = vsel %vm1247, %v1244, 0
        %v1252 = vsel %vm1247, %v1245, 0
        %1254 = vmatprep.subr.bf16.mxu0 0
        %1255 = vmatpush1.bf16.xpose.msra.mxu0 %v1252
        %1256 = vmatprep.subr.bf16.mxu0 0
        %1257 = vmatpush1.bf16.xpose.msra.mxu0 0
        %1258 = vmatprep.subr.bf16.mxu0 0
        %1259 = vmatpush1.bf16.xpose.msra.mxu0 0
        %1260 = vmatprep.subr.bf16.mxu0 0
        %1261 = vmatpush1.bf16.xpose.msra.mxu0 0
        %1262 = vmatprep.subr.bf16.mxu0 0
        %1263 = vmatpush1.bf16.xpose.msra.mxu0 0
        %1264 = vmatprep.subr.bf16.mxu0 0
        %1265 = vmatpush1.bf16.xpose.msra.mxu0 0
        %1266 = vmatprep.subr.bf16.mxu0 0
        %1267 = vmatpush1.bf16.xpose.msra.mxu0 0
        %1268 = vmatprep.subr.bf16.mxu0 0
        %1269 = vmatpush1.bf16.xpose.msra.mxu0 0
        %1270 = vmatprep.subr.bf16.mxu0 0
        %1271 = vmatpush1.bf16.xpose.msra.mxu0 0
        %1272 = vmatprep.subr.bf16.mxu0 0
        %1273 = vmatpush1.bf16.xpose.msra.mxu0 0
        %1274 = vmatprep.subr.bf16.mxu0 0
        %1275 = vmatpush1.bf16.xpose.msra.mxu0 0
        %1276 = vmatprep.subr.bf16.mxu0 0
        %1277 = vmatpush1.bf16.xpose.msra.mxu0 0
        %1278 = vmatprep.subr.bf16.mxu0 0
        %1279 = vmatpush1.bf16.xpose.msra.mxu0 0
        %1280 = vmatprep.subr.bf16.mxu0 0
        %1281 = vmatpush1.bf16.xpose.msra.mxu0 0
        %1282 = vmatprep.subr.bf16.mxu0 0
        %1283 = vmatpush1.bf16.xpose.msra.mxu0 0
        %1284 = vmatprep.subr.bf16.mxu0 0
        %1285 = vmatpush1.bf16.xpose.msra.mxu0 0
        %1286 = vmatprep.mubr.bf16.mxu0 0
        %1287 = vmatmul.mubr.bf16.gmra.mrb[0].mxu0 %v1249
        %v1288 = vpop.f32.mrb[0].mxu0
        %v1289 = vadd.f32 0.0, %v1288
        %v1290 = vpop.f32.mrb[0].mxu0
        %v1291 = vpop.f32.mrb[0].mxu0
        %v1292 = vadd.f32 0.0, %v1291
        %v1293 = vpop.f32.mrb[0].mxu0
        %1294 = vdwg.mxu0
        %v1295 = vmul.f32 %v1289, 0.17677669
        %v1296 = vmul.f32 %v1292, 0.17677669
        %v1297 = vadd.f32 %v1295, %v939
        %v1298 = vadd.f32 %v1296, %v940
        %vm1299 = vcmask 130048
        %v1300 = vsel %vm1299, %v1297, -inf
        %1301 = vmax.xlane.f32.xlu0 %v1300
        %v1302 = vpop.xlane.xlu0 %1301
        %v1303 = vsel %vm1299, %v1298, -inf
        %1304 = vmax.xlane.f32.xlu0 %v1303
        %v1305 = vpop.xlane.xlu0 %1304
        %v1306 = vsub.f32 %v1297, %v1302
        %v1307 = vsub.f32 %v1298, %v1305
        %v1308 = vmul.f32 %v1306, 1.442695
        %v1309 = vpow.pop %v1308
        %v1310 = vmul.f32 %v1307, 1.442695
        %v1311 = vpow.pop %v1310
        %v1312 = vsel %vm1299, %v1309, 0.0
        %1313 = vadd.xlane.f32.xlu0 %v1312
        %v1314 = vpop.xlane.xlu0 %1313
        %v1315 = vsel %vm1299, %v1311, 0.0
        %1316 = vadd.xlane.f32.xlu0 %v1315
        %v1317 = vpop.xlane.xlu0 %1316
        %v1318 = vrcp.pop %v1314
        %v1319 = vrcp.pop %v1317
        %v1320 = vmul.f32 %v1309, %v1318
        %v1321 = vmul.f32 %v1311, %v1319
        %v1322 = vpack.c.bf16 %v1321, %v1320
        %v1324 = vsel %vm1299, %v1322, 0
        %1326 = vmatprep.subr.bf16.mxu0 0
        %1327 = vmatpush1.bf16.msra.mxu0 %v1246
        %1328 = vmatprep.subr.bf16.mxu0 0
        %1329 = vmatpush1.bf16.msra.mxu0 0
        %1330 = vmatprep.subr.bf16.mxu0 0
        %1331 = vmatpush1.bf16.msra.mxu0 0
        %1332 = vmatprep.subr.bf16.mxu0 0
        %1333 = vmatpush1.bf16.msra.mxu0 0
        %1334 = vmatprep.subr.bf16.mxu0 0
        %1335 = vmatpush1.bf16.msra.mxu0 0
        %1336 = vmatprep.subr.bf16.mxu0 0
        %1337 = vmatpush1.bf16.msra.mxu0 0
        %1338 = vmatprep.subr.bf16.mxu0 0
        %1339 = vmatpush1.bf16.msra.mxu0 0
        %1340 = vmatprep.subr.bf16.mxu0 0
        %1341 = vmatpush1.bf16.msra.mxu0 0
        %1342 = vmatprep.subr.bf16.mxu0 0
        %1343 = vmatpush1.bf16.msra.mxu0 0
        %1344 = vmatprep.subr.bf16.mxu0 0
        %1345 = vmatpush1.bf16.msra.mxu0 0
        %1346 = vmatprep.subr.bf16.mxu0 0
        %1347 = vmatpush1.bf16.msra.mxu0 0
        %1348 = vmatprep.subr.bf16.mxu0 0
        %1349 = vmatpush1.bf16.msra.mxu0 0
        %1350 = vmatprep.subr.bf16.mxu0 0
        %1351 = vmatpush1.bf16.msra.mxu0 0
        %1352 = vmatprep.subr.bf16.mxu0 0
        %1353 = vmatpush1.bf16.msra.mxu0 0
        %1354 = vmatprep.subr.bf16.mxu0 0
        %1355 = vmatpush1.bf16.msra.mxu0 0
        %1356 = vmatprep.subr.bf16.mxu0 0
        %1357 = vmatpush1.bf16.msra.mxu0 0
        %1358 = vmatprep.mubr.bf16.mxu0 0
        %1359 = vmatmul.mubr.bf16.gmra.mrb[0].mxu0 %v1324
        %v1360 = vpop.f32.mrb[0].mxu0
        %v1361 = vadd.f32 0.0, %v1360
        %v1362 = vpop.f32.mrb[0].mxu0
        %v1363 = vpop.f32.mrb[0].mxu0
        %v1364 = vadd.f32 0.0, %v1363
        %v1365 = vpop.f32.mrb[0].mxu0
        %1366 = vdwg.mxu0
        %1368 = vrot.lane.b32.xlu0 %v1244, 96
        %v1369 = vpop.permute.xlu0 %1368
        %1371 = vrot.lane.b32.xlu0 %v1245, 96
        %v1372 = vpop.permute.xlu0 %1371
        %v1374 = vsel %vm1247, %v1369, 0
        %v1377 = vsel %vm1247, %v1372, 0
        %1379 = vmatprep.subr.bf16.mxu0 0
        %1380 = vmatpush1.bf16.xpose.msra.mxu0 %v1377
        %1381 = vmatprep.subr.bf16.mxu0 0
        %1382 = vmatpush1.bf16.xpose.msra.mxu0 0
        %1383 = vmatprep.subr.bf16.mxu0 0
        %1384 = vmatpush1.bf16.xpose.msra.mxu0 0
        %1385 = vmatprep.subr.bf16.mxu0 0
        %1386 = vmatpush1.bf16.xpose.msra.mxu0 0
        %1387 = vmatprep.subr.bf16.mxu0 0
        %1388 = vmatpush1.bf16.xpose.msra.mxu0 0
        %1389 = vmatprep.subr.bf16.mxu0 0
        %1390 = vmatpush1.bf16.xpose.msra.mxu0 0
        %1391 = vmatprep.subr.bf16.mxu0 0
        %1392 = vmatpush1.bf16.xpose.msra.mxu0 0
        %1393 = vmatprep.subr.bf16.mxu0 0
        %1394 = vmatpush1.bf16.xpose.msra.mxu0 0
        %1395 = vmatprep.subr.bf16.mxu0 0
        %1396 = vmatpush1.bf16.xpose.msra.mxu0 0
        %1397 = vmatprep.subr.bf16.mxu0 0
        %1398 = vmatpush1.bf16.xpose.msra.mxu0 0
        %1399 = vmatprep.subr.bf16.mxu0 0
        %1400 = vmatpush1.bf16.xpose.msra.mxu0 0
        %1401 = vmatprep.subr.bf16.mxu0 0
        %1402 = vmatpush1.bf16.xpose.msra.mxu0 0
        %1403 = vmatprep.subr.bf16.mxu0 0
        %1404 = vmatpush1.bf16.xpose.msra.mxu0 0
        %1405 = vmatprep.subr.bf16.mxu0 0
        %1406 = vmatpush1.bf16.xpose.msra.mxu0 0
        %1407 = vmatprep.subr.bf16.mxu0 0
        %1408 = vmatpush1.bf16.xpose.msra.mxu0 0
        %1409 = vmatprep.subr.bf16.mxu0 0
        %1410 = vmatpush1.bf16.xpose.msra.mxu0 0
        %1411 = vmatprep.mubr.bf16.mxu0 0
        %1412 = vmatmul.mubr.bf16.gmra.mrb[0].mxu0 %v1374
        %v1413 = vpop.f32.mrb[0].mxu0
        %v1414 = vadd.f32 0.0, %v1413
        %v1415 = vpop.f32.mrb[0].mxu0
        %v1416 = vpop.f32.mrb[0].mxu0
        %v1417 = vadd.f32 0.0, %v1416
        %v1418 = vpop.f32.mrb[0].mxu0
        %1419 = vdwg.mxu0
        %v1420 = vmul.f32 %v1414, 0.17677669
        %v1421 = vmul.f32 %v1417, 0.17677669
        %v1422 = vadd.f32 %v1420, %v939
        %v1423 = vadd.f32 %v1421, %v940
        %v1424 = vsel %vm1299, %v1422, -inf
        %1425 = vmax.xlane.f32.xlu0 %v1424
        %v1426 = vpop.xlane.xlu0 %1425
        %v1427 = vsel %vm1299, %v1423, -inf
        %1428 = vmax.xlane.f32.xlu0 %v1427
        %v1429 = vpop.xlane.xlu0 %1428
        %v1430 = vsub.f32 %v1422, %v1426
        %v1431 = vsub.f32 %v1423, %v1429
        %v1432 = vmul.f32 %v1430, 1.442695
        %v1433 = vpow.pop %v1432
        %v1434 = vmul.f32 %v1431, 1.442695
        %v1435 = vpow.pop %v1434
        %v1436 = vsel %vm1299, %v1433, 0.0
        %1437 = vadd.xlane.f32.xlu0 %v1436
        %v1438 = vpop.xlane.xlu0 %1437
        %v1439 = vsel %vm1299, %v1435, 0.0
        %1440 = vadd.xlane.f32.xlu0 %v1439
        %v1441 = vpop.xlane.xlu0 %1440
        %v1442 = vrcp.pop %v1438
        %v1443 = vrcp.pop %v1441
        %v1444 = vmul.f32 %v1433, %v1442
        %v1445 = vmul.f32 %v1435, %v1443
        %v1446 = vpack.c.bf16 %v1445, %v1444
        %1448 = vrot.lane.b32.xlu0 %v1246, 96
        %v1449 = vpop.permute.xlu0 %1448
        %v1452 = vsel %vm1299, %v1446, 0
        %1454 = vmatprep.subr.bf16.mxu0 0
        %1455 = vmatpush1.bf16.msra.mxu0 %v1449
        %1456 = vmatprep.subr.bf16.mxu0 0
        %1457 = vmatpush1.bf16.msra.mxu0 0
        %1458 = vmatprep.subr.bf16.mxu0 0
        %1459 = vmatpush1.bf16.msra.mxu0 0
        %1460 = vmatprep.subr.bf16.mxu0 0
        %1461 = vmatpush1.bf16.msra.mxu0 0
        %1462 = vmatprep.subr.bf16.mxu0 0
        %1463 = vmatpush1.bf16.msra.mxu0 0
        %1464 = vmatprep.subr.bf16.mxu0 0
        %1465 = vmatpush1.bf16.msra.mxu0 0
        %1466 = vmatprep.subr.bf16.mxu0 0
        %1467 = vmatpush1.bf16.msra.mxu0 0
        %1468 = vmatprep.subr.bf16.mxu0 0
        %1469 = vmatpush1.bf16.msra.mxu0 0
        %1470 = vmatprep.subr.bf16.mxu0 0
        %1471 = vmatpush1.bf16.msra.mxu0 0
        %1472 = vmatprep.subr.bf16.mxu0 0
        %1473 = vmatpush1.bf16.msra.mxu0 0
        %1474 = vmatprep.subr.bf16.mxu0 0
        %1475 = vmatpush1.bf16.msra.mxu0 0
        %1476 = vmatprep.subr.bf16.mxu0 0
        %1477 = vmatpush1.bf16.msra.mxu0 0
        %1478 = vmatprep.subr.bf16.mxu0 0
        %1479 = vmatpush1.bf16.msra.mxu0 0
        %1480 = vmatprep.subr.bf16.mxu0 0
        %1481 = vmatpush1.bf16.msra.mxu0 0
        %1482 = vmatprep.subr.bf16.mxu0 0
        %1483 = vmatpush1.bf16.msra.mxu0 0
        %1484 = vmatprep.subr.bf16.mxu0 0
        %1485 = vmatpush1.bf16.msra.mxu0 0
        %1486 = vmatprep.mubr.bf16.mxu0 0
        %1487 = vmatmul.mubr.bf16.gmra.mrb[0].mxu0 %v1452
        %v1488 = vpop.f32.mrb[0].mxu0
        %v1489 = vadd.f32 0.0, %v1488
        %v1490 = vpop.f32.mrb[0].mxu0
        %v1491 = vpop.f32.mrb[0].mxu0
        %v1492 = vadd.f32 0.0, %v1491
        %v1493 = vpop.f32.mrb[0].mxu0
        %1494 = vdwg.mxu0
        %1495 = vrot.lane.b32.xlu0 %v1244, 64
        %v1496 = vpop.permute.xlu0 %1495
        %1497 = vrot.lane.b32.xlu0 %v1245, 64
        %v1498 = vpop.permute.xlu0 %1497
        %v1500 = vsel %vm1247, %v1496, 0
        %v1503 = vsel %vm1247, %v1498, 0
        %1505 = vmatprep.subr.bf16.mxu0 0
        %1506 = vmatpush1.bf16.xpose.msra.mxu0 %v1503
        %1507 = vmatprep.subr.bf16.mxu0 0
        %1508 = vmatpush1.bf16.xpose.msra.mxu0 0
        %1509 = vmatprep.subr.bf16.mxu0 0
        %1510 = vmatpush1.bf16.xpose.msra.mxu0 0
        %1511 = vmatprep.subr.bf16.mxu0 0
        %1512 = vmatpush1.bf16.xpose.msra.mxu0 0
        %1513 = vmatprep.subr.bf16.mxu0 0
        %1514 = vmatpush1.bf16.xpose.msra.mxu0 0
        %1515 = vmatprep.subr.bf16.mxu0 0
        %1516 = vmatpush1.bf16.xpose.msra.mxu0 0
        %1517 = vmatprep.subr.bf16.mxu0 0
        %1518 = vmatpush1.bf16.xpose.msra.mxu0 0
        %1519 = vmatprep.subr.bf16.mxu0 0
        %1520 = vmatpush1.bf16.xpose.msra.mxu0 0
        %1521 = vmatprep.subr.bf16.mxu0 0
        %1522 = vmatpush1.bf16.xpose.msra.mxu0 0
        %1523 = vmatprep.subr.bf16.mxu0 0
        %1524 = vmatpush1.bf16.xpose.msra.mxu0 0
        %1525 = vmatprep.subr.bf16.mxu0 0
        %1526 = vmatpush1.bf16.xpose.msra.mxu0 0
        %1527 = vmatprep.subr.bf16.mxu0 0
        %1528 = vmatpush1.bf16.xpose.msra.mxu0 0
        %1529 = vmatprep.subr.bf16.mxu0 0
        %1530 = vmatpush1.bf16.xpose.msra.mxu0 0
        %1531 = vmatprep.subr.bf16.mxu0 0
        %1532 = vmatpush1.bf16.xpose.msra.mxu0 0
        %1533 = vmatprep.subr.bf16.mxu0 0
        %1534 = vmatpush1.bf16.xpose.msra.mxu0 0
        %1535 = vmatprep.subr.bf16.mxu0 0
        %1536 = vmatpush1.bf16.xpose.msra.mxu0 0
        %1537 = vmatprep.mubr.bf16.mxu0 0
        %1538 = vmatmul.mubr.bf16.gmra.mrb[0].mxu0 %v1500
        %v1539 = vpop.f32.mrb[0].mxu0
        %v1540 = vadd.f32 0.0, %v1539
        %v1541 = vpop.f32.mrb[0].mxu0
        %v1542 = vpop.f32.mrb[0].mxu0
        %v1543 = vadd.f32 0.0, %v1542
        %v1544 = vpop.f32.mrb[0].mxu0
        %1545 = vdwg.mxu0
        %v1546 = vmul.f32 %v1540, 0.17677669
        %v1547 = vmul.f32 %v1543, 0.17677669
        %v1548 = vadd.f32 %v1546, %v939
        %v1549 = vadd.f32 %v1547, %v940
        %v1550 = vsel %vm1299, %v1548, -inf
        %1551 = vmax.xlane.f32.xlu0 %v1550
        %v1552 = vpop.xlane.xlu0 %1551
        %v1553 = vsel %vm1299, %v1549, -inf
        %1554 = vmax.xlane.f32.xlu0 %v1553
        %v1555 = vpop.xlane.xlu0 %1554
        %v1556 = vsub.f32 %v1548, %v1552
        %v1557 = vsub.f32 %v1549, %v1555
        %v1558 = vmul.f32 %v1556, 1.442695
        %v1559 = vpow.pop %v1558
        %v1560 = vmul.f32 %v1557, 1.442695
        %v1561 = vpow.pop %v1560
        %v1562 = vsel %vm1299, %v1559, 0.0
        %1563 = vadd.xlane.f32.xlu0 %v1562
        %v1564 = vpop.xlane.xlu0 %1563
        %v1565 = vsel %vm1299, %v1561, 0.0
        %1566 = vadd.xlane.f32.xlu0 %v1565
        %v1567 = vpop.xlane.xlu0 %1566
        %v1568 = vrcp.pop %v1564
        %v1569 = vrcp.pop %v1567
        %v1570 = vmul.f32 %v1559, %v1568
        %v1571 = vmul.f32 %v1561, %v1569
        %v1572 = vpack.c.bf16 %v1571, %v1570
        %1573 = vrot.lane.b32.xlu0 %v1246, 64
        %v1574 = vpop.permute.xlu0 %1573
        %v1577 = vsel %vm1299, %v1572, 0
        %1579 = vmatprep.subr.bf16.mxu0 0
        %1580 = vmatpush1.bf16.msra.mxu0 %v1574
        %1581 = vmatprep.subr.bf16.mxu0 0
        %1582 = vmatpush1.bf16.msra.mxu0 0
        %1583 = vmatprep.subr.bf16.mxu0 0
        %1584 = vmatpush1.bf16.msra.mxu0 0
        %1585 = vmatprep.subr.bf16.mxu0 0
        %1586 = vmatpush1.bf16.msra.mxu0 0
        %1587 = vmatprep.subr.bf16.mxu0 0
        %1588 = vmatpush1.bf16.msra.mxu0 0
        %1589 = vmatprep.subr.bf16.mxu0 0
        %1590 = vmatpush1.bf16.msra.mxu0 0
        %1591 = vmatprep.subr.bf16.mxu0 0
        %1592 = vmatpush1.bf16.msra.mxu0 0
        %1593 = vmatprep.subr.bf16.mxu0 0
        %1594 = vmatpush1.bf16.msra.mxu0 0
        %1595 = vmatprep.subr.bf16.mxu0 0
        %1596 = vmatpush1.bf16.msra.mxu0 0
        %1597 = vmatprep.subr.bf16.mxu0 0
        %1598 = vmatpush1.bf16.msra.mxu0 0
        %1599 = vmatprep.subr.bf16.mxu0 0
        %1600 = vmatpush1.bf16.msra.mxu0 0
        %1601 = vmatprep.subr.bf16.mxu0 0
        %1602 = vmatpush1.bf16.msra.mxu0 0
        %1603 = vmatprep.subr.bf16.mxu0 0
        %1604 = vmatpush1.bf16.msra.mxu0 0
        %1605 = vmatprep.subr.bf16.mxu0 0
        %1606 = vmatpush1.bf16.msra.mxu0 0
        %1607 = vmatprep.subr.bf16.mxu0 0
        %1608 = vmatpush1.bf16.msra.mxu0 0
        %1609 = vmatprep.subr.bf16.mxu0 0
        %1610 = vmatpush1.bf16.msra.mxu0 0
        %1611 = vmatprep.mubr.bf16.mxu0 0
        %1612 = vmatmul.mubr.bf16.gmra.mrb[0].mxu0 %v1577
        %v1613 = vpop.f32.mrb[0].mxu0
        %v1614 = vadd.f32 0.0, %v1613
        %v1615 = vpop.f32.mrb[0].mxu0
        %v1616 = vpop.f32.mrb[0].mxu0
        %v1617 = vadd.f32 0.0, %v1616
        %v1618 = vpop.f32.mrb[0].mxu0
        %1619 = vdwg.mxu0
        %1620 = vrot.lane.b32.xlu0 %v1244, 32
        %v1621 = vpop.permute.xlu0 %1620
        %1622 = vrot.lane.b32.xlu0 %v1245, 32
        %v1623 = vpop.permute.xlu0 %1622
        %v1625 = vsel %vm1247, %v1621, 0
        %v1628 = vsel %vm1247, %v1623, 0
        %1630 = vmatprep.subr.bf16.mxu0 0
        %1631 = vmatpush1.bf16.xpose.msra.mxu0 %v1628
        %1632 = vmatprep.subr.bf16.mxu0 0
        %1633 = vmatpush1.bf16.xpose.msra.mxu0 0
        %1634 = vmatprep.subr.bf16.mxu0 0
        %1635 = vmatpush1.bf16.xpose.msra.mxu0 0
        %1636 = vmatprep.subr.bf16.mxu0 0
        %1637 = vmatpush1.bf16.xpose.msra.mxu0 0
        %1638 = vmatprep.subr.bf16.mxu0 0
        %1639 = vmatpush1.bf16.xpose.msra.mxu0 0
        %1640 = vmatprep.subr.bf16.mxu0 0
        %1641 = vmatpush1.bf16.xpose.msra.mxu0 0
        %1642 = vmatprep.subr.bf16.mxu0 0
        %1643 = vmatpush1.bf16.xpose.msra.mxu0 0
        %1644 = vmatprep.subr.bf16.mxu0 0
        %1645 = vmatpush1.bf16.xpose.msra.mxu0 0
        %1646 = vmatprep.subr.bf16.mxu0 0
        %1647 = vmatpush1.bf16.xpose.msra.mxu0 0
        %1648 = vmatprep.subr.bf16.mxu0 0
        %1649 = vmatpush1.bf16.xpose.msra.mxu0 0
        %1650 = vmatprep.subr.bf16.mxu0 0
        %1651 = vmatpush1.bf16.xpose.msra.mxu0 0
        %1652 = vmatprep.subr.bf16.mxu0 0
        %1653 = vmatpush1.bf16.xpose.msra.mxu0 0
        %1654 = vmatprep.subr.bf16.mxu0 0
        %1655 = vmatpush1.bf16.xpose.msra.mxu0 0
        %1656 = vmatprep.subr.bf16.mxu0 0
        %1657 = vmatpush1.bf16.xpose.msra.mxu0 0
        %1658 = vmatprep.subr.bf16.mxu0 0
        %1659 = vmatpush1.bf16.xpose.msra.mxu0 0
        %1660 = vmatprep.subr.bf16.mxu0 0
        %1661 = vmatpush1.bf16.xpose.msra.mxu0 0
        %1662 = vmatprep.mubr.bf16.mxu0 0
        %1663 = vmatmul.mubr.bf16.gmra.mrb[0].mxu0 %v1625
        %v1664 = vpop.f32.mrb[0].mxu0
        %v1665 = vadd.f32 0.0, %v1664
        %v1666 = vpop.f32.mrb[0].mxu0
        %v1667 = vpop.f32.mrb[0].mxu0
        %v1668 = vadd.f32 0.0, %v1667
        %v1669 = vpop.f32.mrb[0].mxu0
        %1670 = vdwg.mxu0
        %v1671 = vmul.f32 %v1665, 0.17677669
        %v1672 = vmul.f32 %v1668, 0.17677669
        %v1673 = vadd.f32 %v1671, %v939
        %v1674 = vadd.f32 %v1672, %v940
        %v1675 = vsel %vm1299, %v1673, -inf
        %1676 = vmax.xlane.f32.xlu0 %v1675
        %v1677 = vpop.xlane.xlu0 %1676
        %v1678 = vsel %vm1299, %v1674, -inf
        %1679 = vmax.xlane.f32.xlu0 %v1678
        %v1680 = vpop.xlane.xlu0 %1679
        %v1681 = vsub.f32 %v1673, %v1677
        %v1682 = vsub.f32 %v1674, %v1680
        %v1683 = vmul.f32 %v1681, 1.442695
        %v1684 = vpow.pop %v1683
        %v1685 = vmul.f32 %v1682, 1.442695
        %v1686 = vpow.pop %v1685
        %v1687 = vsel %vm1299, %v1684, 0.0
        %1688 = vadd.xlane.f32.xlu0 %v1687
        %v1689 = vpop.xlane.xlu0 %1688
        %v1690 = vsel %vm1299, %v1686, 0.0
        %1691 = vadd.xlane.f32.xlu0 %v1690
        %v1692 = vpop.xlane.xlu0 %1691
        %v1693 = vrcp.pop %v1689
        %v1694 = vrcp.pop %v1692
        %v1695 = vmul.f32 %v1684, %v1693
        %v1696 = vmul.f32 %v1686, %v1694
        %v1697 = vpack.c.bf16 %v1696, %v1695
        %1698 = vrot.lane.b32.xlu0 %v1246, 32
        %v1699 = vpop.permute.xlu0 %1698
        %v1702 = vsel %vm1299, %v1697, 0
        %1704 = vmatprep.subr.bf16.mxu0 0
        %1705 = vmatpush1.bf16.msra.mxu0 %v1699
        %1706 = vmatprep.subr.bf16.mxu0 0
        %1707 = vmatpush1.bf16.msra.mxu0 0
        %1708 = vmatprep.subr.bf16.mxu0 0
        %1709 = vmatpush1.bf16.msra.mxu0 0
        %1710 = vmatprep.subr.bf16.mxu0 0
        %1711 = vmatpush1.bf16.msra.mxu0 0
        %1712 = vmatprep.subr.bf16.mxu0 0
        %1713 = vmatpush1.bf16.msra.mxu0 0
        %1714 = vmatprep.subr.bf16.mxu0 0
        %1715 = vmatpush1.bf16.msra.mxu0 0
        %1716 = vmatprep.subr.bf16.mxu0 0
        %1717 = vmatpush1.bf16.msra.mxu0 0
        %1718 = vmatprep.subr.bf16.mxu0 0
        %1719 = vmatpush1.bf16.msra.mxu0 0
        %1720 = vmatprep.subr.bf16.mxu0 0
        %1721 = vmatpush1.bf16.msra.mxu0 0
        %1722 = vmatprep.subr.bf16.mxu0 0
        %1723 = vmatpush1.bf16.msra.mxu0 0
        %1724 = vmatprep.subr.bf16.mxu0 0
        %1725 = vmatpush1.bf16.msra.mxu0 0
        %1726 = vmatprep.subr.bf16.mxu0 0
        %1727 = vmatpush1.bf16.msra.mxu0 0
        %1728 = vmatprep.subr.bf16.mxu0 0
        %1729 = vmatpush1.bf16.msra.mxu0 0
        %1730 = vmatprep.subr.bf16.mxu0 0
        %1731 = vmatpush1.bf16.msra.mxu0 0
        %1732 = vmatprep.subr.bf16.mxu0 0
        %1733 = vmatpush1.bf16.msra.mxu0 0
        %1734 = vmatprep.subr.bf16.mxu0 0
        %1735 = vmatpush1.bf16.msra.mxu0 0
        %1736 = vmatprep.mubr.bf16.mxu0 0
        %1737 = vmatmul.mubr.bf16.gmra.mrb[0].mxu0 %v1702
        %v1738 = vpop.f32.mrb[0].mxu0
        %v1739 = vadd.f32 0.0, %v1738
        %v1740 = vpop.f32.mrb[0].mxu0
        %v1741 = vpop.f32.mrb[0].mxu0
        %v1742 = vadd.f32 0.0, %v1741
        %v1743 = vpop.f32.mrb[0].mxu0
        %1744 = vdwg.mxu0
        %1747 = vrot.lane.b32.xlu0 %v1489, 32
        %v1748 = vpop.permute.xlu0 %1747
        %1749 = vrot.lane.b32.xlu0 %v1492, 32
        %v1750 = vpop.permute.xlu0 %1749
        %1755 = vrot.lane.b32.xlu0 %v1614, 64
        %v1756 = vpop.permute.xlu0 %1755
        %1757 = vrot.lane.b32.xlu0 %v1617, 64
        %v1758 = vpop.permute.xlu0 %1757
        %1763 = vrot.lane.b32.xlu0 %v1739, 96
        %v1764 = vpop.permute.xlu0 %1763
        %1765 = vrot.lane.b32.xlu0 %v1742, 96
        %v1766 = vpop.permute.xlu0 %1765
        %v1769 = vsel %vm1247, %v1361, %v1748
        %v1770 = vsel %vm1247, %v1364, %v1750
        %vm1771 = vcmask 523264
        %v1772 = vsel %vm1771, %v1769, %v1756
        %v1773 = vsel %vm1771, %v1770, %v1758
        %vm1774 = vcmask 785408
        %v1775 = vsel %vm1774, %v1772, %v1764
        %v1776 = vsel %vm1774, %v1773, %v1766
        %v1777 = vpack.c.bf16 %v1776, %v1775
        %v1778 = vld [vmem:[%s927] sm:$0xf]
        %v1779 = vld [vmem:[%s927 + $0x4] sm:$0xf]
        %v1780 = vld [vmem:[%s927 + $0x8] sm:$0xf]
        %v1781 = vld [vmem:[%s927 + $0xc] sm:$0xf]
        %v1782 = vld [vmem:[%s927 + $0x10] sm:$0xf]
        %v1783 = vld [vmem:[%s927 + $0x14] sm:$0xf]
        %v1784 = vld [vmem:[%s927 + $0x18] sm:$0xf]
        %v1785 = vld [vmem:[%s927 + $0x1c] sm:$0xf]
        %v1786 = vld [vmem:[%s927 + $0x20] sm:$0xf]
        %v1787 = vld [vmem:[%s927 + $0x24] sm:$0xf]
        %v1788 = vld [vmem:[%s927 + $0x28] sm:$0xf]
        %v1789 = vld [vmem:[%s927 + $0x2c] sm:$0xf]
        %v1790 = vld [vmem:[%s927 + $0x30] sm:$0xf]
        %v1791 = vld [vmem:[%s927 + $0x34] sm:$0xf]
        %v1792 = vld [vmem:[%s927 + $0x38] sm:$0xf]
        %v1793 = vld [vmem:[%s927 + $0x3c] sm:$0xf]
        %v1794 = vld [vmem:[%s767] sm:$0x1]
        %v1796 = vlaneseq
        %v1797 = vshrl.u32 %v1796, 7
        %v1798 = vsub.s32 0, %v1797
        %v1799 = vrot.slane %v1794, %v1798
        %v1817 = vunpack.c.l.b16 %v1778
        %v1818 = vunpack.c.l.b16 %v1779
        %v1819 = vunpack.c.l.b16 %v1780
        %v1820 = vunpack.c.l.b16 %v1781
        %v1821 = vunpack.c.l.b16 %v1782
        %v1822 = vunpack.c.l.b16 %v1783
        %v1823 = vunpack.c.l.b16 %v1784
        %v1824 = vunpack.c.l.b16 %v1785
        %v1825 = vunpack.c.l.b16 %v1786
        %v1826 = vunpack.c.l.b16 %v1787
        %v1827 = vunpack.c.l.b16 %v1788
        %v1828 = vunpack.c.l.b16 %v1789
        %v1829 = vunpack.c.l.b16 %v1790
        %v1830 = vunpack.c.l.b16 %v1791
        %v1831 = vunpack.c.l.b16 %v1792
        %v1832 = vunpack.c.l.b16 %v1793
        %v1833 = vpack.c.b16 %v1818, %v1817
        %v1834 = vpack.c.b16 %v1820, %v1819
        %v1835 = vpack.c.b16 %v1822, %v1821
        %v1836 = vpack.c.b16 %v1824, %v1823
        %v1837 = vpack.c.b16 %v1826, %v1825
        %v1838 = vpack.c.b16 %v1828, %v1827
        %v1839 = vpack.c.b16 %v1830, %v1829
        %v1840 = vpack.c.b16 %v1832, %v1831
        %1849 = vmatprep.subr.bf16.mxu0 0
        %1850 = vmatpush1.bf16.msra.mxu0 %v1833
        %1851 = vmatprep.subr.bf16.mxu0 0
        %1852 = vmatpush1.bf16.msra.mxu0 %v1834
        %1853 = vmatprep.subr.bf16.mxu0 0
        %1854 = vmatpush1.bf16.msra.mxu0 %v1835
        %1855 = vmatprep.subr.bf16.mxu0 0
        %1856 = vmatpush1.bf16.msra.mxu0 %v1836
        %1857 = vmatprep.subr.bf16.mxu0 0
        %1858 = vmatpush1.bf16.msra.mxu0 %v1837
        %1859 = vmatprep.subr.bf16.mxu0 0
        %1860 = vmatpush1.bf16.msra.mxu0 %v1838
        %1861 = vmatprep.subr.bf16.mxu0 0
        %1862 = vmatpush1.bf16.msra.mxu0 %v1839
        %1863 = vmatprep.subr.bf16.mxu0 0
        %1864 = vmatpush1.bf16.msra.mxu0 %v1840
        %1865 = vmatprep.subr.bf16.mxu0 0
        %1866 = vmatpush1.bf16.msra.mxu0 0
        %1867 = vmatprep.subr.bf16.mxu0 0
        %1868 = vmatpush1.bf16.msra.mxu0 0
        %1869 = vmatprep.subr.bf16.mxu0 0
        %1870 = vmatpush1.bf16.msra.mxu0 0
        %1871 = vmatprep.subr.bf16.mxu0 0
        %1872 = vmatpush1.bf16.msra.mxu0 0
        %1873 = vmatprep.subr.bf16.mxu0 0
        %1874 = vmatpush1.bf16.msra.mxu0 0
        %1875 = vmatprep.subr.bf16.mxu0 0
        %1876 = vmatpush1.bf16.msra.mxu0 0
        %1877 = vmatprep.subr.bf16.mxu0 0
        %1878 = vmatpush1.bf16.msra.mxu0 0
        %1879 = vmatprep.subr.bf16.mxu0 0
        %1880 = vmatpush1.bf16.msra.mxu0 0
        %1881 = vmatprep.mubr.bf16.mxu0 0
        %1882 = vmatmul.mubr.bf16.gmra.mrb[0].mxu0 %v1777
        %v1883 = vpop.f32.mrb[0].mxu0
        %v1884 = vadd.f32 %v1799, %v1883
        %v1885 = vpop.f32.mrb[0].mxu0
        %v1886 = vpop.f32.mrb[0].mxu0
        %v1887 = vadd.f32 %v1799, %v1886
        %v1888 = vpop.f32.mrb[0].mxu0
        %1889 = vdwg.mxu0
        %v1890 = vadd.f32 %v937, %v1884
        %v1891 = vadd.f32 %v938, %v1887
        %v1892 = vld [vmem:[%s775] sm:$0x1]
        %v1893 = vld [vmem:[%s783] sm:$0x1]
        %1894 = vadd.xlane.f32.xlu0 %v1890
        %v1895 = vpop.xlane.xlu0 %1894
        %1896 = vadd.xlane.f32.xlu0 %v1891
        %v1897 = vpop.xlane.xlu0 %1896
        %v1898 = vmul.f32 %v1895, %v947
        %v1899 = vmul.f32 %v1897, %v947
        %v1900 = vsub.f32 %v1890, %v1898
        %v1901 = vsub.f32 %v1891, %v1899
        %v1902 = vmul.f32 %v1900, %v1900
        %v1903 = vmul.f32 %v1901, %v1901
        %1904 = vadd.xlane.f32.xlu0 %v1902
        %v1905 = vpop.xlane.xlu0 %1904
        %1906 = vadd.xlane.f32.xlu0 %v1903
        %v1907 = vpop.xlane.xlu0 %1906
        %v1908 = vmul.f32 %v1905, %v947
        %v1909 = vmul.f32 %v1907, %v947
        %v1910 = vadd.f32 %v1908, 1e-05
        %v1911 = vadd.f32 %v1909, 1e-05
        %v1912 = vrsqrt.pop %v1910
        %v1913 = vrsqrt.pop %v1911
        %v1914 = vmul.f32 %v1900, %v1912
        %v1915 = vmul.f32 %v1901, %v1913
        %v1917 = vlaneseq
        %v1918 = vshrl.u32 %v1917, 7
        %v1919 = vsub.s32 0, %v1918
        %v1920 = vrot.slane %v1892, %v1919
        %v1922 = vmul.f32 %v1914, %v1920
        %v1923 = vmul.f32 %v1915, %v1920
        %v1925 = vlaneseq
        %v1926 = vshrl.u32 %v1925, 7
        %v1927 = vsub.s32 0, %v1926
        %v1928 = vrot.slane %v1893, %v1927
        %v1930 = vadd.f32 %v1922, %v1928
        %v1931 = vadd.f32 %v1923, %v1928
        %v1932 = vpack.c.bf16 %v1931, %v1930
        %v1933 = vld [vmem:[%s792] sm:$0xff]
        %v1934 = vld [vmem:[%s792 + $0x8] sm:$0xff]
        %v1935 = vld [vmem:[%s792 + $0x10] sm:$0xff]
        %v1936 = vld [vmem:[%s792 + $0x18] sm:$0xff]
        %v1937 = vld [vmem:[%s792 + $0x20] sm:$0xff]
        %v1938 = vld [vmem:[%s792 + $0x28] sm:$0xff]
        %v1939 = vld [vmem:[%s792 + $0x30] sm:$0xff]
        %v1940 = vld [vmem:[%s792 + $0x38] sm:$0xff]
        %v1941 = vld [vmem:[%s792 + $0x40] sm:$0xff]
        %v1942 = vld [vmem:[%s792 + $0x48] sm:$0xff]
        %v1943 = vld [vmem:[%s792 + $0x50] sm:$0xff]
        %v1944 = vld [vmem:[%s792 + $0x58] sm:$0xff]
        %v1945 = vld [vmem:[%s792 + $0x60] sm:$0xff]
        %v1946 = vld [vmem:[%s792 + $0x68] sm:$0xff]
        %v1947 = vld [vmem:[%s792 + $0x70] sm:$0xff]
        %v1948 = vld [vmem:[%s792 + $0x78] sm:$0xff]
        %v1949 = vld [vmem:[%s792 + $0x80] sm:$0xff]
        %v1950 = vld [vmem:[%s792 + $0x88] sm:$0xff]
        %v1951 = vld [vmem:[%s792 + $0x90] sm:$0xff]
        %v1952 = vld [vmem:[%s792 + $0x98] sm:$0xff]
        %v1953 = vld [vmem:[%s792 + $0xa0] sm:$0xff]
        %v1954 = vld [vmem:[%s792 + $0xa8] sm:$0xff]
        %v1955 = vld [vmem:[%s792 + $0xb0] sm:$0xff]
        %v1956 = vld [vmem:[%s792 + $0xb8] sm:$0xff]
        %v1957 = vld [vmem:[%s792 + $0xc0] sm:$0xff]
        %v1958 = vld [vmem:[%s792 + $0xc8] sm:$0xff]
        %v1959 = vld [vmem:[%s792 + $0xd0] sm:$0xff]
        %v1960 = vld [vmem:[%s792 + $0xd8] sm:$0xff]
        %v1961 = vld [vmem:[%s792 + $0xe0] sm:$0xff]
        %v1962 = vld [vmem:[%s792 + $0xe8] sm:$0xff]
        %v1963 = vld [vmem:[%s792 + $0xf0] sm:$0xff]
        %v1964 = vld [vmem:[%s792 + $0xf8] sm:$0xff]
        %v1965 = vld [vmem:[%s801] sm:$0xf]
        %v1967 = vlaneseq
        %v1968 = vshrl.u32 %v1967, 7
        %v1969 = vsub.s32 0, %v1968
        %v1970 = vrot.slane %v1965, %v1969
        %v1971 = vlaneseq
        %v1972 = vshrl.u32 %v1971, 7
        %v1973 = vsub.s32 1, %v1972
        %v1974 = vrot.slane %v1965, %v1973
        %v1975 = vlaneseq
        %v1976 = vshrl.u32 %v1975, 7
        %v1977 = vsub.s32 2, %v1976
        %v1978 = vrot.slane %v1965, %v1977
        %v1979 = vlaneseq
        %v1980 = vshrl.u32 %v1979, 7
        %v1981 = vsub.s32 3, %v1980
        %v1982 = vrot.slane %v1965, %v1981
        %v2019 = vunpack.c.l.b16 %v1933
        %v2020 = vunpack.c.h.b16 %v1933
        %v2021 = vunpack.c.l.b16 %v1934
        %v2022 = vunpack.c.h.b16 %v1934
        %v2023 = vunpack.c.l.b16 %v1935
        %v2024 = vunpack.c.h.b16 %v1935
        %v2025 = vunpack.c.l.b16 %v1936
        %v2026 = vunpack.c.h.b16 %v1936
        %v2027 = vunpack.c.l.b16 %v1937
        %v2028 = vunpack.c.h.b16 %v1937
        %v2029 = vunpack.c.l.b16 %v1938
        %v2030 = vunpack.c.h.b16 %v1938
        %v2031 = vunpack.c.l.b16 %v1939
        %v2032 = vunpack.c.h.b16 %v1939
        %v2033 = vunpack.c.l.b16 %v1940
        %v2034 = vunpack.c.h.b16 %v1940
        %v2035 = vunpack.c.l.b16 %v1941
        %v2036 = vunpack.c.h.b16 %v1941
        %v2037 = vunpack.c.l.b16 %v1942
        %v2038 = vunpack.c.h.b16 %v1942
        %v2039 = vunpack.c.l.b16 %v1943
        %v2040 = vunpack.c.h.b16 %v1943
        %v2041 = vunpack.c.l.b16 %v1944
        %v2042 = vunpack.c.h.b16 %v1944
        %v2043 = vunpack.c.l.b16 %v1945
        %v2044 = vunpack.c.h.b16 %v1945
        %v2045 = vunpack.c.l.b16 %v1946
        %v2046 = vunpack.c.h.b16 %v1946
        %v2047 = vunpack.c.l.b16 %v1947
        %v2048 = vunpack.c.h.b16 %v1947
        %v2049 = vunpack.c.l.b16 %v1948
        %v2050 = vunpack.c.h.b16 %v1948
        %v2051 = vunpack.c.l.b16 %v1949
        %v2052 = vunpack.c.h.b16 %v1949
        %v2053 = vunpack.c.l.b16 %v1950
        %v2054 = vunpack.c.h.b16 %v1950
        %v2055 = vunpack.c.l.b16 %v1951
        %v2056 = vunpack.c.h.b16 %v1951
        %v2057 = vunpack.c.l.b16 %v1952
        %v2058 = vunpack.c.h.b16 %v1952
        %v2059 = vunpack.c.l.b16 %v1953
        %v2060 = vunpack.c.h.b16 %v1953
        %v2061 = vunpack.c.l.b16 %v1954
        %v2062 = vunpack.c.h.b16 %v1954
        %v2063 = vunpack.c.l.b16 %v1955
        %v2064 = vunpack.c.h.b16 %v1955
        %v2065 = vunpack.c.l.b16 %v1956
        %v2066 = vunpack.c.h.b16 %v1956
        %v2067 = vunpack.c.l.b16 %v1957
        %v2068 = vunpack.c.h.b16 %v1957
        %v2069 = vunpack.c.l.b16 %v1958
        %v2070 = vunpack.c.h.b16 %v1958
        %v2071 = vunpack.c.l.b16 %v1959
        %v2072 = vunpack.c.h.b16 %v1959
        %v2073 = vunpack.c.l.b16 %v1960
        %v2074 = vunpack.c.h.b16 %v1960
        %v2075 = vunpack.c.l.b16 %v1961
        %v2076 = vunpack.c.h.b16 %v1961
        %v2077 = vunpack.c.l.b16 %v1962
        %v2078 = vunpack.c.h.b16 %v1962
        %v2079 = vunpack.c.l.b16 %v1963
        %v2080 = vunpack.c.h.b16 %v1963
        %v2081 = vunpack.c.l.b16 %v1964
        %v2082 = vunpack.c.h.b16 %v1964
        %v2083 = vpack.c.b16 %v2023, %v2019
        %v2084 = vpack.c.b16 %v2024, %v2020
        %v2085 = vpack.c.b16 %v2025, %v2021
        %v2086 = vpack.c.b16 %v2026, %v2022
        %v2087 = vpack.c.b16 %v2031, %v2027
        %v2088 = vpack.c.b16 %v2032, %v2028
        %v2089 = vpack.c.b16 %v2033, %v2029
        %v2090 = vpack.c.b16 %v2034, %v2030
        %v2091 = vpack.c.b16 %v2039, %v2035
        %v2092 = vpack.c.b16 %v2040, %v2036
        %v2093 = vpack.c.b16 %v2041, %v2037
        %v2094 = vpack.c.b16 %v2042, %v2038
        %v2095 = vpack.c.b16 %v2047, %v2043
        %v2096 = vpack.c.b16 %v2048, %v2044
        %v2097 = vpack.c.b16 %v2049, %v2045
        %v2098 = vpack.c.b16 %v2050, %v2046
        %v2099 = vpack.c.b16 %v2055, %v2051
        %v2100 = vpack.c.b16 %v2056, %v2052
        %v2101 = vpack.c.b16 %v2057, %v2053
        %v2102 = vpack.c.b16 %v2058, %v2054
        %v2103 = vpack.c.b16 %v2063, %v2059
        %v2104 = vpack.c.b16 %v2064, %v2060
        %v2105 = vpack.c.b16 %v2065, %v2061
        %v2106 = vpack.c.b16 %v2066, %v2062
        %v2107 = vpack.c.b16 %v2071, %v2067
        %v2108 = vpack.c.b16 %v2072, %v2068
        %v2109 = vpack.c.b16 %v2073, %v2069
        %v2110 = vpack.c.b16 %v2074, %v2070
        %v2111 = vpack.c.b16 %v2079, %v2075
        %v2112 = vpack.c.b16 %v2080, %v2076
        %v2113 = vpack.c.b16 %v2081, %v2077
        %v2114 = vpack.c.b16 %v2082, %v2078
        %2147 = vmatprep.subr.bf16.mxu0 %v2084
        %2148 = vmatpush1.bf16.msra.mxu0 %v2083
        %2149 = vmatprep.subr.bf16.mxu0 %v2088
        %2150 = vmatpush1.bf16.msra.mxu0 %v2087
        %2151 = vmatprep.subr.bf16.mxu0 %v2092
        %2152 = vmatpush1.bf16.msra.mxu0 %v2091
        %2153 = vmatprep.subr.bf16.mxu0 %v2096
        %2154 = vmatpush1.bf16.msra.mxu0 %v2095
        %2155 = vmatprep.subr.bf16.mxu0 %v2100
        %2156 = vmatpush1.bf16.msra.mxu0 %v2099
        %2157 = vmatprep.subr.bf16.mxu0 %v2104
        %2158 = vmatpush1.bf16.msra.mxu0 %v2103
        %2159 = vmatprep.subr.bf16.mxu0 %v2108
        %2160 = vmatpush1.bf16.msra.mxu0 %v2107
        %2161 = vmatprep.subr.bf16.mxu0 %v2112
        %2162 = vmatpush1.bf16.msra.mxu0 %v2111
        %2163 = vmatprep.subr.bf16.mxu0 0
        %2164 = vmatpush1.bf16.msra.mxu0 0
        %2165 = vmatprep.subr.bf16.mxu0 0
        %2166 = vmatpush1.bf16.msra.mxu0 0
        %2167 = vmatprep.subr.bf16.mxu0 0
        %2168 = vmatpush1.bf16.msra.mxu0 0
        %2169 = vmatprep.subr.bf16.mxu0 0
        %2170 = vmatpush1.bf16.msra.mxu0 0
        %2171 = vmatprep.subr.bf16.mxu0 0
        %2172 = vmatpush1.bf16.msra.mxu0 0
        %2173 = vmatprep.subr.bf16.mxu0 0
        %2174 = vmatpush1.bf16.msra.mxu0 0
        %2175 = vmatprep.subr.bf16.mxu0 0
        %2176 = vmatpush1.bf16.msra.mxu0 0
        %2177 = vmatprep.subr.bf16.mxu0 0
        %2178 = vmatpush1.bf16.msra.mxu0 0
        %2179 = vmatprep.mubr.bf16.mxu0 0
        %2180 = vmatmul.mubr.bf16.gmra.mrb[0].mxu0 %v1932
        %v2181 = vpop.f32.mrb[0].mxu0
        %v2182 = vadd.f32 %v1970, %v2181
        %v2183 = vpop.f32.mrb[0].mxu0
        %v2184 = vadd.f32 %v1974, %v2183
        %v2185 = vpop.f32.mrb[0].mxu0
        %v2186 = vadd.f32 %v1970, %v2185
        %v2187 = vpop.f32.mrb[0].mxu0
        %v2188 = vadd.f32 %v1974, %v2187
        %2189 = vdwg.mxu0
        %2190 = vmatprep.subr.bf16.mxu0 %v2086
        %2191 = vmatpush1.bf16.msra.mxu0 %v2085
        %2192 = vmatprep.subr.bf16.mxu0 %v2090
        %2193 = vmatpush1.bf16.msra.mxu0 %v2089
        %2194 = vmatprep.subr.bf16.mxu0 %v2094
        %2195 = vmatpush1.bf16.msra.mxu0 %v2093
        %2196 = vmatprep.subr.bf16.mxu0 %v2098
        %2197 = vmatpush1.bf16.msra.mxu0 %v2097
        %2198 = vmatprep.subr.bf16.mxu0 %v2102
        %2199 = vmatpush1.bf16.msra.mxu0 %v2101
        %2200 = vmatprep.subr.bf16.mxu0 %v2106
        %2201 = vmatpush1.bf16.msra.mxu0 %v2105
        %2202 = vmatprep.subr.bf16.mxu0 %v2110
        %2203 = vmatpush1.bf16.msra.mxu0 %v2109
        %2204 = vmatprep.subr.bf16.mxu0 %v2114
        %2205 = vmatpush1.bf16.msra.mxu0 %v2113
        %2206 = vmatprep.subr.bf16.mxu0 0
        %2207 = vmatpush1.bf16.msra.mxu0 0
        %2208 = vmatprep.subr.bf16.mxu0 0
        %2209 = vmatpush1.bf16.msra.mxu0 0
        %2210 = vmatprep.subr.bf16.mxu0 0
        %2211 = vmatpush1.bf16.msra.mxu0 0
        %2212 = vmatprep.subr.bf16.mxu0 0
        %2213 = vmatpush1.bf16.msra.mxu0 0
        %2214 = vmatprep.subr.bf16.mxu0 0
        %2215 = vmatpush1.bf16.msra.mxu0 0
        %2216 = vmatprep.subr.bf16.mxu0 0
        %2217 = vmatpush1.bf16.msra.mxu0 0
        %2218 = vmatprep.subr.bf16.mxu0 0
        %2219 = vmatpush1.bf16.msra.mxu0 0
        %2220 = vmatprep.subr.bf16.mxu0 0
        %2221 = vmatpush1.bf16.msra.mxu0 0
        %2222 = vmatprep.mubr.bf16.mxu0 0
        %2223 = vmatmul.mubr.bf16.gmra.mrb[0].mxu0 %v1932
        %v2224 = vpop.f32.mrb[0].mxu0
        %v2225 = vadd.f32 %v1978, %v2224
        %v2226 = vpop.f32.mrb[0].mxu0
        %v2227 = vadd.f32 %v1982, %v2226
        %v2228 = vpop.f32.mrb[0].mxu0
        %v2229 = vadd.f32 %v1978, %v2228
        %v2230 = vpop.f32.mrb[0].mxu0
        %v2231 = vadd.f32 %v1982, %v2230
        %2232 = vdwg.mxu0
        %v2233 = vmul.f32 %v2182, 0.5
        %v2234 = vmul.f32 %v2184, 0.5
        %v2235 = vmul.f32 %v2225, 0.5
        %v2236 = vmul.f32 %v2227, 0.5
        %v2237 = vmul.f32 %v2186, 0.5
        %v2238 = vmul.f32 %v2188, 0.5
        %v2239 = vmul.f32 %v2229, 0.5
        %v2240 = vmul.f32 %v2231, 0.5
        %v2241 = vmul.f32 %v2182, 0.044715
        %v2242 = vmul.f32 %v2184, 0.044715
        %v2243 = vmul.f32 %v2225, 0.044715
        %v2244 = vmul.f32 %v2227, 0.044715
        %v2245 = vmul.f32 %v2186, 0.044715
        %v2246 = vmul.f32 %v2188, 0.044715
        %v2247 = vmul.f32 %v2229, 0.044715
        %v2248 = vmul.f32 %v2231, 0.044715
        %v2249 = vmul.f32 %v2241, %v2182
        %v2250 = vmul.f32 %v2242, %v2184
        %v2251 = vmul.f32 %v2243, %v2225
        %v2252 = vmul.f32 %v2244, %v2227
        %v2253 = vmul.f32 %v2245, %v2186
        %v2254 = vmul.f32 %v2246, %v2188
        %v2255 = vmul.f32 %v2247, %v2229
        %v2256 = vmul.f32 %v2248, %v2231
        %v2257 = vmul.f32 %v2249, %v2182
        %v2258 = vmul.f32 %v2250, %v2184
        %v2259 = vmul.f32 %v2251, %v2225
        %v2260 = vmul.f32 %v2252, %v2227
        %v2261 = vmul.f32 %v2253, %v2186
        %v2262 = vmul.f32 %v2254, %v2188
        %v2263 = vmul.f32 %v2255, %v2229
        %v2264 = vmul.f32 %v2256, %v2231
        %v2265 = vadd.f32 %v2182, %v2257
        %v2266 = vadd.f32 %v2184, %v2258
        %v2267 = vadd.f32 %v2225, %v2259
        %v2268 = vadd.f32 %v2227, %v2260
        %v2269 = vadd.f32 %v2186, %v2261
        %v2270 = vadd.f32 %v2188, %v2262
        %v2271 = vadd.f32 %v2229, %v2263
        %v2272 = vadd.f32 %v2231, %v2264
        %v2273 = vmul.f32 %v2265, 0.7978846
        %v2274 = vmul.f32 %v2266, 0.7978846
        %v2275 = vmul.f32 %v2267, 0.7978846
        %v2276 = vmul.f32 %v2268, 0.7978846
        %v2277 = vmul.f32 %v2269, 0.7978846
        %v2278 = vmul.f32 %v2270, 0.7978846
        %v2279 = vmul.f32 %v2271, 0.7978846
        %v2280 = vmul.f32 %v2272, 0.7978846
        %v2281 = vtanh.pop %v2273
        %v2282 = vtanh.pop %v2274
        %v2283 = vtanh.pop %v2275
        %v2284 = vtanh.pop %v2276
        %v2285 = vtanh.pop %v2277
        %v2286 = vtanh.pop %v2278
        %v2287 = vtanh.pop %v2279
        %v2288 = vtanh.pop %v2280
        %v2289 = vadd.f32 %v2281, 1.0
        %v2290 = vadd.f32 %v2282, 1.0
        %v2291 = vadd.f32 %v2283, 1.0
        %v2292 = vadd.f32 %v2284, 1.0
        %v2293 = vadd.f32 %v2285, 1.0
        %v2294 = vadd.f32 %v2286, 1.0
        %v2295 = vadd.f32 %v2287, 1.0
        %v2296 = vadd.f32 %v2288, 1.0
        %v2297 = vmul.f32 %v2233, %v2289
        %v2298 = vmul.f32 %v2234, %v2290
        %v2299 = vmul.f32 %v2235, %v2291
        %v2300 = vmul.f32 %v2236, %v2292
        %v2301 = vmul.f32 %v2237, %v2293
        %v2302 = vmul.f32 %v2238, %v2294
        %v2303 = vmul.f32 %v2239, %v2295
        %v2304 = vmul.f32 %v2240, %v2296
        %v2305 = vpack.c.bf16 %v2301, %v2297
        %v2306 = vpack.c.bf16 %v2302, %v2298
        %v2307 = vpack.c.bf16 %v2303, %v2299
        %v2308 = vpack.c.bf16 %v2304, %v2300
        %v2309 = vld [vmem:[%s810] sm:$0xf]
        %v2310 = vld [vmem:[%s810 + $0x4] sm:$0xf]
        %v2311 = vld [vmem:[%s810 + $0x8] sm:$0xf]
        %v2312 = vld [vmem:[%s810 + $0xc] sm:$0xf]
        %v2313 = vld [vmem:[%s810 + $0x10] sm:$0xf]
        %v2314 = vld [vmem:[%s810 + $0x14] sm:$0xf]
        %v2315 = vld [vmem:[%s810 + $0x18] sm:$0xf]
        %v2316 = vld [vmem:[%s810 + $0x1c] sm:$0xf]
        %v2317 = vld [vmem:[%s810 + $0x20] sm:$0xf]
        %v2318 = vld [vmem:[%s810 + $0x24] sm:$0xf]
        %v2319 = vld [vmem:[%s810 + $0x28] sm:$0xf]
        %v2320 = vld [vmem:[%s810 + $0x2c] sm:$0xf]
        %v2321 = vld [vmem:[%s810 + $0x30] sm:$0xf]
        %v2322 = vld [vmem:[%s810 + $0x34] sm:$0xf]
        %v2323 = vld [vmem:[%s810 + $0x38] sm:$0xf]
        %v2324 = vld [vmem:[%s810 + $0x3c] sm:$0xf]
        %v2325 = vld [vmem:[%s810 + $0x40] sm:$0xf]
        %v2326 = vld [vmem:[%s810 + $0x44] sm:$0xf]
        %v2327 = vld [vmem:[%s810 + $0x48] sm:$0xf]
        %v2328 = vld [vmem:[%s810 + $0x4c] sm:$0xf]
        %v2329 = vld [vmem:[%s810 + $0x50] sm:$0xf]
        %v2330 = vld [vmem:[%s810 + $0x54] sm:$0xf]
        %v2331 = vld [vmem:[%s810 + $0x58] sm:$0xf]
        %v2332 = vld [vmem:[%s810 + $0x5c] sm:$0xf]
        %v2333 = vld [vmem:[%s810 + $0x60] sm:$0xf]
        %v2334 = vld [vmem:[%s810 + $0x64] sm:$0xf]
        %v2335 = vld [vmem:[%s810 + $0x68] sm:$0xf]
        %v2336 = vld [vmem:[%s810 + $0x6c] sm:$0xf]
        %v2337 = vld [vmem:[%s810 + $0x70] sm:$0xf]
        %v2338 = vld [vmem:[%s810 + $0x74] sm:$0xf]
        %v2339 = vld [vmem:[%s810 + $0x78] sm:$0xf]
        %v2340 = vld [vmem:[%s810 + $0x7c] sm:$0xf]
        %v2341 = vld [vmem:[%s810 + $0x80] sm:$0xf]
        %v2342 = vld [vmem:[%s810 + $0x84] sm:$0xf]
        %v2343 = vld [vmem:[%s810 + $0x88] sm:$0xf]
        %v2344 = vld [vmem:[%s810 + $0x8c] sm:$0xf]
        %v2345 = vld [vmem:[%s810 + $0x90] sm:$0xf]
        %v2346 = vld [vmem:[%s810 + $0x94] sm:$0xf]
        %v2347 = vld [vmem:[%s810 + $0x98] sm:$0xf]
        %v2348 = vld [vmem:[%s810 + $0x9c] sm:$0xf]
        %v2349 = vld [vmem:[%s810 + $0xa0] sm:$0xf]
        %v2350 = vld [vmem:[%s810 + $0xa4] sm:$0xf]
        %v2351 = vld [vmem:[%s810 + $0xa8] sm:$0xf]
        %v2352 = vld [vmem:[%s810 + $0xac] sm:$0xf]
        %v2353 = vld [vmem:[%s810 + $0xb0] sm:$0xf]
        %v2354 = vld [vmem:[%s810 + $0xb4] sm:$0xf]
        %v2355 = vld [vmem:[%s810 + $0xb8] sm:$0xf]
        %v2356 = vld [vmem:[%s810 + $0xbc] sm:$0xf]
        %v2357 = vld [vmem:[%s810 + $0xc0] sm:$0xf]
        %v2358 = vld [vmem:[%s810 + $0xc4] sm:$0xf]
        %v2359 = vld [vmem:[%s810 + $0xc8] sm:$0xf]
        %v2360 = vld [vmem:[%s810 + $0xcc] sm:$0xf]
        %v2361 = vld [vmem:[%s810 + $0xd0] sm:$0xf]
        %v2362 = vld [vmem:[%s810 + $0xd4] sm:$0xf]
        %v2363 = vld [vmem:[%s810 + $0xd8] sm:$0xf]
        %v2364 = vld [vmem:[%s810 + $0xdc] sm:$0xf]
        %v2365 = vld [vmem:[%s810 + $0xe0] sm:$0xf]
        %v2366 = vld [vmem:[%s810 + $0xe4] sm:$0xf]
        %v2367 = vld [vmem:[%s810 + $0xe8] sm:$0xf]
        %v2368 = vld [vmem:[%s810 + $0xec] sm:$0xf]
        %v2369 = vld [vmem:[%s810 + $0xf0] sm:$0xf]
        %v2370 = vld [vmem:[%s810 + $0xf4] sm:$0xf]
        %v2371 = vld [vmem:[%s810 + $0xf8] sm:$0xf]
        %v2372 = vld [vmem:[%s810 + $0xfc] sm:$0xf]
        %v2373 = vld [vmem:[%s818] sm:$0x1]
        %v2375 = vlaneseq
        %v2376 = vshrl.u32 %v2375, 7
        %v2377 = vsub.s32 0, %v2376
        %v2378 = vrot.slane %v2373, %v2377
        %v2444 = vunpack.c.l.b16 %v2309
        %v2445 = vunpack.c.l.b16 %v2310
        %v2446 = vunpack.c.l.b16 %v2311
        %v2447 = vunpack.c.l.b16 %v2312
        %v2448 = vunpack.c.l.b16 %v2313
        %v2449 = vunpack.c.l.b16 %v2314
        %v2450 = vunpack.c.l.b16 %v2315
        %v2451 = vunpack.c.l.b16 %v2316
        %v2452 = vunpack.c.l.b16 %v2317
        %v2453 = vunpack.c.l.b16 %v2318
        %v2454 = vunpack.c.l.b16 %v2319
        %v2455 = vunpack.c.l.b16 %v2320
        %v2456 = vunpack.c.l.b16 %v2321
        %v2457 = vunpack.c.l.b16 %v2322
        %v2458 = vunpack.c.l.b16 %v2323
        %v2459 = vunpack.c.l.b16 %v2324
        %v2460 = vunpack.c.l.b16 %v2325
        %v2461 = vunpack.c.l.b16 %v2326
        %v2462 = vunpack.c.l.b16 %v2327
        %v2463 = vunpack.c.l.b16 %v2328
        %v2464 = vunpack.c.l.b16 %v2329
        %v2465 = vunpack.c.l.b16 %v2330
        %v2466 = vunpack.c.l.b16 %v2331
        %v2467 = vunpack.c.l.b16 %v2332
        %v2468 = vunpack.c.l.b16 %v2333
        %v2469 = vunpack.c.l.b16 %v2334
        %v2470 = vunpack.c.l.b16 %v2335
        %v2471 = vunpack.c.l.b16 %v2336
        %v2472 = vunpack.c.l.b16 %v2337
        %v2473 = vunpack.c.l.b16 %v2338
        %v2474 = vunpack.c.l.b16 %v2339
        %v2475 = vunpack.c.l.b16 %v2340
        %v2476 = vunpack.c.l.b16 %v2341
        %v2477 = vunpack.c.l.b16 %v2342
        %v2478 = vunpack.c.l.b16 %v2343
        %v2479 = vunpack.c.l.b16 %v2344
        %v2480 = vunpack.c.l.b16 %v2345
        %v2481 = vunpack.c.l.b16 %v2346
        %v2482 = vunpack.c.l.b16 %v2347
        %v2483 = vunpack.c.l.b16 %v2348
        %v2484 = vunpack.c.l.b16 %v2349
        %v2485 = vunpack.c.l.b16 %v2350
        %v2486 = vunpack.c.l.b16 %v2351
        %v2487 = vunpack.c.l.b16 %v2352
        %v2488 = vunpack.c.l.b16 %v2353
        %v2489 = vunpack.c.l.b16 %v2354
        %v2490 = vunpack.c.l.b16 %v2355
        %v2491 = vunpack.c.l.b16 %v2356
        %v2492 = vunpack.c.l.b16 %v2357
        %v2493 = vunpack.c.l.b16 %v2358
        %v2494 = vunpack.c.l.b16 %v2359
        %v2495 = vunpack.c.l.b16 %v2360
        %v2496 = vunpack.c.l.b16 %v2361
        %v2497 = vunpack.c.l.b16 %v2362
        %v2498 = vunpack.c.l.b16 %v2363
        %v2499 = vunpack.c.l.b16 %v2364
        %v2500 = vunpack.c.l.b16 %v2365
        %v2501 = vunpack.c.l.b16 %v2366
        %v2502 = vunpack.c.l.b16 %v2367
        %v2503 = vunpack.c.l.b16 %v2368
        %v2504 = vunpack.c.l.b16 %v2369
        %v2505 = vunpack.c.l.b16 %v2370
        %v2506 = vunpack.c.l.b16 %v2371
        %v2507 = vunpack.c.l.b16 %v2372
        %v2508 = vpack.c.b16 %v2445, %v2444
        %v2509 = vpack.c.b16 %v2447, %v2446
        %v2510 = vpack.c.b16 %v2449, %v2448
        %v2511 = vpack.c.b16 %v2451, %v2450
        %v2512 = vpack.c.b16 %v2453, %v2452
        %v2513 = vpack.c.b16 %v2455, %v2454
        %v2514 = vpack.c.b16 %v2457, %v2456
        %v2515 = vpack.c.b16 %v2459, %v2458
        %v2516 = vpack.c.b16 %v2461, %v2460
        %v2517 = vpack.c.b16 %v2463, %v2462
        %v2518 = vpack.c.b16 %v2465, %v2464
        %v2519 = vpack.c.b16 %v2467, %v2466
        %v2520 = vpack.c.b16 %v2469, %v2468
        %v2521 = vpack.c.b16 %v2471, %v2470
        %v2522 = vpack.c.b16 %v2473, %v2472
        %v2523 = vpack.c.b16 %v2475, %v2474
        %v2524 = vpack.c.b16 %v2477, %v2476
        %v2525 = vpack.c.b16 %v2479, %v2478
        %v2526 = vpack.c.b16 %v2481, %v2480
        %v2527 = vpack.c.b16 %v2483, %v2482
        %v2528 = vpack.c.b16 %v2485, %v2484
        %v2529 = vpack.c.b16 %v2487, %v2486
        %v2530 = vpack.c.b16 %v2489, %v2488
        %v2531 = vpack.c.b16 %v2491, %v2490
        %v2532 = vpack.c.b16 %v2493, %v2492
        %v2533 = vpack.c.b16 %v2495, %v2494
        %v2534 = vpack.c.b16 %v2497, %v2496
        %v2535 = vpack.c.b16 %v2499, %v2498
        %v2536 = vpack.c.b16 %v2501, %v2500
        %v2537 = vpack.c.b16 %v2503, %v2502
        %v2538 = vpack.c.b16 %v2505, %v2504
        %v2539 = vpack.c.b16 %v2507, %v2506
        %2572 = vmatprep.subr.bf16.mxu0 0
        %2573 = vmatpush1.bf16.msra.mxu0 %v2508
        %2574 = vmatprep.subr.bf16.mxu0 0
        %2575 = vmatpush1.bf16.msra.mxu0 %v2509
        %2576 = vmatprep.subr.bf16.mxu0 0
        %2577 = vmatpush1.bf16.msra.mxu0 %v2510
        %2578 = vmatprep.subr.bf16.mxu0 0
        %2579 = vmatpush1.bf16.msra.mxu0 %v2511
        %2580 = vmatprep.subr.bf16.mxu0 0
        %2581 = vmatpush1.bf16.msra.mxu0 %v2512
        %2582 = vmatprep.subr.bf16.mxu0 0
        %2583 = vmatpush1.bf16.msra.mxu0 %v2513
        %2584 = vmatprep.subr.bf16.mxu0 0
        %2585 = vmatpush1.bf16.msra.mxu0 %v2514
        %2586 = vmatprep.subr.bf16.mxu0 0
        %2587 = vmatpush1.bf16.msra.mxu0 %v2515
        %2588 = vmatprep.subr.bf16.mxu0 0
        %2589 = vmatpush1.bf16.msra.mxu0 %v2516
        %2590 = vmatprep.subr.bf16.mxu0 0
        %2591 = vmatpush1.bf16.msra.mxu0 %v2517
        %2592 = vmatprep.subr.bf16.mxu0 0
        %2593 = vmatpush1.bf16.msra.mxu0 %v2518
        %2594 = vmatprep.subr.bf16.mxu0 0
        %2595 = vmatpush1.bf16.msra.mxu0 %v2519
        %2596 = vmatprep.subr.bf16.mxu0 0
        %2597 = vmatpush1.bf16.msra.mxu0 %v2520
        %2598 = vmatprep.subr.bf16.mxu0 0
        %2599 = vmatpush1.bf16.msra.mxu0 %v2521
        %2600 = vmatprep.subr.bf16.mxu0 0
        %2601 = vmatpush1.bf16.msra.mxu0 %v2522
        %2602 = vmatprep.subr.bf16.mxu0 0
        %2603 = vmatpush1.bf16.msra.mxu0 %v2523
        %2604 = vmatprep.mubr.bf16.mxu0 %v2306
        %2605 = vmatmul.mubr.bf16.gmra.mrb[0].mxu0 %v2305
        %v2606 = vpop.f32.mrb[0].mxu0
        %v2607 = vadd.f32 %v2378, %v2606
        %v2608 = vpop.f32.mrb[0].mxu0
        %v2609 = vpop.f32.mrb[0].mxu0
        %v2610 = vadd.f32 %v2378, %v2609
        %v2611 = vpop.f32.mrb[0].mxu0
        %2612 = vdwg.mxu0
        %2613 = vmatprep.subr.bf16.mxu0 0
        %2614 = vmatpush1.bf16.msra.mxu0 %v2524
        %2615 = vmatprep.subr.bf16.mxu0 0
        %2616 = vmatpush1.bf16.msra.mxu0 %v2525
        %2617 = vmatprep.subr.bf16.mxu0 0
        %2618 = vmatpush1.bf16.msra.mxu0 %v2526
        %2619 = vmatprep.subr.bf16.mxu0 0
        %2620 = vmatpush1.bf16.msra.mxu0 %v2527
        %2621 = vmatprep.subr.bf16.mxu0 0
        %2622 = vmatpush1.bf16.msra.mxu0 %v2528
        %2623 = vmatprep.subr.bf16.mxu0 0
        %2624 = vmatpush1.bf16.msra.mxu0 %v2529
        %2625 = vmatprep.subr.bf16.mxu0 0
        %2626 = vmatpush1.bf16.msra.mxu0 %v2530
        %2627 = vmatprep.subr.bf16.mxu0 0
        %2628 = vmatpush1.bf16.msra.mxu0 %v2531
        %2629 = vmatprep.subr.bf16.mxu0 0
        %2630 = vmatpush1.bf16.msra.mxu0 %v2532
        %2631 = vmatprep.subr.bf16.mxu0 0
        %2632 = vmatpush1.bf16.msra.mxu0 %v2533
        %2633 = vmatprep.subr.bf16.mxu0 0
        %2634 = vmatpush1.bf16.msra.mxu0 %v2534
        %2635 = vmatprep.subr.bf16.mxu0 0
        %2636 = vmatpush1.bf16.msra.mxu0 %v2535
        %2637 = vmatprep.subr.bf16.mxu0 0
        %2638 = vmatpush1.bf16.msra.mxu0 %v2536
        %2639 = vmatprep.subr.bf16.mxu0 0
        %2640 = vmatpush1.bf16.msra.mxu0 %v2537
        %2641 = vmatprep.subr.bf16.mxu0 0
        %2642 = vmatpush1.bf16.msra.mxu0 %v2538
        %2643 = vmatprep.subr.bf16.mxu0 0
        %2644 = vmatpush1.bf16.msra.mxu0 %v2539
        %2645 = vmatprep.mubr.bf16.mxu0 %v2308
        %2646 = vmatmul.mubr.bf16.gmra.mrb[0].mxu0 %v2307
        %v2647 = vpop.f32.mrb[0].mxu0
        %v2648 = vadd.f32 %v2607, %v2647
        %v2649 = vpop.f32.mrb[0].mxu0
        %v2650 = vpop.f32.mrb[0].mxu0
        %v2651 = vadd.f32 %v2610, %v2650
        %v2652 = vpop.f32.mrb[0].mxu0
        %2653 = vdwg.mxu0
        %v2654 = vadd.f32 %v1890, %v2648
        %v2655 = vadd.f32 %v1891, %v2651
        %2656 = vst [vmem:[#allocation2] sm:$0xff] %v2654
        %2657 = vst [vmem:[#allocation2 + $0x8] sm:$0xff] %v2655
        %p2658 = scmp.eq.s32.totalorder %s48, 1
        // Predicated region
        $region141: #{gpt_forward.1} parent=87 // pred_check
          %p2659 = pneg %p2658
        $region142: #{gpt_forward.1} parent=87 // pred_check_branch
          %2661 = sbr.rel (%p2659) target = $region144
        $region143: #{gpt_forward.1} parent=87 // pred_region
          %v2662 = vld [vmem:[#allocation20] sm:$0x1]
          %v2663 = vld [vmem:[#allocation21] sm:$0x1]
          %2664 = vadd.xlane.f32.xlu0 %v2654
          %v2665 = vpop.xlane.xlu0 %2664
          %2666 = vadd.xlane.f32.xlu0 %v2655
          %v2667 = vpop.xlane.xlu0 %2666
          %v2668 = vmul.f32 %v2665, %v947
          %v2669 = vmul.f32 %v2667, %v947
          %v2670 = vsub.f32 %v2654, %v2668
          %v2671 = vsub.f32 %v2655, %v2669
          %v2672 = vmul.f32 %v2670, %v2670
          %v2673 = vmul.f32 %v2671, %v2671
          %2674 = vadd.xlane.f32.xlu0 %v2672
          %v2675 = vpop.xlane.xlu0 %2674
          %2676 = vadd.xlane.f32.xlu0 %v2673
          %v2677 = vpop.xlane.xlu0 %2676
          %v2678 = vmul.f32 %v2675, %v947
          %v2679 = vmul.f32 %v2677, %v947
          %v2680 = vadd.f32 %v2678, 1e-05
          %v2681 = vadd.f32 %v2679, 1e-05
          %v2682 = vrsqrt.pop %v2680
          %v2683 = vrsqrt.pop %v2681
          %v2684 = vmul.f32 %v2670, %v2682
          %v2685 = vmul.f32 %v2671, %v2683
          %v2687 = vlaneseq
          %v2688 = vshrl.u32 %v2687, 7
          %v2689 = vsub.s32 0, %v2688
          %v2690 = vrot.slane %v2662, %v2689
          %v2692 = vmul.f32 %v2684, %v2690
          %v2693 = vmul.f32 %v2685, %v2690
          %v2695 = vlaneseq
          %v2696 = vshrl.u32 %v2695, 7
          %v2697 = vsub.s32 0, %v2696
          %v2698 = vrot.slane %v2663, %v2697
          %v2700 = vadd.f32 %v2692, %v2698
          %v2701 = vadd.f32 %v2693, %v2698
          %v2702 = vpack.c.bf16 %v2701, %v2700
          %v2703 = vld [vmem:[%s16] sm:$0xff]
          %v2704 = vld [vmem:[%s16 + $0x8] sm:$0xff]
          %v2705 = vld [vmem:[%s16 + $0x10] sm:$0xff]
          %v2706 = vld [vmem:[%s16 + $0x18] sm:$0xff]
          %v2707 = vld [vmem:[%s16 + $0x20] sm:$0xff]
          %v2708 = vld [vmem:[%s16 + $0x28] sm:$0xff]
          %v2709 = vld [vmem:[%s16 + $0x30] sm:$0xff]
          %v2710 = vld [vmem:[%s16 + $0x38] sm:$0xff]
          %v2711 = vld [vmem:[%s16 + $0x40] sm:$0xff]
          %v2712 = vld [vmem:[%s16 + $0x48] sm:$0xff]
          %v2713 = vld [vmem:[%s16 + $0x50] sm:$0xff]
          %v2714 = vld [vmem:[%s16 + $0x58] sm:$0xff]
          %v2715 = vld [vmem:[%s16 + $0x60] sm:$0xff]
          %v2716 = vld [vmem:[%s16 + $0x68] sm:$0xff]
          %v2717 = vld [vmem:[%s16 + $0x70] sm:$0xff]
          %v2718 = vld [vmem:[%s16 + $0x78] sm:$0xff]
          %v2735 = vunpack.c.l.b16 %v2703
          %v2736 = vunpack.c.h.b16 %v2703
          %v2737 = vunpack.c.l.b16 %v2704
          %v2738 = vunpack.c.h.b16 %v2704
          %v2739 = vunpack.c.l.b16 %v2705
          %v2740 = vunpack.c.h.b16 %v2705
          %v2741 = vunpack.c.l.b16 %v2706
          %v2742 = vunpack.c.h.b16 %v2706
          %v2743 = vunpack.c.l.b16 %v2707
          %v2744 = vunpack.c.h.b16 %v2707
          %v2745 = vunpack.c.l.b16 %v2708
          %v2746 = vunpack.c.h.b16 %v2708
          %v2747 = vunpack.c.l.b16 %v2709
          %v2748 = vunpack.c.h.b16 %v2709
          %v2749 = vunpack.c.l.b16 %v2710
          %v2750 = vunpack.c.h.b16 %v2710
          %v2751 = vunpack.c.l.b16 %v2711
          %v2752 = vunpack.c.h.b16 %v2711
          %v2753 = vunpack.c.l.b16 %v2712
          %v2754 = vunpack.c.h.b16 %v2712
          %v2755 = vunpack.c.l.b16 %v2713
          %v2756 = vunpack.c.h.b16 %v2713
          %v2757 = vunpack.c.l.b16 %v2714
          %v2758 = vunpack.c.h.b16 %v2714
          %v2759 = vunpack.c.l.b16 %v2715
          %v2760 = vunpack.c.h.b16 %v2715
          %v2761 = vunpack.c.l.b16 %v2716
          %v2762 = vunpack.c.h.b16 %v2716
          %v2763 = vunpack.c.l.b16 %v2717
          %v2764 = vunpack.c.h.b16 %v2717
          %v2765 = vunpack.c.l.b16 %v2718
          %v2766 = vunpack.c.h.b16 %v2718
          %v2767 = vpack.c.b16 %v2737, %v2735
          %v2768 = vpack.c.b16 %v2738, %v2736
          %v2769 = vpack.c.b16 %v2741, %v2739
          %v2770 = vpack.c.b16 %v2742, %v2740
          %v2771 = vpack.c.b16 %v2745, %v2743
          %v2772 = vpack.c.b16 %v2746, %v2744
          %v2773 = vpack.c.b16 %v2749, %v2747
          %v2774 = vpack.c.b16 %v2750, %v2748
          %v2775 = vpack.c.b16 %v2753, %v2751
          %v2776 = vpack.c.b16 %v2754, %v2752
          %v2777 = vpack.c.b16 %v2757, %v2755
          %v2778 = vpack.c.b16 %v2758, %v2756
          %v2779 = vpack.c.b16 %v2761, %v2759
          %v2780 = vpack.c.b16 %v2762, %v2760
          %v2781 = vpack.c.b16 %v2765, %v2763
          %v2782 = vpack.c.b16 %v2766, %v2764
          %2799 = vmatprep.subr.bf16.mxu0 %v2768
          %2800 = vmatpush1.bf16.msra.mxu0 %v2767
          %2801 = vmatprep.subr.bf16.mxu0 %v2770
          %2802 = vmatpush1.bf16.msra.mxu0 %v2769
          %2803 = vmatprep.subr.bf16.mxu0 %v2772
          %2804 = vmatpush1.bf16.msra.mxu0 %v2771
          %2805 = vmatprep.subr.bf16.mxu0 %v2774
          %2806 = vmatpush1.bf16.msra.mxu0 %v2773
          %2807 = vmatprep.subr.bf16.mxu0 %v2776
          %2808 = vmatpush1.bf16.msra.mxu0 %v2775
          %2809 = vmatprep.subr.bf16.mxu0 %v2778
          %2810 = vmatpush1.bf16.msra.mxu0 %v2777
          %2811 = vmatprep.subr.bf16.mxu0 %v2780
          %2812 = vmatpush1.bf16.msra.mxu0 %v2779
          %2813 = vmatprep.subr.bf16.mxu0 %v2782
          %2814 = vmatpush1.bf16.msra.mxu0 %v2781
          %2815 = vmatprep.subr.bf16.mxu0 0
          %2816 = vmatpush1.bf16.msra.mxu0 0
          %2817 = vmatprep.subr.bf16.mxu0 0
          %2818 = vmatpush1.bf16.msra.mxu0 0
          %2819 = vmatprep.subr.bf16.mxu0 0
          %2820 = vmatpush1.bf16.msra.mxu0 0
          %2821 = vmatprep.subr.bf16.mxu0 0
          %2822 = vmatpush1.bf16.msra.mxu0 0
          %2823 = vmatprep.subr.bf16.mxu0 0
          %2824 = vmatpush1.bf16.msra.mxu0 0
          %2825 = vmatprep.subr.bf16.mxu0 0
          %2826 = vmatpush1.bf16.msra.mxu0 0
          %2827 = vmatprep.subr.bf16.mxu0 0
          %2828 = vmatpush1.bf16.msra.mxu0 0
          %2829 = vmatprep.subr.bf16.mxu0 0
          %2830 = vmatpush1.bf16.msra.mxu0 0
          %2831 = vmatprep.mubr.bf16.mxu0 0
          %2832 = vmatmul.mubr.bf16.gmra.mrb[0].mxu0 %v2702
          %v2833 = vpop.f32.mrb[0].mxu0
          %v2834 = vadd.f32 0.0, %v2833
          %v2835 = vpop.f32.mrb[0].mxu0
          %v2836 = vadd.f32 0.0, %v2835
          %v2837 = vpop.f32.mrb[0].mxu0
          %v2838 = vadd.f32 0.0, %v2837
          %v2839 = vpop.f32.mrb[0].mxu0
          %v2840 = vadd.f32 0.0, %v2839
          %2841 = vdwg.mxu0
          %2842 = vst [vmem:[#allocation23] sm:$0xff] %v2834
          %2843 = vst [vmem:[#allocation23 + $0x8] sm:$0xff] %v2836
          %2844 = vst [vmem:[#allocation23 + $0x10] sm:$0xff] %v2838
          %2845 = vst [vmem:[#allocation23 + $0x18] sm:$0xff] %v2840
        $region144: #{gpt_forward.1} parent=87 // pred_fallthru
          _
        // Predicated region
        $region145: #{gpt_forward.1} parent=87 // pred_check
          %p2846 = pneg %p478
        $region146: #{gpt_forward.1} parent=87 // pred_check_branch
          %2848 = sbr.rel (%p2846) target = $region148
        $region147: #{gpt_forward.1} parent=87 // pred_region
          %s2850 = ssub.s32 512, 512
          %2851 = vsyncadd [#allocation5], %s2850
          %s2852 = sshll.u32 [#allocation23], 4
          %s2853 = int_to_ptr.vmem [resolvable:$true] %s2852
          %2858 = dma.vmem_to_hbm [thread:$0]  %s2853, 512, %s17, [#allocation5], 256, 256, 16
        $region148: #{gpt_forward.1} parent=87 // pred_fallthru
          _
        // Predicated region
        $region149: #{gpt_forward.1} parent=87 // pred_check
          %p2859 = pneg %p478
        $region150: #{gpt_forward.1} parent=87 // pred_check_branch
          %2861 = sbr.rel (%p2859) target = $region152
        $region151: #{gpt_forward.1} parent=87 // pred_region
          %2862 = dma.done [#allocation5], 512
        $region152: #{gpt_forward.1} parent=87 // pred_fallthru
          _
      $region88: #{gpt_forward.1} parent=5 // pred_fallthru
        _
      %p2863 = scmp.le.s32.totalorder 2, %s43
      // Predicated region
      $region153: #{gpt_forward.1} parent=5 // pred_check
        %p2864 = pneg %p2863
      $region154: #{gpt_forward.1} parent=5 // pred_check_branch
        %2866 = sbr.rel (%p2864) target = $region156
      $region155: #{gpt_forward.1} parent=5 // pred_region
        %s2867 = ssub.s32 %s43, 2
      $region156: #{gpt_forward.1} parent=5 // pred_fallthru
        _
    $region6: #{gpt_forward.1} parent=1 // loop_footer
      %s47 = sadd.s32 1, %s43
    $region7: #{gpt_forward.1} parent=1 // loop_footer_branch
      %42 = sbr.rel target = $region3
    $region8: #{gpt_forward.1} parent=1 // loop_exit
      _
    %2868 = vsyncpa [#allocation4], 1
    %s2869 = scalar_lea.sflag [#allocation4], 1
    %2870 = vsyncpa %s2869, 1
    %2871 = vsyncpa [#allocation7], 1
    %s2872 = scalar_lea.sflag [#allocation7], 1
    %2873 = vsyncpa %s2872, 1
    %2874 = vsyncpa [#allocation10], 1
    %s2875 = scalar_lea.sflag [#allocation10], 1
    %2876 = vsyncpa %s2875, 1
    %2877 = vsyncpa [#allocation13], 1
    %s2878 = scalar_lea.sflag [#allocation13], 1
    %2879 = vsyncpa %s2878, 1
    %2880 = vsyncpa [#allocation16], 1
    %s2881 = scalar_lea.sflag [#allocation16], 1
    %2882 = vsyncpa %s2881, 1
    %2883 = vsyncpa [#allocation19], 1
    %s2884 = scalar_lea.sflag [#allocation19], 1
    %2885 = vsyncpa %s2884, 1
    %2886 = vsyncpa [#allocation22], 1
    %2887 = vsyncpa [#allocation5], 1
    %s2888 = scalar_lea.sflag [#allocation5], 1
    %2889 = vsyncpa %s2888, 1

</llo_original>
